<compile_context>
chip_gen: v7x
topology: tpu7x:2x2x1
jax: 0.10.0
libtpu: 0.0.40
codegen_flags: <defaults>
</compile_context>

<pallas_src>
import functools

import numpy as np
import jax
import jax.numpy as jnp
from jax.experimental import pallas as pl
from jax.experimental.pallas import tpu as pltpu


def _circular_psf_np(kernel_size: int, radius: float) -> np.ndarray:
    """Same math as CircularPSFBlur._generate_circular_psf (single (K, K) kernel), in numpy."""
    coords = np.linspace(-kernel_size / 2.0, kernel_size / 2.0, kernel_size, dtype=np.float32)
    x_grid, y_grid = np.meshgrid(coords, coords, indexing="xy")
    radius_map = np.sqrt(x_grid ** 2 + y_grid ** 2)
    sigma = 0.5
    kernel = np.exp(-(radius_map - radius) ** 2 / (2.0 * sigma ** 2)).astype(np.float32)
    kernel = kernel * (radius_map <= radius + 2.0 * sigma).astype(np.float32)
    kernel = kernel / kernel.sum()
    return kernel.astype(np.float32)


def _toeplitz_bank_np(psf: np.ndarray, nz_rows, tw: int) -> np.ndarray:
    """T[a] is the (tw+K-1, tw) banded matrix so that  xpad_rows @ T[a]  is the contribution of
    PSF row nz_rows[a] to the cross-correlation (W-direction zero padding is baked in)."""
    K = psf.shape[0]
    win = tw + K - 1
    T = np.zeros((len(nz_rows), win, tw), np.float32)
    cols = np.arange(tw)
    for a, i in enumerate(nz_rows):
        for j in range(K):
            v = float(psf[i, j])
            if v != 0.0:
                T[a, cols + j, cols] = v
    return T


def _device_kind() -> str:
    try:
        return jax.devices()[0].device_kind.lower()
    except Exception:  # pragma: no cover - defensive
        return ""


def _blur_kernel(t_ref, x_ref, o_ref, xh_ref, xl_ref, res_ref, *,
                 H, W, K, B, TW, TH, nz_rows):
    # t_ref  : (2, NZ, TW+K-1, TW) bf16 Toeplitz bank (hi, lo); constant block index -> resident.
    # x_ref  : (1, H, W) unpadded channel plane (auto-pipelined).
    # o_ref  : (1, 1, H, W) output block (plane n, duplicate k).
    # xh_ref : (Hp, Ws) bf16 scratch, zero-padded hi plane.
    # xl_ref : (Hp, Ws) bf16 scratch, zero-padded lo plane.
    # res_ref: (H, W) scratch holding the blurred plane (reused by duplicates k > 0).
    pad = K // 2
    win = TW + K - 1
    Hp, Ws = xh_ref.shape
    Wc = Ws - 2 * pad
    nchunks = Wc // TW
    k_dup = pl.program_id(1)

    @pl.when(k_dup == 0)
    def _compute():
        # Zero only the K-1 border strips (the interior is overwritten right below).
        for ref in (xh_ref, xl_ref):
            ref[0:pad, :] = jnp.zeros((pad, Ws), jnp.bfloat16)
            ref[pad + H:Hp, :] = jnp.zeros((Hp - pad - H, Ws), jnp.bfloat16)
            ref[pad:pad + H, 0:pad] = jnp.zeros((H, pad), jnp.bfloat16)
            ref[pad:pad + H, pad + W:Ws] = jnp.zeros((H, Ws - pad - W), jnp.bfloat16)

        # hi/lo bf16 split of the input plane (bf16x3 keeps ~1e-5 accuracy on the bf16 MXU).
        xf = x_ref[0, :, :].astype(jnp.float32)
        xh = xf.astype(jnp.bfloat16)
        xl = (xf - xh.astype(jnp.float32)).astype(jnp.bfloat16)
        xh_ref[pad:pad + H, pad:pad + W] = xh
        xl_ref[pad:pad + H, pad:pad + W] = xl

        for c in range(nchunks):                       # lane chunks (TW multiple of 128)
            c0 = c * TW
            wv = min(TW, W - c0)                       # valid output columns in this chunk
            for h0 in range(0, H, TH):                 # accumulator H tiles (vreg/VMEM locality)
                th = min(TH, H - h0)
                acc = jnp.zeros((th, TW), jnp.float32)
                for a, i in enumerate(nz_rows):        # all-zero PSF rows are skipped
                    xh_i = xh_ref[h0 + i:h0 + i + th, c0:c0 + win]
                    xl_i = xl_ref[h0 + i:h0 + i + th, c0:c0 + win]
                    t_hi = t_ref[0, a, :, :]
                    t_lo = t_ref[1, a, :, :]
                    # bf16 operands on the MXU, f32 accumulation (bf16x3 hi/lo split).
                    acc = acc + jnp.dot(xh_i, t_hi, preferred_element_type=jnp.float32)
                    acc = acc + jnp.dot(xh_i, t_lo, preferred_element_type=jnp.float32)
                    acc = acc + jnp.dot(xl_i, t_hi, preferred_element_type=jnp.float32)
                tile = acc[:, :wv].astype(o_ref.dtype)
                o_ref[0, 0, h0:h0 + th, c0:c0 + wv] = tile
                if B > 1:
                    res_ref[h0:h0 + th, c0:c0 + wv] = tile

    if B > 1:
        @pl.when(k_dup > 0)
        def _duplicate():
            # Remaining grouped-conv duplicates: pure VMEM -> HBM copy of the computed plane.
            o_ref[0, 0, :, :] = res_ref[:, :]


def circular_psf_blur(x, kernel_size=13, radius=None, return_kernel=False):
    """JAX/Pallas equivalent of CircularPSFBlur.forward."""
    radius = 0.4 * kernel_size if radius is None else radius
    K = int(kernel_size)
    pad = K // 2

    dim_3 = (x.ndim == 3)
    if dim_3:
        x = x[None]
    B, C, H, W = x.shape
    assert C == 3, "reference module uses groups=3 => 3 input channels"

    psf = _circular_psf_np(K, radius)                      # trace-time numpy constant
    nz_rows = tuple(i for i in range(K) if np.any(psf[i] != 0.0))
    NZ = len(nz_rows)

    kind = _device_kind()
    is_v5e = ("v5 lite" in kind) or ("v5e" in kind) or ("v5litepod" in kind)
    is_v7 = ("7" in kind)

    # Lane-chunk width: always a multiple of 128 (compute width rounded up); 128 on v5e
    # (128x128 MXU), 256 on v6e/v7x when the rounded width allows it.
    Wc128 = ((W + 127) // 128) * 128
    TW = 128 if (is_v5e or Wc128 % 256 != 0) else 256
    Wc = ((W + TW - 1) // TW) * TW                         # rounded-up compute width
    win = TW + K - 1
    Hp = H + 2 * pad
    Ws = Wc + 2 * pad
    TH = 256                                               # accumulator row tile

    # Constant Toeplitz bank: non-zero PSF rows only, bf16 hi/lo split.
    t32 = jnp.asarray(_toeplitz_bank_np(psf, nz_rows, TW))  # (NZ, win, TW) f32
    t_hi = t32.astype(jnp.bfloat16)
    t_lo = (t32 - t_hi.astype(jnp.float32)).astype(jnp.bfloat16)
    t_bank = jnp.stack([t_hi, t_lo], axis=0)                # (2, NZ, win, TW) bf16

    # Per-generation VMEM scoped limit (v7x has 64 MiB physical, v5e/v6e 128 MiB).
    if is_v7:
        vmem_limit = 48 * 1024 * 1024
    elif is_v5e or ("v6" in kind):
        vmem_limit = 100 * 1024 * 1024
    else:
        vmem_limit = 64 * 1024 * 1024

    N = B * C
    xf = x.reshape(N, H, W)

    out = pl.pallas_call(
        functools.partial(_blur_kernel, H=H, W=W, K=K, B=B, TW=TW, TH=TH, nz_rows=nz_rows),
        out_shape=jax.ShapeDtypeStruct((N, B, H, W), x.dtype),
        grid_spec=pltpu.PrefetchScalarGridSpec(
            num_scalar_prefetch=0,
            grid=(N, B),                                    # planes (parallel) x duplicates (arb.)
            in_specs=[
                pl.BlockSpec((2, NZ, win, TW), lambda n, k: (0, 0, 0, 0)),  # Toeplitz bank
                pl.BlockSpec((1, H, W), lambda n, k: (n, 0, 0)),            # unpadded plane
            ],
            out_specs=pl.BlockSpec((1, 1, H, W), lambda n, k: (n, k, 0, 0)),
            scratch_shapes=[
                pltpu.VMEM((Hp, Ws), jnp.bfloat16),         # zero-padded hi plane
                pltpu.VMEM((Hp, Ws), jnp.bfloat16),         # zero-padded lo plane
                pltpu.VMEM((H, W), x.dtype),                # computed blur, reused for k > 0
            ],
        ),
        compiler_params=pltpu.CompilerParams(
            dimension_semantics=("parallel", "arbitrary"),
            vmem_limit_bytes=vmem_limit),
    )(t_bank, xf)

    # F.conv2d(groups=3) with the weight repeated 3*B times gives y[b, g*B + k] = blur(x[b, g]).
    # out[n = b*3 + g, k] already holds that, so two contiguous (free) reshapes give torch layout.
    y = out.reshape(B, 3, B, H, W).reshape(B, 3 * B, H, W)
    kern = jnp.tile(jnp.asarray(psf)[None, None], (3 * B, 1, 1, 1))      # (3*B, 1, K, K)

    if dim_3:
        y = y[0]          # squeeze(0); torch's kernel.squeeze(0) is a no-op since dim0 == 3
    return (y, kern) if return_kernel else y


def _reference(x4, psf, pad):
    """Pure-JAX reference (same math, f32, no Pallas) for verification."""
    B, C, H, W = x4.shape
    K = psf.shape[0]
    xp = jnp.pad(x4.astype(jnp.float32), ((0, 0), (0, 0), (pad, pad), (pad, pad)))
    acc = jnp.zeros((B, C, H, W), jnp.float32)
    for i in range(K):
        for j in range(K):
            acc = acc + psf[i, j] * xp[:, :, i:i + H, j:j + W]
    return jnp.repeat(acc, B, axis=1).astype(x4.dtype)


if __name__ == "__main__":
    key = jax.random.PRNGKey(0)
    x = jax.random.normal(key, (2, 3, 16, 16), dtype=jnp.float32)

    y, kern = circular_psf_blur(x, return_kernel=True)
    y = jax.block_until_ready(y)

    assert y.shape == (2, 6, 16, 16), y.shape
    assert kern.shape == (6, 1, 13, 13), kern.shape

    psf = jnp.asarray(_circular_psf_np(13, 0.4 * 13))
    y_ref = _reference(x, psf, 13 // 2)
    max_err = float(jnp.max(jnp.abs(y - y_ref)))
    # bf16x3 (hi/lo split) accumulation in f32: error ~1e-5 for O(1) inputs.
    assert jnp.allclose(y, y_ref, atol=5e-4, rtol=5e-4), max_err

    # also exercise the 3-D input path [C, H, W] (B == 1, duplicate axis of size 1)
    x3 = jax.random.normal(jax.random.PRNGKey(1), (3, 16, 16), dtype=jnp.float32)
    y3 = jax.block_until_ready(circular_psf_blur(x3))
    assert y3.shape == (3, 16, 16), y3.shape
    y3_ref = _reference(x3[None], psf, 13 // 2)[0]
    assert jnp.allclose(y3, y3_ref, atol=5e-4, rtol=5e-4)

    print("KERNEL_OK")
</pallas_src>

<mosaic_0001>
module attributes {stable_mosaic.version = 11 : i64} {
  func.func @_blur_kernel(%arg0: i32, %arg1: i32, %arg2: memref<2x11x140x128xbf16, #tpu.memory_space<vmem>>, %arg3: memref<1x16x16xf32, #tpu.memory_space<vmem>>, %arg4: memref<1x1x16x16xf32, #tpu.memory_space<vmem>>, %arg5: memref<28x140xbf16, #tpu.memory_space<vmem>>, %arg6: memref<28x140xbf16, #tpu.memory_space<vmem>>, %arg7: memref<16x16xf32, #tpu.memory_space<vmem>>) attributes {dimension_semantics = [#tpu.dimension_semantics<parallel>, #tpu.dimension_semantics<arbitrary>], iteration_bounds = array<i64: 6, 2>, scalar_prefetch = 0 : i64, scratch_operands = 3 : i64, tpu.core_type = #tpu.core_type<tc>, window_params = [{pipeline_mode = #tpu.pipeline_mode<synchronous>, transform_indices = @transform_0, window_bounds = array<i64: 2, 11, 140, 128>}, {transform_indices = @transform_1, window_bounds = array<i64: 1, 16, 16>}, {transform_indices = @transform_2, window_bounds = array<i64: 1, 1, 16, 16>}]} {
    %c0_i32 = arith.constant 0 : i32
    %0 = arith.cmpi eq, %arg1, %c0_i32 : i32
    %1 = arith.extui %0 : i1 to i32
    %c0_i32_0 = arith.constant 0 : i32
    %2 = arith.cmpi ne, %1, %c0_i32_0 : i32
    scf.if %2 {
      %cst = arith.constant 0.000000e+00 : bf16
      %6 = vector.broadcast %cst : bf16 to vector<6x140xbf16>
      %c0 = arith.constant 0 : index
      %c0_3 = arith.constant 0 : index
      %7 = vector.load %arg5[%c0, %c0_3] : memref<28x140xbf16, #tpu.memory_space<vmem>>, vector<6x140xbf16>
      tpu.vector_store %arg5[%c0, %c0_3], %6 {strides = array<i32>} : memref<28x140xbf16, #tpu.memory_space<vmem>>, vector<6x140xbf16>,
      %cst_4 = arith.constant 0.000000e+00 : bf16
      %8 = vector.broadcast %cst_4 : bf16 to vector<6x140xbf16>
      %c22 = arith.constant 22 : index
      %c0_5 = arith.constant 0 : index
      %9 = vector.load %arg5[%c22, %c0_5] : memref<28x140xbf16, #tpu.memory_space<vmem>>, vector<6x140xbf16>
      tpu.vector_store %arg5[%c22, %c0_5], %8 {strides = array<i32>} : memref<28x140xbf16, #tpu.memory_space<vmem>>, vector<6x140xbf16>,
      %cst_6 = arith.constant 0.000000e+00 : bf16
      %10 = vector.broadcast %cst_6 : bf16 to vector<16x6xbf16>
      %c6 = arith.constant 6 : index
      %c0_7 = arith.constant 0 : index
      %11 = vector.load %arg5[%c6, %c0_7] : memref<28x140xbf16, #tpu.memory_space<vmem>>, vector<16x6xbf16>
      tpu.vector_store %arg5[%c6, %c0_7], %10 {strides = array<i32>} : memref<28x140xbf16, #tpu.memory_space<vmem>>, vector<16x6xbf16>,
      %cst_8 = arith.constant 0.000000e+00 : bf16
      %12 = vector.broadcast %cst_8 : bf16 to vector<16x118xbf16>
      %c6_9 = arith.constant 6 : index
      %c22_10 = arith.constant 22 : index
      %13 = vector.load %arg5[%c6_9, %c22_10] : memref<28x140xbf16, #tpu.memory_space<vmem>>, vector<16x118xbf16>
      tpu.vector_store %arg5[%c6_9, %c22_10], %12 {strides = array<i32>} : memref<28x140xbf16, #tpu.memory_space<vmem>>, vector<16x118xbf16>,
      %cst_11 = arith.constant 0.000000e+00 : bf16
      %14 = vector.broadcast %cst_11 : bf16 to vector<6x140xbf16>
      %c0_12 = arith.constant 0 : index
      %c0_13 = arith.constant 0 : index
      %15 = vector.load %arg6[%c0_12, %c0_13] : memref<28x140xbf16, #tpu.memory_space<vmem>>, vector<6x140xbf16>
      tpu.vector_store %arg6[%c0_12, %c0_13], %14 {strides = array<i32>} : memref<28x140xbf16, #tpu.memory_space<vmem>>, vector<6x140xbf16>,
      %cst_14 = arith.constant 0.000000e+00 : bf16
      %16 = vector.broadcast %cst_14 : bf16 to vector<6x140xbf16>
      %c22_15 = arith.constant 22 : index
      %c0_16 = arith.constant 0 : index
      %17 = vector.load %arg6[%c22_15, %c0_16] : memref<28x140xbf16, #tpu.memory_space<vmem>>, vector<6x140xbf16>
      tpu.vector_store %arg6[%c22_15, %c0_16], %16 {strides = array<i32>} : memref<28x140xbf16, #tpu.memory_space<vmem>>, vector<6x140xbf16>,
      %cst_17 = arith.constant 0.000000e+00 : bf16
      %18 = vector.broadcast %cst_17 : bf16 to vector<16x6xbf16>
      %c6_18 = arith.constant 6 : index
      %c0_19 = arith.constant 0 : index
      %19 = vector.load %arg6[%c6_18, %c0_19] : memref<28x140xbf16, #tpu.memory_space<vmem>>, vector<16x6xbf16>
      tpu.vector_store %arg6[%c6_18, %c0_19], %18 {strides = array<i32>} : memref<28x140xbf16, #tpu.memory_space<vmem>>, vector<16x6xbf16>,
      %cst_20 = arith.constant 0.000000e+00 : bf16
      %20 = vector.broadcast %cst_20 : bf16 to vector<16x118xbf16>
      %c6_21 = arith.constant 6 : index
      %c22_22 = arith.constant 22 : index
      %21 = vector.load %arg6[%c6_21, %c22_22] : memref<28x140xbf16, #tpu.memory_space<vmem>>, vector<16x118xbf16>
      tpu.vector_store %arg6[%c6_21, %c22_22], %20 {strides = array<i32>} : memref<28x140xbf16, #tpu.memory_space<vmem>>, vector<16x118xbf16>,
      %c0_23 = arith.constant 0 : index
      %c0_24 = arith.constant 0 : index
      %c0_25 = arith.constant 0 : index
      %22 = vector.load %arg3[%c0_23, %c0_24, %c0_25] : memref<1x16x16xf32, #tpu.memory_space<vmem>>, vector<1x16x16xf32>
      %23 = vector.shape_cast %22 : vector<1x16x16xf32> to vector<16x16xf32>
      %24 = arith.truncf %23 : vector<16x16xf32> to vector<16x16xbf16>
      %25 = arith.extf %24 : vector<16x16xbf16> to vector<16x16xf32>
      %26 = arith.subf %23, %25 : vector<16x16xf32>
      %27 = arith.truncf %26 : vector<16x16xf32> to vector<16x16xbf16>
      %c6_26 = arith.constant 6 : index
      %c6_27 = arith.constant 6 : index
      %28 = vector.load %arg5[%c6_26, %c6_27] : memref<28x140xbf16, #tpu.memory_space<vmem>>, vector<16x16xbf16>
      tpu.vector_store %arg5[%c6_26, %c6_27], %24 {strides = array<i32>} : memref<28x140xbf16, #tpu.memory_space<vmem>>, vector<16x16xbf16>,
      %c6_28 = arith.constant 6 : index
      %c6_29 = arith.constant 6 : index
      %29 = vector.load %arg6[%c6_28, %c6_29] : memref<28x140xbf16, #tpu.memory_space<vmem>>, vector<16x16xbf16>
      tpu.vector_store %arg6[%c6_28, %c6_29], %27 {strides = array<i32>} : memref<28x140xbf16, #tpu.memory_space<vmem>>, vector<16x16xbf16>,
      %cst_30 = arith.constant 0.000000e+00 : f32
      %30 = vector.broadcast %cst_30 : f32 to vector<16x128xf32>
      %c1 = arith.constant 1 : index
      %c0_31 = arith.constant 0 : index
      %31 = vector.load %arg5[%c1, %c0_31] : memref<28x140xbf16, #tpu.memory_space<vmem>>, vector<16x140xbf16>
      %c1_32 = arith.constant 1 : index
      %c0_33 = arith.constant 0 : index
      %32 = vector.load %arg6[%c1_32, %c0_33] : memref<28x140xbf16, #tpu.memory_space<vmem>>, vector<16x140xbf16>
      %c0_34 = arith.constant 0 : index
      %c0_35 = arith.constant 0 : index
      %c0_36 = arith.constant 0 : index
      %c0_37 = arith.constant 0 : index
      %33 = vector.load %arg2[%c0_34, %c0_35, %c0_36, %c0_37] : memref<2x11x140x128xbf16, #tpu.memory_space<vmem>>, vector<1x1x140x128xbf16>
      %34 = vector.shape_cast %33 : vector<1x1x140x128xbf16> to vector<140x128xbf16>
      %c1_38 = arith.constant 1 : index
      %c0_39 = arith.constant 0 : index
      %c0_40 = arith.constant 0 : index
      %c0_41 = arith.constant 0 : index
      %35 = vector.load %arg2[%c1_38, %c0_39, %c0_40, %c0_41] : memref<2x11x140x128xbf16, #tpu.memory_space<vmem>>, vector<1x1x140x128xbf16>
      %36 = vector.shape_cast %35 : vector<1x1x140x128xbf16> to vector<140x128xbf16>
      %cst_42 = arith.constant dense<0.000000e+00> : vector<16x128xf32>
      %37 = tpu.matmul %31, %34, %cst_42 {dimension_numbers = #tpu.dot_dimension_numbers<[1], [0], [0], [1], [0, 0, 1, 1], [], []>} : vector<16x140xbf16>, vector<140x128xbf16>, vector<16x128xf32> -> vector<16x128xf32>
      %38 = arith.addf %30, %37 : vector<16x128xf32>
      %cst_43 = arith.constant dense<0.000000e+00> : vector<16x128xf32>
      %39 = tpu.matmul %31, %36, %cst_43 {dimension_numbers = #tpu.dot_dimension_numbers<[1], [0], [0], [1], [0, 0, 1, 1], [], []>} : vector<16x140xbf16>, vector<140x128xbf16>, vector<16x128xf32> -> vector<16x128xf32>
      %40 = arith.addf %38, %39 : vector<16x128xf32>
      %cst_44 = arith.constant dense<0.000000e+00> : vector<16x128xf32>
      %41 = tpu.matmul %32, %34, %cst_44 {dimension_numbers = #tpu.dot_dimension_numbers<[1], [0], [0], [1], [0, 0, 1, 1], [], []>} : vector<16x140xbf16>, vector<140x128xbf16>, vector<16x128xf32> -> vector<16x128xf32>
      %42 = arith.addf %40, %41 : vector<16x128xf32>
      %c2 = arith.constant 2 : index
      %c0_45 = arith.constant 0 : index
      %43 = vector.load %arg5[%c2, %c0_45] : memref<28x140xbf16, #tpu.memory_space<vmem>>, vector<16x140xbf16>
      %c2_46 = arith.constant 2 : index
      %c0_47 = arith.constant 0 : index
      %44 = vector.load %arg6[%c2_46, %c0_47] : memref<28x140xbf16, #tpu.memory_space<vmem>>, vector<16x140xbf16>
      %c0_48 = arith.constant 0 : index
      %c1_49 = arith.constant 1 : index
      %c0_50 = arith.constant 0 : index
      %c0_51 = arith.constant 0 : index
      %45 = vector.load %arg2[%c0_48, %c1_49, %c0_50, %c0_51] : memref<2x11x140x128xbf16, #tpu.memory_space<vmem>>, vector<1x1x140x128xbf16>
      %46 = vector.shape_cast %45 : vector<1x1x140x128xbf16> to vector<140x128xbf16>
      %c1_52 = arith.constant 1 : index
      %c1_53 = arith.constant 1 : index
      %c0_54 = arith.constant 0 : index
      %c0_55 = arith.constant 0 : index
      %47 = vector.load %arg2[%c1_52, %c1_53, %c0_54, %c0_55] : memref<2x11x140x128xbf16, #tpu.memory_space<vmem>>, vector<1x1x140x128xbf16>
      %48 = vector.shape_cast %47 : vector<1x1x140x128xbf16> to vector<140x128xbf16>
      %cst_56 = arith.constant dense<0.000000e+00> : vector<16x128xf32>
      %49 = tpu.matmul %43, %46, %cst_56 {dimension_numbers = #tpu.dot_dimension_numbers<[1], [0], [0], [1], [0, 0, 1, 1], [], []>} : vector<16x140xbf16>, vector<140x128xbf16>, vector<16x128xf32> -> vector<16x128xf32>
      %50 = arith.addf %42, %49 : vector<16x128xf32>
      %cst_57 = arith.constant dense<0.000000e+00> : vector<16x128xf32>
      %51 = tpu.matmul %43, %48, %cst_57 {dimension_numbers = #tpu.dot_dimension_numbers<[1], [0], [0], [1], [0, 0, 1, 1], [], []>} : vector<16x140xbf16>, vector<140x128xbf16>, vector<16x128xf32> -> vector<16x128xf32>
      %52 = arith.addf %50, %51 : vector<16x128xf32>
      %cst_58 = arith.constant dense<0.000000e+00> : vector<16x128xf32>
      %53 = tpu.matmul %44, %46, %cst_58 {dimension_numbers = #tpu.dot_dimension_numbers<[1], [0], [0], [1], [0, 0, 1, 1], [], []>} : vector<16x140xbf16>, vector<140x128xbf16>, vector<16x128xf32> -> vector<16x128xf32>
      %54 = arith.addf %52, %53 : vector<16x128xf32>
      %c3 = arith.constant 3 : index
      %c0_59 = arith.constant 0 : index
      %55 = vector.load %arg5[%c3, %c0_59] : memref<28x140xbf16, #tpu.memory_space<vmem>>, vector<16x140xbf16>
      %c3_60 = arith.constant 3 : index
      %c0_61 = arith.constant 0 : index
      %56 = vector.load %arg6[%c3_60, %c0_61] : memref<28x140xbf16, #tpu.memory_space<vmem>>, vector<16x140xbf16>
      %c0_62 = arith.constant 0 : index
      %c2_63 = arith.constant 2 : index
      %c0_64 = arith.constant 0 : index
      %c0_65 = arith.constant 0 : index
      %57 = vector.load %arg2[%c0_62, %c2_63, %c0_64, %c0_65] : memref<2x11x140x128xbf16, #tpu.memory_space<vmem>>, vector<1x1x140x128xbf16>
      %58 = vector.shape_cast %57 : vector<1x1x140x128xbf16> to vector<140x128xbf16>
      %c1_66 = arith.constant 1 : index
      %c2_67 = arith.constant 2 : index
      %c0_68 = arith.constant 0 : index
      %c0_69 = arith.constant 0 : index
      %59 = vector.load %arg2[%c1_66, %c2_67, %c0_68, %c0_69] : memref<2x11x140x128xbf16, #tpu.memory_space<vmem>>, vector<1x1x140x128xbf16>
      %60 = vector.shape_cast %59 : vector<1x1x140x128xbf16> to vector<140x128xbf16>
      %cst_70 = arith.constant dense<0.000000e+00> : vector<16x128xf32>
      %61 = tpu.matmul %55, %58, %cst_70 {dimension_numbers = #tpu.dot_dimension_numbers<[1], [0], [0], [1], [0, 0, 1, 1], [], []>} : vector<16x140xbf16>, vector<140x128xbf16>, vector<16x128xf32> -> vector<16x128xf32>
      %62 = arith.addf %54, %61 : vector<16x128xf32>
      %cst_71 = arith.constant dense<0.000000e+00> : vector<16x128xf32>
      %63 = tpu.matmul %55, %60, %cst_71 {dimension_numbers = #tpu.dot_dimension_numbers<[1], [0], [0], [1], [0, 0, 1, 1], [], []>} : vector<16x140xbf16>, vector<140x128xbf16>, vector<16x128xf32> -> vector<16x128xf32>
      %64 = arith.addf %62, %63 : vector<16x128xf32>
      %cst_72 = arith.constant dense<0.000000e+00> : vector<16x128xf32>
      %65 = tpu.matmul %56, %58, %cst_72 {dimension_numbers = #tpu.dot_dimension_numbers<[1], [0], [0], [1], [0, 0, 1, 1], [], []>} : vector<16x140xbf16>, vector<140x128xbf16>, vector<16x128xf32> -> vector<16x128xf32>
      %66 = arith.addf %64, %65 : vector<16x128xf32>
      %c4 = arith.constant 4 : index
      %c0_73 = arith.constant 0 : index
      %67 = vector.load %arg5[%c4, %c0_73] : memref<28x140xbf16, #tpu.memory_space<vmem>>, vector<16x140xbf16>
      %c4_74 = arith.constant 4 : index
      %c0_75 = arith.constant 0 : index
      %68 = vector.load %arg6[%c4_74, %c0_75] : memref<28x140xbf16, #tpu.memory_space<vmem>>, vector<16x140xbf16>
      %c0_76 = arith.constant 0 : index
      %c3_77 = arith.constant 3 : index
      %c0_78 = arith.constant 0 : index
      %c0_79 = arith.constant 0 : index
      %69 = vector.load %arg2[%c0_76, %c3_77, %c0_78, %c0_79] : memref<2x11x140x128xbf16, #tpu.memory_space<vmem>>, vector<1x1x140x128xbf16>
      %70 = vector.shape_cast %69 : vector<1x1x140x128xbf16> to vector<140x128xbf16>
      %c1_80 = arith.constant 1 : index
      %c3_81 = arith.constant 3 : index
      %c0_82 = arith.constant 0 : index
      %c0_83 = arith.constant 0 : index
      %71 = vector.load %arg2[%c1_80, %c3_81, %c0_82, %c0_83] : memref<2x11x140x128xbf16, #tpu.memory_space<vmem>>, vector<1x1x140x128xbf16>
      %72 = vector.shape_cast %71 : vector<1x1x140x128xbf16> to vector<140x128xbf16>
      %cst_84 = arith.constant dense<0.000000e+00> : vector<16x128xf32>
      %73 = tpu.matmul %67, %70, %cst_84 {dimension_numbers = #tpu.dot_dimension_numbers<[1], [0], [0], [1], [0, 0, 1, 1], [], []>} : vector<16x140xbf16>, vector<140x128xbf16>, vector<16x128xf32> -> vector<16x128xf32>
      %74 = arith.addf %66, %73 : vector<16x128xf32>
      %cst_85 = arith.constant dense<0.000000e+00> : vector<16x128xf32>
      %75 = tpu.matmul %67, %72, %cst_85 {dimension_numbers = #tpu.dot_dimension_numbers<[1], [0], [0], [1], [0, 0, 1, 1], [], []>} : vector<16x140xbf16>, vector<140x128xbf16>, vector<16x128xf32> -> vector<16x128xf32>
      %76 = arith.addf %74, %75 : vector<16x128xf32>
      %cst_86 = arith.constant dense<0.000000e+00> : vector<16x128xf32>
      %77 = tpu.matmul %68, %70, %cst_86 {dimension_numbers = #tpu.dot_dimension_numbers<[1], [0], [0], [1], [0, 0, 1, 1], [], []>} : vector<16x140xbf16>, vector<140x128xbf16>, vector<16x128xf32> -> vector<16x128xf32>
      %78 = arith.addf %76, %77 : vector<16x128xf32>
      %c5 = arith.constant 5 : index
      %c0_87 = arith.constant 0 : index
      %79 = vector.load %arg5[%c5, %c0_87] : memref<28x140xbf16, #tpu.memory_space<vmem>>, vector<16x140xbf16>
      %c5_88 = arith.constant 5 : index
      %c0_89 = arith.constant 0 : index
      %80 = vector.load %arg6[%c5_88, %c0_89] : memref<28x140xbf16, #tpu.memory_space<vmem>>, vector<16x140xbf16>
      %c0_90 = arith.constant 0 : index
      %c4_91 = arith.constant 4 : index
      %c0_92 = arith.constant 0 : index
      %c0_93 = arith.constant 0 : index
      %81 = vector.load %arg2[%c0_90, %c4_91, %c0_92, %c0_93] : memref<2x11x140x128xbf16, #tpu.memory_space<vmem>>, vector<1x1x140x128xbf16>
      %82 = vector.shape_cast %81 : vector<1x1x140x128xbf16> to vector<140x128xbf16>
      %c1_94 = arith.constant 1 : index
      %c4_95 = arith.constant 4 : index
      %c0_96 = arith.constant 0 : index
      %c0_97 = arith.constant 0 : index
      %83 = vector.load %arg2[%c1_94, %c4_95, %c0_96, %c0_97] : memref<2x11x140x128xbf16, #tpu.memory_space<vmem>>, vector<1x1x140x128xbf16>
      %84 = vector.shape_cast %83 : vector<1x1x140x128xbf16> to vector<140x128xbf16>
      %cst_98 = arith.constant dense<0.000000e+00> : vector<16x128xf32>
      %85 = tpu.matmul %79, %82, %cst_98 {dimension_numbers = #tpu.dot_dimension_numbers<[1], [0], [0], [1], [0, 0, 1, 1], [], []>} : vector<16x140xbf16>, vector<140x128xbf16>, vector<16x128xf32> -> vector<16x128xf32>
      %86 = arith.addf %78, %85 : vector<16x128xf32>
      %cst_99 = arith.constant dense<0.000000e+00> : vector<16x128xf32>
      %87 = tpu.matmul %79, %84, %cst_99 {dimension_numbers = #tpu.dot_dimension_numbers<[1], [0], [0], [1], [0, 0, 1, 1], [], []>} : vector<16x140xbf16>, vector<140x128xbf16>, vector<16x128xf32> -> vector<16x128xf32>
      %88 = arith.addf %86, %87 : vector<16x128xf32>
      %cst_100 = arith.constant dense<0.000000e+00> : vector<16x128xf32>
      %89 = tpu.matmul %80, %82, %cst_100 {dimension_numbers = #tpu.dot_dimension_numbers<[1], [0], [0], [1], [0, 0, 1, 1], [], []>} : vector<16x140xbf16>, vector<140x128xbf16>, vector<16x128xf32> -> vector<16x128xf32>
      %90 = arith.addf %88, %89 : vector<16x128xf32>
      %c6_101 = arith.constant 6 : index
      %c0_102 = arith.constant 0 : index
      %91 = vector.load %arg5[%c6_101, %c0_102] : memref<28x140xbf16, #tpu.memory_space<vmem>>, vector<16x140xbf16>
      %c6_103 = arith.constant 6 : index
      %c0_104 = arith.constant 0 : index
      %92 = vector.load %arg6[%c6_103, %c0_104] : memref<28x140xbf16, #tpu.memory_space<vmem>>, vector<16x140xbf16>
      %c0_105 = arith.constant 0 : index
      %c5_106 = arith.constant 5 : index
      %c0_107 = arith.constant 0 : index
      %c0_108 = arith.constant 0 : index
      %93 = vector.load %arg2[%c0_105, %c5_106, %c0_107, %c0_108] : memref<2x11x140x128xbf16, #tpu.memory_space<vmem>>, vector<1x1x140x128xbf16>
      %94 = vector.shape_cast %93 : vector<1x1x140x128xbf16> to vector<140x128xbf16>
      %c1_109 = arith.constant 1 : index
      %c5_110 = arith.constant 5 : index
      %c0_111 = arith.constant 0 : index
      %c0_112 = arith.constant 0 : index
      %95 = vector.load %arg2[%c1_109, %c5_110, %c0_111, %c0_112] : memref<2x11x140x128xbf16, #tpu.memory_space<vmem>>, vector<1x1x140x128xbf16>
      %96 = vector.shape_cast %95 : vector<1x1x140x128xbf16> to vector<140x128xbf16>
      %cst_113 = arith.constant dense<0.000000e+00> : vector<16x128xf32>
      %97 = tpu.matmul %91, %94, %cst_113 {dimension_numbers = #tpu.dot_dimension_numbers<[1], [0], [0], [1], [0, 0, 1, 1], [], []>} : vector<16x140xbf16>, vector<140x128xbf16>, vector<16x128xf32> -> vector<16x128xf32>
      %98 = arith.addf %90, %97 : vector<16x128xf32>
      %cst_114 = arith.constant dense<0.000000e+00> : vector<16x128xf32>
      %99 = tpu.matmul %91, %96, %cst_114 {dimension_numbers = #tpu.dot_dimension_numbers<[1], [0], [0], [1], [0, 0, 1, 1], [], []>} : vector<16x140xbf16>, vector<140x128xbf16>, vector<16x128xf32> -> vector<16x128xf32>
      %100 = arith.addf %98, %99 : vector<16x128xf32>
      %cst_115 = arith.constant dense<0.000000e+00> : vector<16x128xf32>
      %101 = tpu.matmul %92, %94, %cst_115 {dimension_numbers = #tpu.dot_dimension_numbers<[1], [0], [0], [1], [0, 0, 1, 1], [], []>} : vector<16x140xbf16>, vector<140x128xbf16>, vector<16x128xf32> -> vector<16x128xf32>
      %102 = arith.addf %100, %101 : vector<16x128xf32>
      %c7 = arith.constant 7 : index
      %c0_116 = arith.constant 0 : index
      %103 = vector.load %arg5[%c7, %c0_116] : memref<28x140xbf16, #tpu.memory_space<vmem>>, vector<16x140xbf16>
      %c7_117 = arith.constant 7 : index
      %c0_118 = arith.constant 0 : index
      %104 = vector.load %arg6[%c7_117, %c0_118] : memref<28x140xbf16, #tpu.memory_space<vmem>>, vector<16x140xbf16>
      %c0_119 = arith.constant 0 : index
      %c6_120 = arith.constant 6 : index
      %c0_121 = arith.constant 0 : index
      %c0_122 = arith.constant 0 : index
      %105 = vector.load %arg2[%c0_119, %c6_120, %c0_121, %c0_122] : memref<2x11x140x128xbf16, #tpu.memory_space<vmem>>, vector<1x1x140x128xbf16>
      %106 = vector.shape_cast %105 : vector<1x1x140x128xbf16> to vector<140x128xbf16>
      %c1_123 = arith.constant 1 : index
      %c6_124 = arith.constant 6 : index
      %c0_125 = arith.constant 0 : index
      %c0_126 = arith.constant 0 : index
      %107 = vector.load %arg2[%c1_123, %c6_124, %c0_125, %c0_126] : memref<2x11x140x128xbf16, #tpu.memory_space<vmem>>, vector<1x1x140x128xbf16>
      %108 = vector.shape_cast %107 : vector<1x1x140x128xbf16> to vector<140x128xbf16>
      %cst_127 = arith.constant dense<0.000000e+00> : vector<16x128xf32>
      %109 = tpu.matmul %103, %106, %cst_127 {dimension_numbers = #tpu.dot_dimension_numbers<[1], [0], [0], [1], [0, 0, 1, 1], [], []>} : vector<16x140xbf16>, vector<140x128xbf16>, vector<16x128xf32> -> vector<16x128xf32>
      %110 = arith.addf %102, %109 : vector<16x128xf32>
      %cst_128 = arith.constant dense<0.000000e+00> : vector<16x128xf32>
      %111 = tpu.matmul %103, %108, %cst_128 {dimension_numbers = #tpu.dot_dimension_numbers<[1], [0], [0], [1], [0, 0, 1, 1], [], []>} : vector<16x140xbf16>, vector<140x128xbf16>, vector<16x128xf32> -> vector<16x128xf32>
      %112 = arith.addf %110, %111 : vector<16x128xf32>
      %cst_129 = arith.constant dense<0.000000e+00> : vector<16x128xf32>
      %113 = tpu.matmul %104, %106, %cst_129 {dimension_numbers = #tpu.dot_dimension_numbers<[1], [0], [0], [1], [0, 0, 1, 1], [], []>} : vector<16x140xbf16>, vector<140x128xbf16>, vector<16x128xf32> -> vector<16x128xf32>
      %114 = arith.addf %112, %113 : vector<16x128xf32>
      %c8 = arith.constant 8 : index
      %c0_130 = arith.constant 0 : index
      %115 = vector.load %arg5[%c8, %c0_130] : memref<28x140xbf16, #tpu.memory_space<vmem>>, vector<16x140xbf16>
      %c8_131 = arith.constant 8 : index
      %c0_132 = arith.constant 0 : index
      %116 = vector.load %arg6[%c8_131, %c0_132] : memref<28x140xbf16, #tpu.memory_space<vmem>>, vector<16x140xbf16>
      %c0_133 = arith.constant 0 : index
      %c7_134 = arith.constant 7 : index
      %c0_135 = arith.constant 0 : index
      %c0_136 = arith.constant 0 : index
      %117 = vector.load %arg2[%c0_133, %c7_134, %c0_135, %c0_136] : memref<2x11x140x128xbf16, #tpu.memory_space<vmem>>, vector<1x1x140x128xbf16>
      %118 = vector.shape_cast %117 : vector<1x1x140x128xbf16> to vector<140x128xbf16>
      %c1_137 = arith.constant 1 : index
      %c7_138 = arith.constant 7 : index
      %c0_139 = arith.constant 0 : index
      %c0_140 = arith.constant 0 : index
      %119 = vector.load %arg2[%c1_137, %c7_138, %c0_139, %c0_140] : memref<2x11x140x128xbf16, #tpu.memory_space<vmem>>, vector<1x1x140x128xbf16>
      %120 = vector.shape_cast %119 : vector<1x1x140x128xbf16> to vector<140x128xbf16>
      %cst_141 = arith.constant dense<0.000000e+00> : vector<16x128xf32>
      %121 = tpu.matmul %115, %118, %cst_141 {dimension_numbers = #tpu.dot_dimension_numbers<[1], [0], [0], [1], [0, 0, 1, 1], [], []>} : vector<16x140xbf16>, vector<140x128xbf16>, vector<16x128xf32> -> vector<16x128xf32>
      %122 = arith.addf %114, %121 : vector<16x128xf32>
      %cst_142 = arith.constant dense<0.000000e+00> : vector<16x128xf32>
      %123 = tpu.matmul %115, %120, %cst_142 {dimension_numbers = #tpu.dot_dimension_numbers<[1], [0], [0], [1], [0, 0, 1, 1], [], []>} : vector<16x140xbf16>, vector<140x128xbf16>, vector<16x128xf32> -> vector<16x128xf32>
      %124 = arith.addf %122, %123 : vector<16x128xf32>
      %cst_143 = arith.constant dense<0.000000e+00> : vector<16x128xf32>
      %125 = tpu.matmul %116, %118, %cst_143 {dimension_numbers = #tpu.dot_dimension_numbers<[1], [0], [0], [1], [0, 0, 1, 1], [], []>} : vector<16x140xbf16>, vector<140x128xbf16>, vector<16x128xf32> -> vector<16x128xf32>
      %126 = arith.addf %124, %125 : vector<16x128xf32>
      %c9 = arith.constant 9 : index
      %c0_144 = arith.constant 0 : index
      %127 = vector.load %arg5[%c9, %c0_144] : memref<28x140xbf16, #tpu.memory_space<vmem>>, vector<16x140xbf16>
      %c9_145 = arith.constant 9 : index
      %c0_146 = arith.constant 0 : index
      %128 = vector.load %arg6[%c9_145, %c0_146] : memref<28x140xbf16, #tpu.memory_space<vmem>>, vector<16x140xbf16>
      %c0_147 = arith.constant 0 : index
      %c8_148 = arith.constant 8 : index
      %c0_149 = arith.constant 0 : index
      %c0_150 = arith.constant 0 : index
      %129 = vector.load %arg2[%c0_147, %c8_148, %c0_149, %c0_150] : memref<2x11x140x128xbf16, #tpu.memory_space<vmem>>, vector<1x1x140x128xbf16>
      %130 = vector.shape_cast %129 : vector<1x1x140x128xbf16> to vector<140x128xbf16>
      %c1_151 = arith.constant 1 : index
      %c8_152 = arith.constant 8 : index
      %c0_153 = arith.constant 0 : index
      %c0_154 = arith.constant 0 : index
      %131 = vector.load %arg2[%c1_151, %c8_152, %c0_153, %c0_154] : memref<2x11x140x128xbf16, #tpu.memory_space<vmem>>, vector<1x1x140x128xbf16>
      %132 = vector.shape_cast %131 : vector<1x1x140x128xbf16> to vector<140x128xbf16>
      %cst_155 = arith.constant dense<0.000000e+00> : vector<16x128xf32>
      %133 = tpu.matmul %127, %130, %cst_155 {dimension_numbers = #tpu.dot_dimension_numbers<[1], [0], [0], [1], [0, 0, 1, 1], [], []>} : vector<16x140xbf16>, vector<140x128xbf16>, vector<16x128xf32> -> vector<16x128xf32>
      %134 = arith.addf %126, %133 : vector<16x128xf32>
      %cst_156 = arith.constant dense<0.000000e+00> : vector<16x128xf32>
      %135 = tpu.matmul %127, %132, %cst_156 {dimension_numbers = #tpu.dot_dimension_numbers<[1], [0], [0], [1], [0, 0, 1, 1], [], []>} : vector<16x140xbf16>, vector<140x128xbf16>, vector<16x128xf32> -> vector<16x128xf32>
      %136 = arith.addf %134, %135 : vector<16x128xf32>
      %cst_157 = arith.constant dense<0.000000e+00> : vector<16x128xf32>
      %137 = tpu.matmul %128, %130, %cst_157 {dimension_numbers = #tpu.dot_dimension_numbers<[1], [0], [0], [1], [0, 0, 1, 1], [], []>} : vector<16x140xbf16>, vector<140x128xbf16>, vector<16x128xf32> -> vector<16x128xf32>
      %138 = arith.addf %136, %137 : vector<16x128xf32>
      %c10 = arith.constant 10 : index
      %c0_158 = arith.constant 0 : index
      %139 = vector.load %arg5[%c10, %c0_158] : memref<28x140xbf16, #tpu.memory_space<vmem>>, vector<16x140xbf16>
      %c10_159 = arith.constant 10 : index
      %c0_160 = arith.constant 0 : index
      %140 = vector.load %arg6[%c10_159, %c0_160] : memref<28x140xbf16, #tpu.memory_space<vmem>>, vector<16x140xbf16>
      %c0_161 = arith.constant 0 : index
      %c9_162 = arith.constant 9 : index
      %c0_163 = arith.constant 0 : index
      %c0_164 = arith.constant 0 : index
      %141 = vector.load %arg2[%c0_161, %c9_162, %c0_163, %c0_164] : memref<2x11x140x128xbf16, #tpu.memory_space<vmem>>, vector<1x1x140x128xbf16>
      %142 = vector.shape_cast %141 : vector<1x1x140x128xbf16> to vector<140x128xbf16>
      %c1_165 = arith.constant 1 : index
      %c9_166 = arith.constant 9 : index
      %c0_167 = arith.constant 0 : index
      %c0_168 = arith.constant 0 : index
      %143 = vector.load %arg2[%c1_165, %c9_166, %c0_167, %c0_168] : memref<2x11x140x128xbf16, #tpu.memory_space<vmem>>, vector<1x1x140x128xbf16>
      %144 = vector.shape_cast %143 : vector<1x1x140x128xbf16> to vector<140x128xbf16>
      %cst_169 = arith.constant dense<0.000000e+00> : vector<16x128xf32>
      %145 = tpu.matmul %139, %142, %cst_169 {dimension_numbers = #tpu.dot_dimension_numbers<[1], [0], [0], [1], [0, 0, 1, 1], [], []>} : vector<16x140xbf16>, vector<140x128xbf16>, vector<16x128xf32> -> vector<16x128xf32>
      %146 = arith.addf %138, %145 : vector<16x128xf32>
      %cst_170 = arith.constant dense<0.000000e+00> : vector<16x128xf32>
      %147 = tpu.matmul %139, %144, %cst_170 {dimension_numbers = #tpu.dot_dimension_numbers<[1], [0], [0], [1], [0, 0, 1, 1], [], []>} : vector<16x140xbf16>, vector<140x128xbf16>, vector<16x128xf32> -> vector<16x128xf32>
      %148 = arith.addf %146, %147 : vector<16x128xf32>
      %cst_171 = arith.constant dense<0.000000e+00> : vector<16x128xf32>
      %149 = tpu.matmul %140, %142, %cst_171 {dimension_numbers = #tpu.dot_dimension_numbers<[1], [0], [0], [1], [0, 0, 1, 1], [], []>} : vector<16x140xbf16>, vector<140x128xbf16>, vector<16x128xf32> -> vector<16x128xf32>
      %150 = arith.addf %148, %149 : vector<16x128xf32>
      %c11 = arith.constant 11 : index
      %c0_172 = arith.constant 0 : index
      %151 = vector.load %arg5[%c11, %c0_172] : memref<28x140xbf16, #tpu.memory_space<vmem>>, vector<16x140xbf16>
      %c11_173 = arith.constant 11 : index
      %c0_174 = arith.constant 0 : index
      %152 = vector.load %arg6[%c11_173, %c0_174] : memref<28x140xbf16, #tpu.memory_space<vmem>>, vector<16x140xbf16>
      %c0_175 = arith.constant 0 : index
      %c10_176 = arith.constant 10 : index
      %c0_177 = arith.constant 0 : index
      %c0_178 = arith.constant 0 : index
      %153 = vector.load %arg2[%c0_175, %c10_176, %c0_177, %c0_178] : memref<2x11x140x128xbf16, #tpu.memory_space<vmem>>, vector<1x1x140x128xbf16>
      %154 = vector.shape_cast %153 : vector<1x1x140x128xbf16> to vector<140x128xbf16>
      %c1_179 = arith.constant 1 : index
      %c10_180 = arith.constant 10 : index
      %c0_181 = arith.constant 0 : index
      %c0_182 = arith.constant 0 : index
      %155 = vector.load %arg2[%c1_179, %c10_180, %c0_181, %c0_182] : memref<2x11x140x128xbf16, #tpu.memory_space<vmem>>, vector<1x1x140x128xbf16>
      %156 = vector.shape_cast %155 : vector<1x1x140x128xbf16> to vector<140x128xbf16>
      %cst_183 = arith.constant dense<0.000000e+00> : vector<16x128xf32>
      %157 = tpu.matmul %151, %154, %cst_183 {dimension_numbers = #tpu.dot_dimension_numbers<[1], [0], [0], [1], [0, 0, 1, 1], [], []>} : vector<16x140xbf16>, vector<140x128xbf16>, vector<16x128xf32> -> vector<16x128xf32>
      %158 = arith.addf %150, %157 : vector<16x128xf32>
      %cst_184 = arith.constant dense<0.000000e+00> : vector<16x128xf32>
      %159 = tpu.matmul %151, %156, %cst_184 {dimension_numbers = #tpu.dot_dimension_numbers<[1], [0], [0], [1], [0, 0, 1, 1], [], []>} : vector<16x140xbf16>, vector<140x128xbf16>, vector<16x128xf32> -> vector<16x128xf32>
      %160 = arith.addf %158, %159 : vector<16x128xf32>
      %cst_185 = arith.constant dense<0.000000e+00> : vector<16x128xf32>
      %161 = tpu.matmul %152, %154, %cst_185 {dimension_numbers = #tpu.dot_dimension_numbers<[1], [0], [0], [1], [0, 0, 1, 1], [], []>} : vector<16x140xbf16>, vector<140x128xbf16>, vector<16x128xf32> -> vector<16x128xf32>
      %162 = arith.addf %160, %161 : vector<16x128xf32>
      %163 = vector.extract_strided_slice %162 {offsets = [0, 0], sizes = [16, 16], strides = [1, 1]} : vector<16x128xf32> to vector<16x16xf32>
      %c0_186 = arith.constant 0 : index
      %c0_187 = arith.constant 0 : index
      %c0_188 = arith.constant 0 : index
      %c0_189 = arith.constant 0 : index
      %164 = vector.load %arg4[%c0_186, %c0_187, %c0_188, %c0_189] : memref<1x1x16x16xf32, #tpu.memory_space<vmem>>, vector<1x1x16x16xf32>
      %165 = vector.shape_cast %164 : vector<1x1x16x16xf32> to vector<16x16xf32>
      %166 = vector.shape_cast %163 : vector<16x16xf32> to vector<1x1x16x16xf32>
      tpu.vector_store %arg4[%c0_186, %c0_187, %c0_188, %c0_189], %166 {strides = array<i32>} : memref<1x1x16x16xf32, #tpu.memory_space<vmem>>, vector<1x1x16x16xf32>,
      %c0_190 = arith.constant 0 : index
      %c0_191 = arith.constant 0 : index
      %167 = vector.load %arg7[%c0_190, %c0_191] : memref<16x16xf32, #tpu.memory_space<vmem>>, vector<16x16xf32>
      tpu.vector_store %arg7[%c0_190, %c0_191], %163 {strides = array<i32>} : memref<16x16xf32, #tpu.memory_space<vmem>>, vector<16x16xf32>,
    } else {
    }
    %c0_i32_1 = arith.constant 0 : i32
    %3 = arith.cmpi sgt, %arg1, %c0_i32_1 : i32
    %4 = arith.extui %3 : i1 to i32
    %c0_i32_2 = arith.constant 0 : i32
    %5 = arith.cmpi ne, %4, %c0_i32_2 : i32
    scf.if %5 {
      %c0 = arith.constant 0 : index
      %c0_3 = arith.constant 0 : index
      %6 = vector.load %arg7[%c0, %c0_3] : memref<16x16xf32, #tpu.memory_space<vmem>>, vector<16x16xf32>
      %c0_4 = arith.constant 0 : index
      %c0_5 = arith.constant 0 : index
      %c0_6 = arith.constant 0 : index
      %c0_7 = arith.constant 0 : index
      %7 = vector.load %arg4[%c0_4, %c0_5, %c0_6, %c0_7] : memref<1x1x16x16xf32, #tpu.memory_space<vmem>>, vector<1x1x16x16xf32>
      %8 = vector.shape_cast %7 : vector<1x1x16x16xf32> to vector<16x16xf32>
      %9 = vector.shape_cast %6 : vector<16x16xf32> to vector<1x1x16x16xf32>
      tpu.vector_store %arg4[%c0_4, %c0_5, %c0_6, %c0_7], %9 {strides = array<i32>} : memref<1x1x16x16xf32, #tpu.memory_space<vmem>>, vector<1x1x16x16xf32>,
    } else {
    }
    return
  }
  func.func @transform_0(%arg0: i32, %arg1: i32) -> (i32, i32, i32, i32) {
    %c0_i32 = arith.constant 0 : i32
    %c0_i32_0 = arith.constant 0 : i32
    %c0_i32_1 = arith.constant 0 : i32
    %c0_i32_2 = arith.constant 0 : i32
    %c0_i32_3 = arith.constant 0 : i32
    return %c0_i32, %c0_i32_0, %c0_i32_1, %c0_i32_2 : i32, i32, i32, i32
  }
  func.func @transform_1(%arg0: i32, %arg1: i32) -> (i32, i32, i32) {
    %c0_i32 = arith.constant 0 : i32
    %c0_i32_0 = arith.constant 0 : i32
    %c0_i32_1 = arith.constant 0 : i32
    return %arg0, %c0_i32, %c0_i32_0 : i32, i32, i32
  }
  func.func @transform_2(%arg0: i32, %arg1: i32) -> (i32, i32, i32, i32) {
    %c0_i32 = arith.constant 0 : i32
    %c0_i32_0 = arith.constant 0 : i32
    %c0_i32_1 = arith.constant 0 : i32
    return %arg0, %arg1, %c0_i32, %c0_i32_0 : i32, i32, i32, i32
  }
}

</mosaic_0001>

<llo_original>
// kernel: tpu_custom_call.1
$region0: #{tpu_custom_call.1}
  #allocation0 [shape = 'u32[]', space=smem, size = 0x4, offset = 0x4, fixed_abs, tag = 'smem constant byte address 0x4 - core index']
  #allocation1 [shape = 'u32[144,128]{1,0:T(1,128)}', space=vmem, size = 0x12000, scoped, tag = 'internal scratch']
  #allocation2 [shape = 'bf16[28,140]{1,0:T(8,128)(2,1)}', space=vmem, size = 0x4000, scoped, tag = 'scratch operand']
  #allocation3 [shape = 'bf16[28,140]{1,0:T(8,128)(2,1)}', space=vmem, size = 0x4000, scoped, tag = 'scratch operand']
  #allocation4 [shape = 'f32[16,16]{1,0:T(8,128)}', space=vmem, size = 0x2000, scoped, tag = 'scratch operand']
  %s0 = inlined_call_operand.hbm [shape: bf16[2,11,140,128], index: 0, kind: input, shape index: {}]
  %s1 = inlined_call_operand.hbm [shape: f32[6,16,16], index: 1, kind: input, shape index: {}]
  %s2 = inlined_call_operand.hbm [shape: f32[6,2,16,16], index: 2, kind: output, shape index: {}]
  %s3 = sld [smem:[#allocation0]]
  $region57: #{tpu_custom_call.1} parent=0
    _
  %s5 = ssub.s32 1, %s3
  %s6 = scalar_select 0, %s5, %s3
  $region1: #{tpu_custom_call.1} parent=0
    #allocation5 [shape = 'u8[811008]{0}', space=vmem, size = 0xc6000, scoped, tag = 'input window, operand 0, single buffered']
    #allocation6 [shape = 's32[2]{0}', space=sflag, size = 0x8, scoped, tag = 'scoped memory for tpu_custom_call.1']
    #allocation7 [shape = 's32[2]{0}', space=sflag, size = 0x8, scoped, tag = 'scoped memory for tpu_custom_call.1']
    #allocation8 [shape = 'u8[16384]{0}', space=vmem, size = 0x4000, scoped, tag = 'input window, operand 1']
    #allocation9 [shape = 's32[2]{0}', space=sflag, size = 0x8, scoped, tag = 'scoped memory for tpu_custom_call.1']
    #allocation10 [shape = 'u8[16384]{0}', space=vmem, size = 0x4000, scoped, tag = 'output window, operand 0']
    %7 = vsyncpa [#allocation6], 0
    %8 = vsyncpa [#allocation9], 0
    %s9 = scalar_lea.sflag [#allocation9], 1
    %10 = vsyncpa %s9, 0
    %11 = vsyncpa [#allocation7], 0
    %s12 = scalar_lea.sflag [#allocation7], 1
    %13 = vsyncpa %s12, 0
    loop: start=0, step=1, limit=14
    $region2: #{tpu_custom_call.1} parent=1 // loop_pre_header
      _
    $region3: #{tpu_custom_call.1} parent=1 // loop_header
      %s15 = sphi 0, %s19
      %p16 = scmp.ge.s32.totalorder %s15, 14
      %s22 = sphi 0, %s34
      %s23 = sphi 0, %s30
      %s24 = sphi 0, %s22
      %s25 = sphi 0, %s23
      %s26 = sphi 0, %s24
      %s27 = sphi 0, %s25
      %s35 = sphi 0, %s35
      %s37 = sphi 0, %s35
      %s38 = sphi 0, %s37
      %s52 = sphi 0, %s38
      %s58 = sphi 0, %s60
      %s61 = sphi 0, %s58
      %s62 = sphi 0, %s61
      %s78 = sphi 0, %s62
      %s86 = sphi 0, %s88
      %s89 = sphi 0, %s86
      %s90 = sphi 0, %s89
      %s106 = sphi 0, %s90
    $region4: #{tpu_custom_call.1} parent=1 // loop_header_branch
      %18 = sbr.rel (%p16) target = $region8
    $region5: #{tpu_custom_call.1} parent=1 // loop_body
      %s20 = ssub.s32 %s15, 1
      %s21 = ssub.s32 %s15, 2
      %s28 = sadd.s32 1, %s23
      %p29 = scmp.ge.s32.totalorder %s28, 2
      %s30 = scalar_select %p29, 0, %s28
      %s31 = sadd.s32 1, %s22
      %s32 = scalar_select %p29, %s31, %s22
      %p33 = scmp.ge.s32.totalorder %s32, 6
      %s34 = scalar_select %p33, 0, %s32
      %s36 = sadd.s32 %s35, 1
      %p39 = scmp.eq.s32.totalorder %s15, 11
      %p40 = scmp.ne.s32.totalorder %s35, %s37
      %p41 = scmp.eq.s32.totalorder %s15, 0
      %p42 = por %p40, %p41
      %p43 = scmp.ne.s32.totalorder %s35, %s37
      %p44 = scmp.eq.s32.totalorder %s20, 11
      %p45 = por %p43, %p44
      %p46 = scmp.ne.s32.totalorder %s37, %s38
      %p47 = scmp.eq.s32.totalorder %s20, 0
      %p48 = por %p46, %p47
      %p49 = scmp.ne.s32.totalorder %s37, %s38
      %p50 = scmp.eq.s32.totalorder %s21, 11
      %p51 = por %p49, %p50
      %p53 = scmp.ne.s32.totalorder %s38, %s52
      %p54 = scmp.eq.s32.totalorder %s21, 0
      %p55 = por %p53, %p54
      %s56 = ssub.s32 %s22, %s34
      %p57 = scmp.eq.s32.totalorder %s56, 0
      %s59 = sadd.s32 %s58, 1
      %s60 = scalar_select %p57, %s58, %s59
      %p63 = pneg %p57
      %p64 = scmp.eq.s32.totalorder %s15, 11
      %p65 = por %p63, %p64
      %p66 = scmp.ne.s32.totalorder %s58, %s61
      %p67 = scmp.eq.s32.totalorder %s15, 0
      %p68 = por %p66, %p67
      %p69 = scmp.ne.s32.totalorder %s58, %s61
      %p70 = scmp.eq.s32.totalorder %s20, 11
      %p71 = por %p69, %p70
      %p72 = scmp.ne.s32.totalorder %s61, %s62
      %p73 = scmp.eq.s32.totalorder %s20, 0
      %p74 = por %p72, %p73
      %p75 = scmp.ne.s32.totalorder %s61, %s62
      %p76 = scmp.eq.s32.totalorder %s21, 11
      %p77 = por %p75, %p76
      %p79 = scmp.ne.s32.totalorder %s62, %s78
      %p80 = scmp.eq.s32.totalorder %s21, 0
      %p81 = por %p79, %p80
      %s82 = ssub.s32 %s22, %s34
      %s83 = ssub.s32 %s23, %s30
      %s84 = sor.u32 %s82, %s83
      %p85 = scmp.eq.s32.totalorder %s84, 0
      %s87 = sadd.s32 %s86, 1
      %s88 = scalar_select %p85, %s86, %s87
      %p91 = pneg %p85
      %p92 = scmp.eq.s32.totalorder %s15, 11
      %p93 = por %p91, %p92
      %p94 = scmp.ne.s32.totalorder %s86, %s89
      %p95 = scmp.eq.s32.totalorder %s15, 0
      %p96 = por %p94, %p95
      %p97 = scmp.ne.s32.totalorder %s86, %s89
      %p98 = scmp.eq.s32.totalorder %s20, 11
      %p99 = por %p97, %p98
      %p100 = scmp.ne.s32.totalorder %s89, %s90
      %p101 = scmp.eq.s32.totalorder %s20, 0
      %p102 = por %p100, %p101
      %p103 = scmp.ne.s32.totalorder %s89, %s90
      %p104 = scmp.eq.s32.totalorder %s21, 11
      %p105 = por %p103, %p104
      %p107 = scmp.ne.s32.totalorder %s90, %s106
      %p108 = scmp.eq.s32.totalorder %s21, 0
      %p109 = por %p107, %p108
      %p110 = scmp.le.s32.totalorder 1, %s15
      %p111 = scmp.lt.s32.totalorder %s15, 13
      %p112 = pnand %p110, %p111
      %p113 = pneg %p112
      // Predicated region
      $region9: #{tpu_custom_call.1} parent=5 // pred_check
        _
      $region10: #{tpu_custom_call.1} parent=5 // pred_check_branch
        %115 = sbr.rel (%p112) target = $region12
      $region11: #{tpu_custom_call.1} parent=5 // pred_region
        %s116 = ssub.s32 %s15, 1
        // Predicated region
        $region13: #{tpu_custom_call.1} parent=11 // pred_check
          %p117 = pneg %p48
        $region14: #{tpu_custom_call.1} parent=11 // pred_check_branch
          %119 = sbr.rel (%p117) target = $region16
        $region15: #{tpu_custom_call.1} parent=11 // pred_region
          %s121 = ssub.s32 25344, 25344
          %122 = vsyncadd [#allocation6], %s121
          %s123 = sshll.u32 [#allocation5], 4
          %s124 = int_to_ptr.vmem [resolvable:$true] %s123
          %129 = dma.hbm_to_vmem [thread:$0]  %s0, 25344, %s124, [#allocation6], 64, 64, 4
        $region16: #{tpu_custom_call.1} parent=11 // pred_fallthru
          _
      $region12: #{tpu_custom_call.1} parent=5 // pred_fallthru
        _
      %p130 = scmp.lt.s32.totalorder %s15, 12
      // Predicated region
      $region17: #{tpu_custom_call.1} parent=5 // pred_check
        %p131 = pneg %p130
      $region18: #{tpu_custom_call.1} parent=5 // pred_check_branch
        %133 = sbr.rel (%p131) target = $region20
      $region19: #{tpu_custom_call.1} parent=5 // pred_region
        // Predicated region
        $region21: #{tpu_custom_call.1} parent=19 // pred_check
          %p134 = pneg %p68
        $region22: #{tpu_custom_call.1} parent=19 // pred_check_branch
          %136 = sbr.rel (%p134) target = $region24
        $region23: #{tpu_custom_call.1} parent=19 // pred_region
          %s137 = sand.u32 %s58, 1
          %s138 = scalar_lea.sflag [#allocation9], %s137
          %s139 = sand.u32 %s58, 1
          %s140 = smul.addr %s139, 16
          %s141 = scalar_lea.vmem [#allocation8], %s140
          %s143 = ssub.s32 256, 256
          %144 = vsyncadd %s138, %s143
          %s145 = smul.addr %s22, 2
          %s146 = smul.addr %s145, 128
          %s147 = scalar_lea.hbm %s1, %s146
          %s148 = sshll.u32 %s141, 4
          %s149 = int_to_ptr.vmem [resolvable:$true] %s148
          %154 = dma.hbm_to_vmem [thread:$0]  %s147, 256, %s149, %s138, 128, 128, 8
        $region24: #{tpu_custom_call.1} parent=19 // pred_fallthru
          _
      $region20: #{tpu_custom_call.1} parent=5 // pred_fallthru
        _
      %p155 = scmp.le.s32.totalorder 1, %s15
      %p156 = scmp.lt.s32.totalorder %s15, 13
      %p157 = pnand %p155, %p156
      %p158 = pneg %p157
      // Predicated region
      $region25: #{tpu_custom_call.1} parent=5 // pred_check
        _
      $region26: #{tpu_custom_call.1} parent=5 // pred_check_branch
        %160 = sbr.rel (%p157) target = $region28
      $region27: #{tpu_custom_call.1} parent=5 // pred_region
        %s161 = ssub.s32 %s15, 1
        // Predicated region
        $region29: #{tpu_custom_call.1} parent=27 // pred_check
          %p162 = pneg %p48
        $region30: #{tpu_custom_call.1} parent=27 // pred_check_branch
          %164 = sbr.rel (%p162) target = $region32
        $region31: #{tpu_custom_call.1} parent=27 // pred_region
          %165 = dma.done [#allocation6], 25344
        $region32: #{tpu_custom_call.1} parent=27 // pred_fallthru
          _
        %s166 = sand.u32 %s61, 1
        %s167 = scalar_lea.sflag [#allocation9], %s166
        %s168 = sand.u32 %s61, 1
        %s169 = smul.addr %s168, 16
        %s170 = scalar_lea.vmem [#allocation8], %s169
        // Predicated region
        $region33: #{tpu_custom_call.1} parent=27 // pred_check
          %p171 = pneg %p74
        $region34: #{tpu_custom_call.1} parent=27 // pred_check_branch
          %173 = sbr.rel (%p171) target = $region36
        $region35: #{tpu_custom_call.1} parent=27 // pred_region
          %174 = dma.done %s167, 256
        $region36: #{tpu_custom_call.1} parent=27 // pred_fallthru
          _
        %p175 = pneg %p48
        %p176 = pneg %p45
        %s177 = sand.u32 %s61, 1
        %s178 = scalar_lea.sflag [#allocation9], %s177
        %s179 = sand.u32 %s61, 1
        %s180 = smul.addr %s179, 16
        %s181 = scalar_lea.vmem [#allocation8], %s180
        %p182 = pneg %p74
        %p183 = pneg %p71
        %p184 = pneg %p102
        %p185 = pneg %p99
        %s186 = sand.u32 %s89, 1
        %s187 = scalar_lea.sflag [#allocation7], %s186
        %s188 = sand.u32 %s89, 1
        %s189 = smul.addr %s188, 16
        %s190 = scalar_lea.vmem [#allocation10], %s189
        %p192 = scmp.eq.s32.totalorder %s25, 0
        // Predicated region
        $region37: #{tpu_custom_call.1} parent=27 // pred_check
          %p193 = pneg %p192
        $region38: #{tpu_custom_call.1} parent=27 // pred_check_branch
          %195 = sbr.rel (%p193) target = $region40
        $region39: #{tpu_custom_call.1} parent=27 // pred_region
          %vm196 = vcmask 1042432
          %vm197 = vcmask 96260
          %vm198 = vmor %vm197, %vm196
          %199 = vst.msk [vmem:[#allocation2] sm:$0x77] %vm198, 0
          %vm200 = vcmask 1043459
          %vm201 = vcmask 97287
          %vm202 = vmor %vm201, %vm200
          %203 = vst.msk [vmem:[#allocation2 + $0x10] sm:$0x88] %vm202, 0
          %vm204 = vcmask 1041408
          %vm205 = vcmask 95236
          %vm206 = vmor %vm205, %vm204
          %207 = vst.msk [vmem:[#allocation2 + $0x18] sm:$0x33] %vm206, 0
          %vm208 = vcmask 44035
          %209 = vst.msk [vmem:[#allocation2] sm:$0x8] %vm208, 0
          %vm210 = vcmask 44032
          %211 = vst.msk [vmem:[#allocation2 + $0x8] sm:$0xf] %vm210, 0
          %vm212 = vcmask 43008
          %213 = vst.msk [vmem:[#allocation2 + $0x10] sm:$0x7] %vm212, 0
          %vm214 = vcmask 1043635
          %vm215 = vmor %vm201, %vm214
          %216 = vst.msk [vmem:[#allocation2] sm:$0x88] %vm215, 0
          %vm217 = vcmask 1043632
          %vm218 = vcmask 97284
          %vm219 = vmor %vm218, %vm217
          %220 = vst.msk [vmem:[#allocation2 + $0x8] sm:$0xff] %vm219, 0
          %vm221 = vcmask 1042608
          %vm222 = vmor %vm197, %vm221
          %223 = vst.msk [vmem:[#allocation2 + $0x10] sm:$0x77] %vm222, 0
          %224 = vst.msk [vmem:[#allocation3] sm:$0x77] %vm198, 0
          %225 = vst.msk [vmem:[#allocation3 + $0x10] sm:$0x88] %vm202, 0
          %226 = vst.msk [vmem:[#allocation3 + $0x18] sm:$0x33] %vm206, 0
          %227 = vst.msk [vmem:[#allocation3] sm:$0x8] %vm208, 0
          %228 = vst.msk [vmem:[#allocation3 + $0x8] sm:$0xf] %vm210, 0
          %229 = vst.msk [vmem:[#allocation3 + $0x10] sm:$0x7] %vm212, 0
          %230 = vst.msk [vmem:[#allocation3] sm:$0x88] %vm215, 0
          %231 = vst.msk [vmem:[#allocation3 + $0x8] sm:$0xff] %vm219, 0
          %232 = vst.msk [vmem:[#allocation3 + $0x10] sm:$0x77] %vm222, 0
          %v233 = vld [vmem:[%s170] sm:$0xff]
          %v234 = vld [vmem:[%s170 + $0x8] sm:$0xff]
          %v235 = vpack.c.bf16 %v234, %v233
          %v236 = vunpack.c.l.bf16 %v235
          %v237 = vunpack.c.h.bf16 %v235
          %v238 = vsub.f32 %v233, %v236
          %v239 = vsub.f32 %v234, %v237
          %v240 = vpack.c.bf16 %v239, %v238
          %v242 = vunpack.c.l.b16 %v235
          %v243 = vunpack.c.h.b16 %v235
          %v244 = vpack.c.b16 %v242, %v242
          %v245 = vpack.c.b16 %v243, %v243
          %vm246 = vcmask 1042432
          %vm247 = vcmask 1046532
          %vm248 = vmor %vm246, %vm247
          %v249 = vrot.slane %v244, 5
          %v250 = vrot.slane %v249, 4
          %v251 = vrot.slane %v245, 5
          %v252 = vsel %vm248, %v250, %v251
          %v253 = vrot.slane %v251, 4
          %254 = vrot.lane.b32.xlu0 %v249, 6
          %v255 = vpop.permute.xlu0 %254
          %256 = vrot.lane.b32.xlu0 %v252, 6
          %v257 = vpop.permute.xlu0 %256
          %258 = vrot.lane.b32.xlu0 %v253, 6
          %v259 = vpop.permute.xlu0 %258
          %vm263 = vcmask 175155
          %264 = vst.msk [vmem:[#allocation2] sm:$0x8] %vm263, %v255
          %vm265 = vcmask 175152
          %266 = vst.msk [vmem:[#allocation2 + $0x8] sm:$0xf] %vm265, %v257
          %vm267 = vcmask 174128
          %268 = vst.msk [vmem:[#allocation2 + $0x10] sm:$0x7] %vm267, %v259
          %v270 = vunpack.c.l.b16 %v240
          %v271 = vunpack.c.h.b16 %v240
          %v272 = vpack.c.b16 %v270, %v270
          %v273 = vpack.c.b16 %v271, %v271
          %v274 = vrot.slane %v272, 5
          %v275 = vrot.slane %v274, 4
          %v276 = vrot.slane %v273, 5
          %v277 = vsel %vm248, %v275, %v276
          %v278 = vrot.slane %v276, 4
          %279 = vrot.lane.b32.xlu0 %v274, 6
          %v280 = vpop.permute.xlu0 %279
          %281 = vrot.lane.b32.xlu0 %v277, 6
          %v282 = vpop.permute.xlu0 %281
          %283 = vrot.lane.b32.xlu0 %v278, 6
          %v284 = vpop.permute.xlu0 %283
          %288 = vst.msk [vmem:[#allocation3] sm:$0x8] %vm263, %v280
          %289 = vst.msk [vmem:[#allocation3 + $0x8] sm:$0xf] %vm265, %v282
          %290 = vst.msk [vmem:[#allocation3 + $0x10] sm:$0x7] %vm267, %v284
          %v291 = vld [vmem:[#allocation2] sm:$0xff]
          %v292 = vld [vmem:[#allocation2 + $0x8] sm:$0xff]
          %v293 = vld [vmem:[#allocation2 + $0x10] sm:$0x11]
          %v294 = vld [vmem:[#allocation3] sm:$0xff]
          %v295 = vld [vmem:[#allocation3 + $0x8] sm:$0xff]
          %v296 = vld [vmem:[#allocation3 + $0x10] sm:$0x11]
          %v297 = vld [vmem:[#allocation5] sm:$0xf]
          %v298 = vld [vmem:[#allocation5 + $0x4] sm:$0xf]
          %v299 = vld [vmem:[#allocation5 + $0x8] sm:$0xf]
          %v300 = vld [vmem:[#allocation5 + $0xc] sm:$0xf]
          %v301 = vld [vmem:[#allocation5 + $0x10] sm:$0xf]
          %v302 = vld [vmem:[#allocation5 + $0x14] sm:$0xf]
          %v303 = vld [vmem:[#allocation5 + $0x18] sm:$0xf]
          %v304 = vld [vmem:[#allocation5 + $0x1c] sm:$0xf]
          %v305 = vld [vmem:[#allocation5 + $0x20] sm:$0xf]
          %v306 = vld [vmem:[#allocation5 + $0x24] sm:$0xf]
          %v307 = vld [vmem:[#allocation5 + $0x28] sm:$0xf]
          %v308 = vld [vmem:[#allocation5 + $0x2c] sm:$0xf]
          %v309 = vld [vmem:[#allocation5 + $0x30] sm:$0xf]
          %v310 = vld [vmem:[#allocation5 + $0x34] sm:$0xf]
          %v311 = vld [vmem:[#allocation5 + $0x38] sm:$0xf]
          %v312 = vld [vmem:[#allocation5 + $0x3c] sm:$0xf]
          %v313 = vld [vmem:[#allocation5 + $0x40] sm:$0xf]
          %v314 = vld [vmem:[#allocation5 + $0x44] sm:$0x3]
          %s315 = scalar_lea.vmem [#allocation5], 792
          %v316 = vld [vmem:[%s315] sm:$0xf]
          %v317 = vld [vmem:[%s315 + $0x4] sm:$0xf]
          %v318 = vld [vmem:[%s315 + $0x8] sm:$0xf]
          %v319 = vld [vmem:[%s315 + $0xc] sm:$0xf]
          %v320 = vld [vmem:[%s315 + $0x10] sm:$0xf]
          %v321 = vld [vmem:[%s315 + $0x14] sm:$0xf]
          %v322 = vld [vmem:[%s315 + $0x18] sm:$0xf]
          %v323 = vld [vmem:[%s315 + $0x1c] sm:$0xf]
          %v324 = vld [vmem:[%s315 + $0x20] sm:$0xf]
          %v325 = vld [vmem:[%s315 + $0x24] sm:$0xf]
          %v326 = vld [vmem:[%s315 + $0x28] sm:$0xf]
          %v327 = vld [vmem:[%s315 + $0x2c] sm:$0xf]
          %v328 = vld [vmem:[%s315 + $0x30] sm:$0xf]
          %v329 = vld [vmem:[%s315 + $0x34] sm:$0xf]
          %v330 = vld [vmem:[%s315 + $0x38] sm:$0xf]
          %v331 = vld [vmem:[%s315 + $0x3c] sm:$0xf]
          %v332 = vld [vmem:[%s315 + $0x40] sm:$0xf]
          %v333 = vld [vmem:[%s315 + $0x44] sm:$0x3]
          %v337 = vunpack.c.l.b16 %v291
          %v338 = vunpack.c.h.b16 %v291
          %v339 = vunpack.c.l.b16 %v292
          %v340 = vunpack.c.h.b16 %v292
          %v341 = vunpack.c.l.b16 %v293
          %v342 = vunpack.c.h.b16 %v293
          %v343 = vpack.c.b16 %v339, %v337
          %v344 = vpack.c.b16 %v340, %v338
          %v345 = vpack.c.b16 %v341, %v341
          %v346 = vpack.c.b16 %v342, %v342
          %vm347 = vsmask.f32 7424
          %v349 = vshrl.u32 %v343, 16
          %v351 = vshll.u32 %v343, 16
          %v353 = vrot.slane %v351, 1
          %v354 = vor.u32 %v349, %v353
          %v356 = vshll.u32 %v345, 16
          %v358 = vrot.slane %v356, 1
          %v359 = vsel %vm347, %v354, %v358
          %v361 = vshrl.u32 %v344, 16
          %v363 = vshll.u32 %v344, 16
          %v365 = vrot.slane %v363, 1
          %v366 = vor.u32 %v361, %v365
          %v368 = vshll.u32 %v346, 16
          %v370 = vrot.slane %v368, 1
          %v371 = vsel %vm347, %v366, %v370
          %v391 = vunpack.c.l.b16 %v316
          %v392 = vunpack.c.l.b16 %v317
          %v393 = vunpack.c.l.b16 %v318
          %v394 = vunpack.c.l.b16 %v319
          %v395 = vunpack.c.l.b16 %v320
          %v396 = vunpack.c.l.b16 %v321
          %v397 = vunpack.c.l.b16 %v322
          %v398 = vunpack.c.l.b16 %v323
          %v399 = vunpack.c.l.b16 %v324
          %v400 = vunpack.c.l.b16 %v325
          %v401 = vunpack.c.l.b16 %v326
          %v402 = vunpack.c.l.b16 %v327
          %v403 = vunpack.c.l.b16 %v328
          %v404 = vunpack.c.l.b16 %v329
          %v405 = vunpack.c.l.b16 %v330
          %v406 = vunpack.c.l.b16 %v331
          %v407 = vunpack.c.l.b16 %v332
          %v408 = vunpack.c.l.b16 %v333
          %v409 = vpack.c.b16 %v392, %v391
          %v410 = vpack.c.b16 %v394, %v393
          %v411 = vpack.c.b16 %v396, %v395
          %v412 = vpack.c.b16 %v398, %v397
          %v413 = vpack.c.b16 %v400, %v399
          %v414 = vpack.c.b16 %v402, %v401
          %v415 = vpack.c.b16 %v404, %v403
          %v416 = vpack.c.b16 %v406, %v405
          %v417 = vpack.c.b16 %v408, %v407
          %vm426 = vcmask 97280
          %v428 = vsel %vm426, %v371, 0
          %vm430 = vcmask 1045504
          %v432 = vsel %vm430, %v417, 0
          %434 = vmatprep.subr.bf16.mxu0 0
          %435 = vmatpush1.bf16.msra.mxu0 %v409
          %436 = vmatprep.subr.bf16.mxu0 0
          %437 = vmatpush1.bf16.msra.mxu0 %v410
          %438 = vmatprep.subr.bf16.mxu0 0
          %439 = vmatpush1.bf16.msra.mxu0 %v411
          %440 = vmatprep.subr.bf16.mxu0 0
          %441 = vmatpush1.bf16.msra.mxu0 %v412
          %442 = vmatprep.subr.bf16.mxu0 0
          %443 = vmatpush1.bf16.msra.mxu0 %v413
          %444 = vmatprep.subr.bf16.mxu0 0
          %445 = vmatpush1.bf16.msra.mxu0 %v414
          %446 = vmatprep.subr.bf16.mxu0 0
          %447 = vmatpush1.bf16.msra.mxu0 %v415
          %448 = vmatprep.subr.bf16.mxu0 0
          %449 = vmatpush1.bf16.msra.mxu0 %v416
          %450 = vmatprep.subr.bf16.mxu0 0
          %451 = vmatpush1.bf16.msra.mxu0 %v432
          %452 = vmatprep.subr.bf16.mxu0 0
          %453 = vmatpush1.bf16.msra.mxu0 0
          %454 = vmatprep.subr.bf16.mxu0 0
          %455 = vmatpush1.bf16.msra.mxu0 0
          %456 = vmatprep.subr.bf16.mxu0 0
          %457 = vmatpush1.bf16.msra.mxu0 0
          %458 = vmatprep.subr.bf16.mxu0 0
          %459 = vmatpush1.bf16.msra.mxu0 0
          %460 = vmatprep.subr.bf16.mxu0 0
          %461 = vmatpush1.bf16.msra.mxu0 0
          %462 = vmatprep.subr.bf16.mxu0 0
          %463 = vmatpush1.bf16.msra.mxu0 0
          %464 = vmatprep.subr.bf16.mxu0 0
          %465 = vmatpush1.bf16.msra.mxu0 0
          %466 = vmatprep.mubr.bf16.mxu0 %v428
          %467 = vmatmul.mubr.bf16.gmra.mrb[0].mxu0 %v359
          %v468 = vpop.f32.mrb[0].mxu0
          %v469 = vadd.f32 0.0, %v468
          %v470 = vpop.f32.mrb[0].mxu0
          %v471 = vpop.f32.mrb[0].mxu0
          %v472 = vadd.f32 0.0, %v471
          %v473 = vpop.f32.mrb[0].mxu0
          %474 = vdwg.mxu0
          %v493 = vunpack.c.l.b16 %v297
          %v494 = vunpack.c.l.b16 %v298
          %v495 = vunpack.c.l.b16 %v299
          %v496 = vunpack.c.l.b16 %v300
          %v497 = vunpack.c.l.b16 %v301
          %v498 = vunpack.c.l.b16 %v302
          %v499 = vunpack.c.l.b16 %v303
          %v500 = vunpack.c.l.b16 %v304
          %v501 = vunpack.c.l.b16 %v305
          %v502 = vunpack.c.l.b16 %v306
          %v503 = vunpack.c.l.b16 %v307
          %v504 = vunpack.c.l.b16 %v308
          %v505 = vunpack.c.l.b16 %v309
          %v506 = vunpack.c.l.b16 %v310
          %v507 = vunpack.c.l.b16 %v311
          %v508 = vunpack.c.l.b16 %v312
          %v509 = vunpack.c.l.b16 %v313
          %v510 = vunpack.c.l.b16 %v314
          %v511 = vpack.c.b16 %v494, %v493
          %v512 = vpack.c.b16 %v496, %v495
          %v513 = vpack.c.b16 %v498, %v497
          %v514 = vpack.c.b16 %v500, %v499
          %v515 = vpack.c.b16 %v502, %v501
          %v516 = vpack.c.b16 %v504, %v503
          %v517 = vpack.c.b16 %v506, %v505
          %v518 = vpack.c.b16 %v508, %v507
          %v519 = vpack.c.b16 %v510, %v509
          %v529 = vsel %vm430, %v519, 0
          %531 = vmatprep.subr.bf16.mxu0 0
          %532 = vmatpush1.bf16.msra.mxu0 %v511
          %533 = vmatprep.subr.bf16.mxu0 0
          %534 = vmatpush1.bf16.msra.mxu0 %v512
          %535 = vmatprep.subr.bf16.mxu0 0
          %536 = vmatpush1.bf16.msra.mxu0 %v513
          %537 = vmatprep.subr.bf16.mxu0 0
          %538 = vmatpush1.bf16.msra.mxu0 %v514
          %539 = vmatprep.subr.bf16.mxu0 0
          %540 = vmatpush1.bf16.msra.mxu0 %v515
          %541 = vmatprep.subr.bf16.mxu0 0
          %542 = vmatpush1.bf16.msra.mxu0 %v516
          %543 = vmatprep.subr.bf16.mxu0 0
          %544 = vmatpush1.bf16.msra.mxu0 %v517
          %545 = vmatprep.subr.bf16.mxu0 0
          %546 = vmatpush1.bf16.msra.mxu0 %v518
          %547 = vmatprep.subr.bf16.mxu0 0
          %548 = vmatpush1.bf16.msra.mxu0 %v529
          %549 = vmatprep.subr.bf16.mxu0 0
          %550 = vmatpush1.bf16.msra.mxu0 0
          %551 = vmatprep.subr.bf16.mxu0 0
          %552 = vmatpush1.bf16.msra.mxu0 0
          %553 = vmatprep.subr.bf16.mxu0 0
          %554 = vmatpush1.bf16.msra.mxu0 0
          %555 = vmatprep.subr.bf16.mxu0 0
          %556 = vmatpush1.bf16.msra.mxu0 0
          %557 = vmatprep.subr.bf16.mxu0 0
          %558 = vmatpush1.bf16.msra.mxu0 0
          %559 = vmatprep.subr.bf16.mxu0 0
          %560 = vmatpush1.bf16.msra.mxu0 0
          %561 = vmatprep.subr.bf16.mxu0 0
          %562 = vmatpush1.bf16.msra.mxu0 0
          %563 = vmatprep.mubr.bf16.mxu0 %v428
          %564 = vmatmul.mubr.bf16.gmra.mrb[0].mxu0 %v359
          %v565 = vpop.f32.mrb[0].mxu0
          %v566 = vadd.f32 %v469, %v565
          %v567 = vpop.f32.mrb[0].mxu0
          %v568 = vpop.f32.mrb[0].mxu0
          %v569 = vadd.f32 %v472, %v568
          %v570 = vpop.f32.mrb[0].mxu0
          %571 = vdwg.mxu0
          %v575 = vunpack.c.l.b16 %v294
          %v576 = vunpack.c.h.b16 %v294
          %v577 = vunpack.c.l.b16 %v295
          %v578 = vunpack.c.h.b16 %v295
          %v579 = vunpack.c.l.b16 %v296
          %v580 = vunpack.c.h.b16 %v296
          %v581 = vpack.c.b16 %v577, %v575
          %v582 = vpack.c.b16 %v578, %v576
          %v583 = vpack.c.b16 %v579, %v579
          %v584 = vpack.c.b16 %v580, %v580
          %v586 = vshrl.u32 %v581, 16
          %v588 = vshll.u32 %v581, 16
          %v590 = vrot.slane %v588, 1
          %v591 = vor.u32 %v586, %v590
          %v593 = vshll.u32 %v583, 16
          %v595 = vrot.slane %v593, 1
          %v596 = vsel %vm347, %v591, %v595
          %v598 = vshrl.u32 %v582, 16
          %v600 = vshll.u32 %v582, 16
          %v602 = vrot.slane %v600, 1
          %v603 = vor.u32 %v598, %v602
          %v605 = vshll.u32 %v584, 16
          %v607 = vrot.slane %v605, 1
          %v608 = vsel %vm347, %v603, %v607
          %v611 = vsel %vm426, %v608, 0
          %613 = vmatprep.subr.bf16.mxu0 0
          %614 = vmatpush1.bf16.msra.mxu0 %v511
          %615 = vmatprep.subr.bf16.mxu0 0
          %616 = vmatpush1.bf16.msra.mxu0 %v512
          %617 = vmatprep.subr.bf16.mxu0 0
          %618 = vmatpush1.bf16.msra.mxu0 %v513
          %619 = vmatprep.subr.bf16.mxu0 0
          %620 = vmatpush1.bf16.msra.mxu0 %v514
          %621 = vmatprep.subr.bf16.mxu0 0
          %622 = vmatpush1.bf16.msra.mxu0 %v515
          %623 = vmatprep.subr.bf16.mxu0 0
          %624 = vmatpush1.bf16.msra.mxu0 %v516
          %625 = vmatprep.subr.bf16.mxu0 0
          %626 = vmatpush1.bf16.msra.mxu0 %v517
          %627 = vmatprep.subr.bf16.mxu0 0
          %628 = vmatpush1.bf16.msra.mxu0 %v518
          %629 = vmatprep.subr.bf16.mxu0 0
          %630 = vmatpush1.bf16.msra.mxu0 %v529
          %631 = vmatprep.subr.bf16.mxu0 0
          %632 = vmatpush1.bf16.msra.mxu0 0
          %633 = vmatprep.subr.bf16.mxu0 0
          %634 = vmatpush1.bf16.msra.mxu0 0
          %635 = vmatprep.subr.bf16.mxu0 0
          %636 = vmatpush1.bf16.msra.mxu0 0
          %637 = vmatprep.subr.bf16.mxu0 0
          %638 = vmatpush1.bf16.msra.mxu0 0
          %639 = vmatprep.subr.bf16.mxu0 0
          %640 = vmatpush1.bf16.msra.mxu0 0
          %641 = vmatprep.subr.bf16.mxu0 0
          %642 = vmatpush1.bf16.msra.mxu0 0
          %643 = vmatprep.subr.bf16.mxu0 0
          %644 = vmatpush1.bf16.msra.mxu0 0
          %645 = vmatprep.mubr.bf16.mxu0 %v611
          %646 = vmatmul.mubr.bf16.gmra.mrb[0].mxu0 %v596
          %v647 = vpop.f32.mrb[0].mxu0
          %v648 = vadd.f32 0.0, %v647
          %v649 = vpop.f32.mrb[0].mxu0
          %v650 = vpop.f32.mrb[0].mxu0
          %v651 = vadd.f32 0.0, %v650
          %v652 = vpop.f32.mrb[0].mxu0
          %653 = vdwg.mxu0
          %v654 = vadd.f32 %v566, %v648
          %v655 = vadd.f32 %v569, %v651
          %v656 = vld [vmem:[#allocation2] sm:$0xee]
          %v657 = vld [vmem:[#allocation3] sm:$0xee]
          %s658 = scalar_lea.vmem [#allocation5], 72
          %v659 = vld [vmem:[%s658] sm:$0xf]
          %v660 = vld [vmem:[%s658 + $0x4] sm:$0xf]
          %v661 = vld [vmem:[%s658 + $0x8] sm:$0xf]
          %v662 = vld [vmem:[%s658 + $0xc] sm:$0xf]
          %v663 = vld [vmem:[%s658 + $0x10] sm:$0xf]
          %v664 = vld [vmem:[%s658 + $0x14] sm:$0xf]
          %v665 = vld [vmem:[%s658 + $0x18] sm:$0xf]
          %v666 = vld [vmem:[%s658 + $0x1c] sm:$0xf]
          %v667 = vld [vmem:[%s658 + $0x20] sm:$0xf]
          %v668 = vld [vmem:[%s658 + $0x24] sm:$0xf]
          %v669 = vld [vmem:[%s658 + $0x28] sm:$0xf]
          %v670 = vld [vmem:[%s658 + $0x2c] sm:$0xf]
          %v671 = vld [vmem:[%s658 + $0x30] sm:$0xf]
          %v672 = vld [vmem:[%s658 + $0x34] sm:$0xf]
          %v673 = vld [vmem:[%s658 + $0x38] sm:$0xf]
          %v674 = vld [vmem:[%s658 + $0x3c] sm:$0xf]
          %v675 = vld [vmem:[%s658 + $0x40] sm:$0xf]
          %v676 = vld [vmem:[%s658 + $0x44] sm:$0x3]
          %s677 = scalar_lea.vmem [#allocation5], 864
          %v678 = vld [vmem:[%s677] sm:$0xf]
          %v679 = vld [vmem:[%s677 + $0x4] sm:$0xf]
          %v680 = vld [vmem:[%s677 + $0x8] sm:$0xf]
          %v681 = vld [vmem:[%s677 + $0xc] sm:$0xf]
          %v682 = vld [vmem:[%s677 + $0x10] sm:$0xf]
          %v683 = vld [vmem:[%s677 + $0x14] sm:$0xf]
          %v684 = vld [vmem:[%s677 + $0x18] sm:$0xf]
          %v685 = vld [vmem:[%s677 + $0x1c] sm:$0xf]
          %v686 = vld [vmem:[%s677 + $0x20] sm:$0xf]
          %v687 = vld [vmem:[%s677 + $0x24] sm:$0xf]
          %v688 = vld [vmem:[%s677 + $0x28] sm:$0xf]
          %v689 = vld [vmem:[%s677 + $0x2c] sm:$0xf]
          %v690 = vld [vmem:[%s677 + $0x30] sm:$0xf]
          %v691 = vld [vmem:[%s677 + $0x34] sm:$0xf]
          %v692 = vld [vmem:[%s677 + $0x38] sm:$0xf]
          %v693 = vld [vmem:[%s677 + $0x3c] sm:$0xf]
          %v694 = vld [vmem:[%s677 + $0x40] sm:$0xf]
          %v695 = vld [vmem:[%s677 + $0x44] sm:$0x3]
          %v697 = vunpack.c.l.b16 %v656
          %v698 = vunpack.c.h.b16 %v656
          %v699 = vpack.c.b16 %v339, %v697
          %v700 = vpack.c.b16 %v340, %v698
          %vm701 = vcmask 1046528
          %v702 = vrot.slane %v699, 1
          %v703 = vrot.slane %v345, 1
          %v704 = vsel %vm701, %v702, %v703
          %v705 = vrot.slane %v700, 1
          %v706 = vrot.slane %v346, 1
          %v707 = vsel %vm701, %v705, %v706
          %v727 = vunpack.c.l.b16 %v659
          %v728 = vunpack.c.l.b16 %v660
          %v729 = vunpack.c.l.b16 %v661
          %v730 = vunpack.c.l.b16 %v662
          %v731 = vunpack.c.l.b16 %v663
          %v732 = vunpack.c.l.b16 %v664
          %v733 = vunpack.c.l.b16 %v665
          %v734 = vunpack.c.l.b16 %v666
          %v735 = vunpack.c.l.b16 %v667
          %v736 = vunpack.c.l.b16 %v668
          %v737 = vunpack.c.l.b16 %v669
          %v738 = vunpack.c.l.b16 %v670
          %v739 = vunpack.c.l.b16 %v671
          %v740 = vunpack.c.l.b16 %v672
          %v741 = vunpack.c.l.b16 %v673
          %v742 = vunpack.c.l.b16 %v674
          %v743 = vunpack.c.l.b16 %v675
          %v744 = vunpack.c.l.b16 %v676
          %v745 = vpack.c.b16 %v728, %v727
          %v746 = vpack.c.b16 %v730, %v729
          %v747 = vpack.c.b16 %v732, %v731
          %v748 = vpack.c.b16 %v734, %v733
          %v749 = vpack.c.b16 %v736, %v735
          %v750 = vpack.c.b16 %v738, %v737
          %v751 = vpack.c.b16 %v740, %v739
          %v752 = vpack.c.b16 %v742, %v741
          %v753 = vpack.c.b16 %v744, %v743
          %v763 = vsel %vm426, %v707, 0
          %v766 = vsel %vm430, %v753, 0
          %768 = vmatprep.subr.bf16.mxu0 0
          %769 = vmatpush1.bf16.msra.mxu0 %v745
          %770 = vmatprep.subr.bf16.mxu0 0
          %771 = vmatpush1.bf16.msra.mxu0 %v746
          %772 = vmatprep.subr.bf16.mxu0 0
          %773 = vmatpush1.bf16.msra.mxu0 %v747
          %774 = vmatprep.subr.bf16.mxu0 0
          %775 = vmatpush1.bf16.msra.mxu0 %v748
          %776 = vmatprep.subr.bf16.mxu0 0
          %777 = vmatpush1.bf16.msra.mxu0 %v749
          %778 = vmatprep.subr.bf16.mxu0 0
          %779 = vmatpush1.bf16.msra.mxu0 %v750
          %780 = vmatprep.subr.bf16.mxu0 0
          %781 = vmatpush1.bf16.msra.mxu0 %v751
          %782 = vmatprep.subr.bf16.mxu0 0
          %783 = vmatpush1.bf16.msra.mxu0 %v752
          %784 = vmatprep.subr.bf16.mxu0 0
          %785 = vmatpush1.bf16.msra.mxu0 %v766
          %786 = vmatprep.subr.bf16.mxu0 0
          %787 = vmatpush1.bf16.msra.mxu0 0
          %788 = vmatprep.subr.bf16.mxu0 0
          %789 = vmatpush1.bf16.msra.mxu0 0
          %790 = vmatprep.subr.bf16.mxu0 0
          %791 = vmatpush1.bf16.msra.mxu0 0
          %792 = vmatprep.subr.bf16.mxu0 0
          %793 = vmatpush1.bf16.msra.mxu0 0
          %794 = vmatprep.subr.bf16.mxu0 0
          %795 = vmatpush1.bf16.msra.mxu0 0
          %796 = vmatprep.subr.bf16.mxu0 0
          %797 = vmatpush1.bf16.msra.mxu0 0
          %798 = vmatprep.subr.bf16.mxu0 0
          %799 = vmatpush1.bf16.msra.mxu0 0
          %800 = vmatprep.mubr.bf16.mxu0 %v763
          %801 = vmatmul.mubr.bf16.gmra.mrb[0].mxu0 %v704
          %v802 = vpop.f32.mrb[0].mxu0
          %v803 = vadd.f32 0.0, %v802
          %v804 = vpop.f32.mrb[0].mxu0
          %v805 = vpop.f32.mrb[0].mxu0
          %v806 = vadd.f32 0.0, %v805
          %v807 = vpop.f32.mrb[0].mxu0
          %808 = vdwg.mxu0
          %v809 = vadd.f32 %v654, %v803
          %v810 = vadd.f32 %v655, %v806
          %v829 = vunpack.c.l.b16 %v678
          %v830 = vunpack.c.l.b16 %v679
          %v831 = vunpack.c.l.b16 %v680
          %v832 = vunpack.c.l.b16 %v681
          %v833 = vunpack.c.l.b16 %v682
          %v834 = vunpack.c.l.b16 %v683
          %v835 = vunpack.c.l.b16 %v684
          %v836 = vunpack.c.l.b16 %v685
          %v837 = vunpack.c.l.b16 %v686
          %v838 = vunpack.c.l.b16 %v687
          %v839 = vunpack.c.l.b16 %v688
          %v840 = vunpack.c.l.b16 %v689
          %v841 = vunpack.c.l.b16 %v690
          %v842 = vunpack.c.l.b16 %v691
          %v843 = vunpack.c.l.b16 %v692
          %v844 = vunpack.c.l.b16 %v693
          %v845 = vunpack.c.l.b16 %v694
          %v846 = vunpack.c.l.b16 %v695
          %v847 = vpack.c.b16 %v830, %v829
          %v848 = vpack.c.b16 %v832, %v831
          %v849 = vpack.c.b16 %v834, %v833
          %v850 = vpack.c.b16 %v836, %v835
          %v851 = vpack.c.b16 %v838, %v837
          %v852 = vpack.c.b16 %v840, %v839
          %v853 = vpack.c.b16 %v842, %v841
          %v854 = vpack.c.b16 %v844, %v843
          %v855 = vpack.c.b16 %v846, %v845
          %v865 = vsel %vm430, %v855, 0
          %867 = vmatprep.subr.bf16.mxu0 0
          %868 = vmatpush1.bf16.msra.mxu0 %v847
          %869 = vmatprep.subr.bf16.mxu0 0
          %870 = vmatpush1.bf16.msra.mxu0 %v848
          %871 = vmatprep.subr.bf16.mxu0 0
          %872 = vmatpush1.bf16.msra.mxu0 %v849
          %873 = vmatprep.subr.bf16.mxu0 0
          %874 = vmatpush1.bf16.msra.mxu0 %v850
          %875 = vmatprep.subr.bf16.mxu0 0
          %876 = vmatpush1.bf16.msra.mxu0 %v851
          %877 = vmatprep.subr.bf16.mxu0 0
          %878 = vmatpush1.bf16.msra.mxu0 %v852
          %879 = vmatprep.subr.bf16.mxu0 0
          %880 = vmatpush1.bf16.msra.mxu0 %v853
          %881 = vmatprep.subr.bf16.mxu0 0
          %882 = vmatpush1.bf16.msra.mxu0 %v854
          %883 = vmatprep.subr.bf16.mxu0 0
          %884 = vmatpush1.bf16.msra.mxu0 %v865
          %885 = vmatprep.subr.bf16.mxu0 0
          %886 = vmatpush1.bf16.msra.mxu0 0
          %887 = vmatprep.subr.bf16.mxu0 0
          %888 = vmatpush1.bf16.msra.mxu0 0
          %889 = vmatprep.subr.bf16.mxu0 0
          %890 = vmatpush1.bf16.msra.mxu0 0
          %891 = vmatprep.subr.bf16.mxu0 0
          %892 = vmatpush1.bf16.msra.mxu0 0
          %893 = vmatprep.subr.bf16.mxu0 0
          %894 = vmatpush1.bf16.msra.mxu0 0
          %895 = vmatprep.subr.bf16.mxu0 0
          %896 = vmatpush1.bf16.msra.mxu0 0
          %897 = vmatprep.subr.bf16.mxu0 0
          %898 = vmatpush1.bf16.msra.mxu0 0
          %899 = vmatprep.mubr.bf16.mxu0 %v763
          %900 = vmatmul.mubr.bf16.gmra.mrb[0].mxu0 %v704
          %v901 = vpop.f32.mrb[0].mxu0
          %v902 = vadd.f32 0.0, %v901
          %v903 = vpop.f32.mrb[0].mxu0
          %v904 = vpop.f32.mrb[0].mxu0
          %v905 = vadd.f32 0.0, %v904
          %v906 = vpop.f32.mrb[0].mxu0
          %907 = vdwg.mxu0
          %v908 = vadd.f32 %v809, %v902
          %v909 = vadd.f32 %v810, %v905
          %v911 = vunpack.c.l.b16 %v657
          %v912 = vunpack.c.h.b16 %v657
          %v913 = vpack.c.b16 %v577, %v911
          %v914 = vpack.c.b16 %v578, %v912
          %v915 = vrot.slane %v913, 1
          %v916 = vrot.slane %v583, 1
          %v917 = vsel %vm701, %v915, %v916
          %v918 = vrot.slane %v914, 1
          %v919 = vrot.slane %v584, 1
          %v920 = vsel %vm701, %v918, %v919
          %v923 = vsel %vm426, %v920, 0
          %925 = vmatprep.subr.bf16.mxu0 0
          %926 = vmatpush1.bf16.msra.mxu0 %v745
          %927 = vmatprep.subr.bf16.mxu0 0
          %928 = vmatpush1.bf16.msra.mxu0 %v746
          %929 = vmatprep.subr.bf16.mxu0 0
          %930 = vmatpush1.bf16.msra.mxu0 %v747
          %931 = vmatprep.subr.bf16.mxu0 0
          %932 = vmatpush1.bf16.msra.mxu0 %v748
          %933 = vmatprep.subr.bf16.mxu0 0
          %934 = vmatpush1.bf16.msra.mxu0 %v749
          %935 = vmatprep.subr.bf16.mxu0 0
          %936 = vmatpush1.bf16.msra.mxu0 %v750
          %937 = vmatprep.subr.bf16.mxu0 0
          %938 = vmatpush1.bf16.msra.mxu0 %v751
          %939 = vmatprep.subr.bf16.mxu0 0
          %940 = vmatpush1.bf16.msra.mxu0 %v752
          %941 = vmatprep.subr.bf16.mxu0 0
          %942 = vmatpush1.bf16.msra.mxu0 %v766
          %943 = vmatprep.subr.bf16.mxu0 0
          %944 = vmatpush1.bf16.msra.mxu0 0
          %945 = vmatprep.subr.bf16.mxu0 0
          %946 = vmatpush1.bf16.msra.mxu0 0
          %947 = vmatprep.subr.bf16.mxu0 0
          %948 = vmatpush1.bf16.msra.mxu0 0
          %949 = vmatprep.subr.bf16.mxu0 0
          %950 = vmatpush1.bf16.msra.mxu0 0
          %951 = vmatprep.subr.bf16.mxu0 0
          %952 = vmatpush1.bf16.msra.mxu0 0
          %953 = vmatprep.subr.bf16.mxu0 0
          %954 = vmatpush1.bf16.msra.mxu0 0
          %955 = vmatprep.subr.bf16.mxu0 0
          %956 = vmatpush1.bf16.msra.mxu0 0
          %957 = vmatprep.mubr.bf16.mxu0 %v923
          %958 = vmatmul.mubr.bf16.gmra.mrb[0].mxu0 %v917
          %v959 = vpop.f32.mrb[0].mxu0
          %v960 = vadd.f32 0.0, %v959
          %v961 = vpop.f32.mrb[0].mxu0
          %v962 = vpop.f32.mrb[0].mxu0
          %v963 = vadd.f32 0.0, %v962
          %v964 = vpop.f32.mrb[0].mxu0
          %965 = vdwg.mxu0
          %v966 = vadd.f32 %v908, %v960
          %v967 = vadd.f32 %v909, %v963
          %v968 = vld [vmem:[#allocation2 + $0x10] sm:$0x33]
          %v969 = vld [vmem:[#allocation3 + $0x10] sm:$0x33]
          %s970 = scalar_lea.vmem [#allocation5], 144
          %v971 = vld [vmem:[%s970] sm:$0xf]
          %v972 = vld [vmem:[%s970 + $0x4] sm:$0xf]
          %v973 = vld [vmem:[%s970 + $0x8] sm:$0xf]
          %v974 = vld [vmem:[%s970 + $0xc] sm:$0xf]
          %v975 = vld [vmem:[%s970 + $0x10] sm:$0xf]
          %v976 = vld [vmem:[%s970 + $0x14] sm:$0xf]
          %v977 = vld [vmem:[%s970 + $0x18] sm:$0xf]
          %v978 = vld [vmem:[%s970 + $0x1c] sm:$0xf]
          %v979 = vld [vmem:[%s970 + $0x20] sm:$0xf]
          %v980 = vld [vmem:[%s970 + $0x24] sm:$0xf]
          %v981 = vld [vmem:[%s970 + $0x28] sm:$0xf]
          %v982 = vld [vmem:[%s970 + $0x2c] sm:$0xf]
          %v983 = vld [vmem:[%s970 + $0x30] sm:$0xf]
          %v984 = vld [vmem:[%s970 + $0x34] sm:$0xf]
          %v985 = vld [vmem:[%s970 + $0x38] sm:$0xf]
          %v986 = vld [vmem:[%s970 + $0x3c] sm:$0xf]
          %v987 = vld [vmem:[%s970 + $0x40] sm:$0xf]
          %v988 = vld [vmem:[%s970 + $0x44] sm:$0x3]
          %s989 = scalar_lea.vmem [#allocation5], 936
          %v990 = vld [vmem:[%s989] sm:$0xf]
          %v991 = vld [vmem:[%s989 + $0x4] sm:$0xf]
          %v992 = vld [vmem:[%s989 + $0x8] sm:$0xf]
          %v993 = vld [vmem:[%s989 + $0xc] sm:$0xf]
          %v994 = vld [vmem:[%s989 + $0x10] sm:$0xf]
          %v995 = vld [vmem:[%s989 + $0x14] sm:$0xf]
          %v996 = vld [vmem:[%s989 + $0x18] sm:$0xf]
          %v997 = vld [vmem:[%s989 + $0x1c] sm:$0xf]
          %v998 = vld [vmem:[%s989 + $0x20] sm:$0xf]
          %v999 = vld [vmem:[%s989 + $0x24] sm:$0xf]
          %v1000 = vld [vmem:[%s989 + $0x28] sm:$0xf]
          %v1001 = vld [vmem:[%s989 + $0x2c] sm:$0xf]
          %v1002 = vld [vmem:[%s989 + $0x30] sm:$0xf]
          %v1003 = vld [vmem:[%s989 + $0x34] sm:$0xf]
          %v1004 = vld [vmem:[%s989 + $0x38] sm:$0xf]
          %v1005 = vld [vmem:[%s989 + $0x3c] sm:$0xf]
          %v1006 = vld [vmem:[%s989 + $0x40] sm:$0xf]
          %v1007 = vld [vmem:[%s989 + $0x44] sm:$0x3]
          %v1009 = vunpack.c.l.b16 %v968
          %v1010 = vunpack.c.h.b16 %v968
          %v1011 = vpack.c.b16 %v1009, %v1009
          %v1012 = vpack.c.b16 %v1010, %v1010
          %vm1013 = vsmask.f32 6400
          %v1015 = vshrl.u32 %v699, 16
          %v1017 = vrot.slane %v1015, 1
          %v1018 = vshll.u32 %v699, 16
          %v1020 = vrot.slane %v1018, 2
          %v1021 = vor.u32 %v1017, %v1020
          %v1023 = vshrl.u32 %v1011, 16
          %v1025 = vrot.slane %v1023, 1
          %v1026 = vshll.u32 %v1011, 16
          %v1028 = vrot.slane %v1026, 2
          %v1029 = vor.u32 %v1025, %v1028
          %v1030 = vsel %vm1013, %v1021, %v1029
          %v1032 = vshrl.u32 %v700, 16
          %v1034 = vrot.slane %v1032, 1
          %v1035 = vshll.u32 %v700, 16
          %v1037 = vrot.slane %v1035, 2
          %v1038 = vor.u32 %v1034, %v1037
          %v1040 = vshrl.u32 %v1012, 16
          %v1042 = vrot.slane %v1040, 1
          %v1043 = vshll.u32 %v1012, 16
          %v1045 = vrot.slane %v1043, 2
          %v1046 = vor.u32 %v1042, %v1045
          %v1047 = vsel %vm1013, %v1038, %v1046
          %v1067 = vunpack.c.l.b16 %v971
          %v1068 = vunpack.c.l.b16 %v972
          %v1069 = vunpack.c.l.b16 %v973
          %v1070 = vunpack.c.l.b16 %v974
          %v1071 = vunpack.c.l.b16 %v975
          %v1072 = vunpack.c.l.b16 %v976
          %v1073 = vunpack.c.l.b16 %v977
          %v1074 = vunpack.c.l.b16 %v978
          %v1075 = vunpack.c.l.b16 %v979
          %v1076 = vunpack.c.l.b16 %v980
          %v1077 = vunpack.c.l.b16 %v981
          %v1078 = vunpack.c.l.b16 %v982
          %v1079 = vunpack.c.l.b16 %v983
          %v1080 = vunpack.c.l.b16 %v984
          %v1081 = vunpack.c.l.b16 %v985
          %v1082 = vunpack.c.l.b16 %v986
          %v1083 = vunpack.c.l.b16 %v987
          %v1084 = vunpack.c.l.b16 %v988
          %v1085 = vpack.c.b16 %v1068, %v1067
          %v1086 = vpack.c.b16 %v1070, %v1069
          %v1087 = vpack.c.b16 %v1072, %v1071
          %v1088 = vpack.c.b16 %v1074, %v1073
          %v1089 = vpack.c.b16 %v1076, %v1075
          %v1090 = vpack.c.b16 %v1078, %v1077
          %v1091 = vpack.c.b16 %v1080, %v1079
          %v1092 = vpack.c.b16 %v1082, %v1081
          %v1093 = vpack.c.b16 %v1084, %v1083
          %v1103 = vsel %vm426, %v1047, 0
          %v1106 = vsel %vm430, %v1093, 0
          %1108 = vmatprep.subr.bf16.mxu0 0
          %1109 = vmatpush1.bf16.msra.mxu0 %v1085
          %1110 = vmatprep.subr.bf16.mxu0 0
          %1111 = vmatpush1.bf16.msra.mxu0 %v1086
          %1112 = vmatprep.subr.bf16.mxu0 0
          %1113 = vmatpush1.bf16.msra.mxu0 %v1087
          %1114 = vmatprep.subr.bf16.mxu0 0
          %1115 = vmatpush1.bf16.msra.mxu0 %v1088
          %1116 = vmatprep.subr.bf16.mxu0 0
          %1117 = vmatpush1.bf16.msra.mxu0 %v1089
          %1118 = vmatprep.subr.bf16.mxu0 0
          %1119 = vmatpush1.bf16.msra.mxu0 %v1090
          %1120 = vmatprep.subr.bf16.mxu0 0
          %1121 = vmatpush1.bf16.msra.mxu0 %v1091
          %1122 = vmatprep.subr.bf16.mxu0 0
          %1123 = vmatpush1.bf16.msra.mxu0 %v1092
          %1124 = vmatprep.subr.bf16.mxu0 0
          %1125 = vmatpush1.bf16.msra.mxu0 %v1106
          %1126 = vmatprep.subr.bf16.mxu0 0
          %1127 = vmatpush1.bf16.msra.mxu0 0
          %1128 = vmatprep.subr.bf16.mxu0 0
          %1129 = vmatpush1.bf16.msra.mxu0 0
          %1130 = vmatprep.subr.bf16.mxu0 0
          %1131 = vmatpush1.bf16.msra.mxu0 0
          %1132 = vmatprep.subr.bf16.mxu0 0
          %1133 = vmatpush1.bf16.msra.mxu0 0
          %1134 = vmatprep.subr.bf16.mxu0 0
          %1135 = vmatpush1.bf16.msra.mxu0 0
          %1136 = vmatprep.subr.bf16.mxu0 0
          %1137 = vmatpush1.bf16.msra.mxu0 0
          %1138 = vmatprep.subr.bf16.mxu0 0
          %1139 = vmatpush1.bf16.msra.mxu0 0
          %1140 = vmatprep.mubr.bf16.mxu0 %v1103
          %1141 = vmatmul.mubr.bf16.gmra.mrb[0].mxu0 %v1030
          %v1142 = vpop.f32.mrb[0].mxu0
          %v1143 = vadd.f32 0.0, %v1142
          %v1144 = vpop.f32.mrb[0].mxu0
          %v1145 = vpop.f32.mrb[0].mxu0
          %v1146 = vadd.f32 0.0, %v1145
          %v1147 = vpop.f32.mrb[0].mxu0
          %1148 = vdwg.mxu0
          %v1149 = vadd.f32 %v966, %v1143
          %v1150 = vadd.f32 %v967, %v1146
          %v1169 = vunpack.c.l.b16 %v990
          %v1170 = vunpack.c.l.b16 %v991
          %v1171 = vunpack.c.l.b16 %v992
          %v1172 = vunpack.c.l.b16 %v993
          %v1173 = vunpack.c.l.b16 %v994
          %v1174 = vunpack.c.l.b16 %v995
          %v1175 = vunpack.c.l.b16 %v996
          %v1176 = vunpack.c.l.b16 %v997
          %v1177 = vunpack.c.l.b16 %v998
          %v1178 = vunpack.c.l.b16 %v999
          %v1179 = vunpack.c.l.b16 %v1000
          %v1180 = vunpack.c.l.b16 %v1001
          %v1181 = vunpack.c.l.b16 %v1002
          %v1182 = vunpack.c.l.b16 %v1003
          %v1183 = vunpack.c.l.b16 %v1004
          %v1184 = vunpack.c.l.b16 %v1005
          %v1185 = vunpack.c.l.b16 %v1006
          %v1186 = vunpack.c.l.b16 %v1007
          %v1187 = vpack.c.b16 %v1170, %v1169
          %v1188 = vpack.c.b16 %v1172, %v1171
          %v1189 = vpack.c.b16 %v1174, %v1173
          %v1190 = vpack.c.b16 %v1176, %v1175
          %v1191 = vpack.c.b16 %v1178, %v1177
          %v1192 = vpack.c.b16 %v1180, %v1179
          %v1193 = vpack.c.b16 %v1182, %v1181
          %v1194 = vpack.c.b16 %v1184, %v1183
          %v1195 = vpack.c.b16 %v1186, %v1185
          %v1205 = vsel %vm430, %v1195, 0
          %1207 = vmatprep.subr.bf16.mxu0 0
          %1208 = vmatpush1.bf16.msra.mxu0 %v1187
          %1209 = vmatprep.subr.bf16.mxu0 0
          %1210 = vmatpush1.bf16.msra.mxu0 %v1188
          %1211 = vmatprep.subr.bf16.mxu0 0
          %1212 = vmatpush1.bf16.msra.mxu0 %v1189
          %1213 = vmatprep.subr.bf16.mxu0 0
          %1214 = vmatpush1.bf16.msra.mxu0 %v1190
          %1215 = vmatprep.subr.bf16.mxu0 0
          %1216 = vmatpush1.bf16.msra.mxu0 %v1191
          %1217 = vmatprep.subr.bf16.mxu0 0
          %1218 = vmatpush1.bf16.msra.mxu0 %v1192
          %1219 = vmatprep.subr.bf16.mxu0 0
          %1220 = vmatpush1.bf16.msra.mxu0 %v1193
          %1221 = vmatprep.subr.bf16.mxu0 0
          %1222 = vmatpush1.bf16.msra.mxu0 %v1194
          %1223 = vmatprep.subr.bf16.mxu0 0
          %1224 = vmatpush1.bf16.msra.mxu0 %v1205
          %1225 = vmatprep.subr.bf16.mxu0 0
          %1226 = vmatpush1.bf16.msra.mxu0 0
          %1227 = vmatprep.subr.bf16.mxu0 0
          %1228 = vmatpush1.bf16.msra.mxu0 0
          %1229 = vmatprep.subr.bf16.mxu0 0
          %1230 = vmatpush1.bf16.msra.mxu0 0
          %1231 = vmatprep.subr.bf16.mxu0 0
          %1232 = vmatpush1.bf16.msra.mxu0 0
          %1233 = vmatprep.subr.bf16.mxu0 0
          %1234 = vmatpush1.bf16.msra.mxu0 0
          %1235 = vmatprep.subr.bf16.mxu0 0
          %1236 = vmatpush1.bf16.msra.mxu0 0
          %1237 = vmatprep.subr.bf16.mxu0 0
          %1238 = vmatpush1.bf16.msra.mxu0 0
          %1239 = vmatprep.mubr.bf16.mxu0 %v1103
          %1240 = vmatmul.mubr.bf16.gmra.mrb[0].mxu0 %v1030
          %v1241 = vpop.f32.mrb[0].mxu0
          %v1242 = vadd.f32 0.0, %v1241
          %v1243 = vpop.f32.mrb[0].mxu0
          %v1244 = vpop.f32.mrb[0].mxu0
          %v1245 = vadd.f32 0.0, %v1244
          %v1246 = vpop.f32.mrb[0].mxu0
          %1247 = vdwg.mxu0
          %v1248 = vadd.f32 %v1149, %v1242
          %v1249 = vadd.f32 %v1150, %v1245
          %v1251 = vunpack.c.l.b16 %v969
          %v1252 = vunpack.c.h.b16 %v969
          %v1253 = vpack.c.b16 %v1251, %v1251
          %v1254 = vpack.c.b16 %v1252, %v1252
          %v1256 = vshrl.u32 %v913, 16
          %v1258 = vrot.slane %v1256, 1
          %v1259 = vshll.u32 %v913, 16
          %v1261 = vrot.slane %v1259, 2
          %v1262 = vor.u32 %v1258, %v1261
          %v1264 = vshrl.u32 %v1253, 16
          %v1266 = vrot.slane %v1264, 1
          %v1267 = vshll.u32 %v1253, 16
          %v1269 = vrot.slane %v1267, 2
          %v1270 = vor.u32 %v1266, %v1269
          %v1271 = vsel %vm1013, %v1262, %v1270
          %v1273 = vshrl.u32 %v914, 16
          %v1275 = vrot.slane %v1273, 1
          %v1276 = vshll.u32 %v914, 16
          %v1278 = vrot.slane %v1276, 2
          %v1279 = vor.u32 %v1275, %v1278
          %v1281 = vshrl.u32 %v1254, 16
          %v1283 = vrot.slane %v1281, 1
          %v1284 = vshll.u32 %v1254, 16
          %v1286 = vrot.slane %v1284, 2
          %v1287 = vor.u32 %v1283, %v1286
          %v1288 = vsel %vm1013, %v1279, %v1287
          %v1291 = vsel %vm426, %v1288, 0
          %1293 = vmatprep.subr.bf16.mxu0 0
          %1294 = vmatpush1.bf16.msra.mxu0 %v1085
          %1295 = vmatprep.subr.bf16.mxu0 0
          %1296 = vmatpush1.bf16.msra.mxu0 %v1086
          %1297 = vmatprep.subr.bf16.mxu0 0
          %1298 = vmatpush1.bf16.msra.mxu0 %v1087
          %1299 = vmatprep.subr.bf16.mxu0 0
          %1300 = vmatpush1.bf16.msra.mxu0 %v1088
          %1301 = vmatprep.subr.bf16.mxu0 0
          %1302 = vmatpush1.bf16.msra.mxu0 %v1089
          %1303 = vmatprep.subr.bf16.mxu0 0
          %1304 = vmatpush1.bf16.msra.mxu0 %v1090
          %1305 = vmatprep.subr.bf16.mxu0 0
          %1306 = vmatpush1.bf16.msra.mxu0 %v1091
          %1307 = vmatprep.subr.bf16.mxu0 0
          %1308 = vmatpush1.bf16.msra.mxu0 %v1092
          %1309 = vmatprep.subr.bf16.mxu0 0
          %1310 = vmatpush1.bf16.msra.mxu0 %v1106
          %1311 = vmatprep.subr.bf16.mxu0 0
          %1312 = vmatpush1.bf16.msra.mxu0 0
          %1313 = vmatprep.subr.bf16.mxu0 0
          %1314 = vmatpush1.bf16.msra.mxu0 0
          %1315 = vmatprep.subr.bf16.mxu0 0
          %1316 = vmatpush1.bf16.msra.mxu0 0
          %1317 = vmatprep.subr.bf16.mxu0 0
          %1318 = vmatpush1.bf16.msra.mxu0 0
          %1319 = vmatprep.subr.bf16.mxu0 0
          %1320 = vmatpush1.bf16.msra.mxu0 0
          %1321 = vmatprep.subr.bf16.mxu0 0
          %1322 = vmatpush1.bf16.msra.mxu0 0
          %1323 = vmatprep.subr.bf16.mxu0 0
          %1324 = vmatpush1.bf16.msra.mxu0 0
          %1325 = vmatprep.mubr.bf16.mxu0 %v1291
          %1326 = vmatmul.mubr.bf16.gmra.mrb[0].mxu0 %v1271
          %v1327 = vpop.f32.mrb[0].mxu0
          %v1328 = vadd.f32 0.0, %v1327
          %v1329 = vpop.f32.mrb[0].mxu0
          %v1330 = vpop.f32.mrb[0].mxu0
          %v1331 = vadd.f32 0.0, %v1330
          %v1332 = vpop.f32.mrb[0].mxu0
          %1333 = vdwg.mxu0
          %v1334 = vadd.f32 %v1248, %v1328
          %v1335 = vadd.f32 %v1249, %v1331
          %v1336 = vld [vmem:[#allocation2] sm:$0xcc]
          %v1337 = vld [vmem:[#allocation3] sm:$0xcc]
          %s1338 = scalar_lea.vmem [#allocation5], 216
          %v1339 = vld [vmem:[%s1338] sm:$0xf]
          %v1340 = vld [vmem:[%s1338 + $0x4] sm:$0xf]
          %v1341 = vld [vmem:[%s1338 + $0x8] sm:$0xf]
          %v1342 = vld [vmem:[%s1338 + $0xc] sm:$0xf]
          %v1343 = vld [vmem:[%s1338 + $0x10] sm:$0xf]
          %v1344 = vld [vmem:[%s1338 + $0x14] sm:$0xf]
          %v1345 = vld [vmem:[%s1338 + $0x18] sm:$0xf]
          %v1346 = vld [vmem:[%s1338 + $0x1c] sm:$0xf]
          %v1347 = vld [vmem:[%s1338 + $0x20] sm:$0xf]
          %v1348 = vld [vmem:[%s1338 + $0x24] sm:$0xf]
          %v1349 = vld [vmem:[%s1338 + $0x28] sm:$0xf]
          %v1350 = vld [vmem:[%s1338 + $0x2c] sm:$0xf]
          %v1351 = vld [vmem:[%s1338 + $0x30] sm:$0xf]
          %v1352 = vld [vmem:[%s1338 + $0x34] sm:$0xf]
          %v1353 = vld [vmem:[%s1338 + $0x38] sm:$0xf]
          %v1354 = vld [vmem:[%s1338 + $0x3c] sm:$0xf]
          %v1355 = vld [vmem:[%s1338 + $0x40] sm:$0xf]
          %v1356 = vld [vmem:[%s1338 + $0x44] sm:$0x3]
          %s1357 = scalar_lea.vmem [#allocation5], 1008
          %v1358 = vld [vmem:[%s1357] sm:$0xf]
          %v1359 = vld [vmem:[%s1357 + $0x4] sm:$0xf]
          %v1360 = vld [vmem:[%s1357 + $0x8] sm:$0xf]
          %v1361 = vld [vmem:[%s1357 + $0xc] sm:$0xf]
          %v1362 = vld [vmem:[%s1357 + $0x10] sm:$0xf]
          %v1363 = vld [vmem:[%s1357 + $0x14] sm:$0xf]
          %v1364 = vld [vmem:[%s1357 + $0x18] sm:$0xf]
          %v1365 = vld [vmem:[%s1357 + $0x1c] sm:$0xf]
          %v1366 = vld [vmem:[%s1357 + $0x20] sm:$0xf]
          %v1367 = vld [vmem:[%s1357 + $0x24] sm:$0xf]
          %v1368 = vld [vmem:[%s1357 + $0x28] sm:$0xf]
          %v1369 = vld [vmem:[%s1357 + $0x2c] sm:$0xf]
          %v1370 = vld [vmem:[%s1357 + $0x30] sm:$0xf]
          %v1371 = vld [vmem:[%s1357 + $0x34] sm:$0xf]
          %v1372 = vld [vmem:[%s1357 + $0x38] sm:$0xf]
          %v1373 = vld [vmem:[%s1357 + $0x3c] sm:$0xf]
          %v1374 = vld [vmem:[%s1357 + $0x40] sm:$0xf]
          %v1375 = vld [vmem:[%s1357 + $0x44] sm:$0x3]
          %v1377 = vunpack.c.l.b16 %v1336
          %v1378 = vunpack.c.h.b16 %v1336
          %v1379 = vpack.c.b16 %v339, %v1377
          %v1380 = vpack.c.b16 %v340, %v1378
          %vm1381 = vcmask 1045504
          %v1382 = vrot.slane %v1379, 2
          %v1383 = vrot.slane %v1011, 2
          %v1384 = vsel %vm1381, %v1382, %v1383
          %v1385 = vrot.slane %v1380, 2
          %v1386 = vrot.slane %v1012, 2
          %v1387 = vsel %vm1381, %v1385, %v1386
          %v1407 = vunpack.c.l.b16 %v1339
          %v1408 = vunpack.c.l.b16 %v1340
          %v1409 = vunpack.c.l.b16 %v1341
          %v1410 = vunpack.c.l.b16 %v1342
          %v1411 = vunpack.c.l.b16 %v1343
          %v1412 = vunpack.c.l.b16 %v1344
          %v1413 = vunpack.c.l.b16 %v1345
          %v1414 = vunpack.c.l.b16 %v1346
          %v1415 = vunpack.c.l.b16 %v1347
          %v1416 = vunpack.c.l.b16 %v1348
          %v1417 = vunpack.c.l.b16 %v1349
          %v1418 = vunpack.c.l.b16 %v1350
          %v1419 = vunpack.c.l.b16 %v1351
          %v1420 = vunpack.c.l.b16 %v1352
          %v1421 = vunpack.c.l.b16 %v1353
          %v1422 = vunpack.c.l.b16 %v1354
          %v1423 = vunpack.c.l.b16 %v1355
          %v1424 = vunpack.c.l.b16 %v1356
          %v1425 = vpack.c.b16 %v1408, %v1407
          %v1426 = vpack.c.b16 %v1410, %v1409
          %v1427 = vpack.c.b16 %v1412, %v1411
          %v1428 = vpack.c.b16 %v1414, %v1413
          %v1429 = vpack.c.b16 %v1416, %v1415
          %v1430 = vpack.c.b16 %v1418, %v1417
          %v1431 = vpack.c.b16 %v1420, %v1419
          %v1432 = vpack.c.b16 %v1422, %v1421
          %v1433 = vpack.c.b16 %v1424, %v1423
          %v1443 = vsel %vm426, %v1387, 0
          %v1446 = vsel %vm430, %v1433, 0
          %1448 = vmatprep.subr.bf16.mxu0 0
          %1449 = vmatpush1.bf16.msra.mxu0 %v1425
          %1450 = vmatprep.subr.bf16.mxu0 0
          %1451 = vmatpush1.bf16.msra.mxu0 %v1426
          %1452 = vmatprep.subr.bf16.mxu0 0
          %1453 = vmatpush1.bf16.msra.mxu0 %v1427
          %1454 = vmatprep.subr.bf16.mxu0 0
          %1455 = vmatpush1.bf16.msra.mxu0 %v1428
          %1456 = vmatprep.subr.bf16.mxu0 0
          %1457 = vmatpush1.bf16.msra.mxu0 %v1429
          %1458 = vmatprep.subr.bf16.mxu0 0
          %1459 = vmatpush1.bf16.msra.mxu0 %v1430
          %1460 = vmatprep.subr.bf16.mxu0 0
          %1461 = vmatpush1.bf16.msra.mxu0 %v1431
          %1462 = vmatprep.subr.bf16.mxu0 0
          %1463 = vmatpush1.bf16.msra.mxu0 %v1432
          %1464 = vmatprep.subr.bf16.mxu0 0
          %1465 = vmatpush1.bf16.msra.mxu0 %v1446
          %1466 = vmatprep.subr.bf16.mxu0 0
          %1467 = vmatpush1.bf16.msra.mxu0 0
          %1468 = vmatprep.subr.bf16.mxu0 0
          %1469 = vmatpush1.bf16.msra.mxu0 0
          %1470 = vmatprep.subr.bf16.mxu0 0
          %1471 = vmatpush1.bf16.msra.mxu0 0
          %1472 = vmatprep.subr.bf16.mxu0 0
          %1473 = vmatpush1.bf16.msra.mxu0 0
          %1474 = vmatprep.subr.bf16.mxu0 0
          %1475 = vmatpush1.bf16.msra.mxu0 0
          %1476 = vmatprep.subr.bf16.mxu0 0
          %1477 = vmatpush1.bf16.msra.mxu0 0
          %1478 = vmatprep.subr.bf16.mxu0 0
          %1479 = vmatpush1.bf16.msra.mxu0 0
          %1480 = vmatprep.mubr.bf16.mxu0 %v1443
          %1481 = vmatmul.mubr.bf16.gmra.mrb[0].mxu0 %v1384
          %v1482 = vpop.f32.mrb[0].mxu0
          %v1483 = vadd.f32 0.0, %v1482
          %v1484 = vpop.f32.mrb[0].mxu0
          %v1485 = vpop.f32.mrb[0].mxu0
          %v1486 = vadd.f32 0.0, %v1485
          %v1487 = vpop.f32.mrb[0].mxu0
          %1488 = vdwg.mxu0
          %v1489 = vadd.f32 %v1334, %v1483
          %v1490 = vadd.f32 %v1335, %v1486
          %v1509 = vunpack.c.l.b16 %v1358
          %v1510 = vunpack.c.l.b16 %v1359
          %v1511 = vunpack.c.l.b16 %v1360
          %v1512 = vunpack.c.l.b16 %v1361
          %v1513 = vunpack.c.l.b16 %v1362
          %v1514 = vunpack.c.l.b16 %v1363
          %v1515 = vunpack.c.l.b16 %v1364
          %v1516 = vunpack.c.l.b16 %v1365
          %v1517 = vunpack.c.l.b16 %v1366
          %v1518 = vunpack.c.l.b16 %v1367
          %v1519 = vunpack.c.l.b16 %v1368
          %v1520 = vunpack.c.l.b16 %v1369
          %v1521 = vunpack.c.l.b16 %v1370
          %v1522 = vunpack.c.l.b16 %v1371
          %v1523 = vunpack.c.l.b16 %v1372
          %v1524 = vunpack.c.l.b16 %v1373
          %v1525 = vunpack.c.l.b16 %v1374
          %v1526 = vunpack.c.l.b16 %v1375
          %v1527 = vpack.c.b16 %v1510, %v1509
          %v1528 = vpack.c.b16 %v1512, %v1511
          %v1529 = vpack.c.b16 %v1514, %v1513
          %v1530 = vpack.c.b16 %v1516, %v1515
          %v1531 = vpack.c.b16 %v1518, %v1517
          %v1532 = vpack.c.b16 %v1520, %v1519
          %v1533 = vpack.c.b16 %v1522, %v1521
          %v1534 = vpack.c.b16 %v1524, %v1523
          %v1535 = vpack.c.b16 %v1526, %v1525
          %v1545 = vsel %vm430, %v1535, 0
          %1547 = vmatprep.subr.bf16.mxu0 0
          %1548 = vmatpush1.bf16.msra.mxu0 %v1527
          %1549 = vmatprep.subr.bf16.mxu0 0
          %1550 = vmatpush1.bf16.msra.mxu0 %v1528
          %1551 = vmatprep.subr.bf16.mxu0 0
          %1552 = vmatpush1.bf16.msra.mxu0 %v1529
          %1553 = vmatprep.subr.bf16.mxu0 0
          %1554 = vmatpush1.bf16.msra.mxu0 %v1530
          %1555 = vmatprep.subr.bf16.mxu0 0
          %1556 = vmatpush1.bf16.msra.mxu0 %v1531
          %1557 = vmatprep.subr.bf16.mxu0 0
          %1558 = vmatpush1.bf16.msra.mxu0 %v1532
          %1559 = vmatprep.subr.bf16.mxu0 0
          %1560 = vmatpush1.bf16.msra.mxu0 %v1533
          %1561 = vmatprep.subr.bf16.mxu0 0
          %1562 = vmatpush1.bf16.msra.mxu0 %v1534
          %1563 = vmatprep.subr.bf16.mxu0 0
          %1564 = vmatpush1.bf16.msra.mxu0 %v1545
          %1565 = vmatprep.subr.bf16.mxu0 0
          %1566 = vmatpush1.bf16.msra.mxu0 0
          %1567 = vmatprep.subr.bf16.mxu0 0
          %1568 = vmatpush1.bf16.msra.mxu0 0
          %1569 = vmatprep.subr.bf16.mxu0 0
          %1570 = vmatpush1.bf16.msra.mxu0 0
          %1571 = vmatprep.subr.bf16.mxu0 0
          %1572 = vmatpush1.bf16.msra.mxu0 0
          %1573 = vmatprep.subr.bf16.mxu0 0
          %1574 = vmatpush1.bf16.msra.mxu0 0
          %1575 = vmatprep.subr.bf16.mxu0 0
          %1576 = vmatpush1.bf16.msra.mxu0 0
          %1577 = vmatprep.subr.bf16.mxu0 0
          %1578 = vmatpush1.bf16.msra.mxu0 0
          %1579 = vmatprep.mubr.bf16.mxu0 %v1443
          %1580 = vmatmul.mubr.bf16.gmra.mrb[0].mxu0 %v1384
          %v1581 = vpop.f32.mrb[0].mxu0
          %v1582 = vadd.f32 0.0, %v1581
          %v1583 = vpop.f32.mrb[0].mxu0
          %v1584 = vpop.f32.mrb[0].mxu0
          %v1585 = vadd.f32 0.0, %v1584
          %v1586 = vpop.f32.mrb[0].mxu0
          %1587 = vdwg.mxu0
          %v1588 = vadd.f32 %v1489, %v1582
          %v1589 = vadd.f32 %v1490, %v1585
          %v1591 = vunpack.c.l.b16 %v1337
          %v1592 = vunpack.c.h.b16 %v1337
          %v1593 = vpack.c.b16 %v577, %v1591
          %v1594 = vpack.c.b16 %v578, %v1592
          %v1595 = vrot.slane %v1593, 2
          %v1596 = vrot.slane %v1253, 2
          %v1597 = vsel %vm1381, %v1595, %v1596
          %v1598 = vrot.slane %v1594, 2
          %v1599 = vrot.slane %v1254, 2
          %v1600 = vsel %vm1381, %v1598, %v1599
          %v1603 = vsel %vm426, %v1600, 0
          %1605 = vmatprep.subr.bf16.mxu0 0
          %1606 = vmatpush1.bf16.msra.mxu0 %v1425
          %1607 = vmatprep.subr.bf16.mxu0 0
          %1608 = vmatpush1.bf16.msra.mxu0 %v1426
          %1609 = vmatprep.subr.bf16.mxu0 0
          %1610 = vmatpush1.bf16.msra.mxu0 %v1427
          %1611 = vmatprep.subr.bf16.mxu0 0
          %1612 = vmatpush1.bf16.msra.mxu0 %v1428
          %1613 = vmatprep.subr.bf16.mxu0 0
          %1614 = vmatpush1.bf16.msra.mxu0 %v1429
          %1615 = vmatprep.subr.bf16.mxu0 0
          %1616 = vmatpush1.bf16.msra.mxu0 %v1430
          %1617 = vmatprep.subr.bf16.mxu0 0
          %1618 = vmatpush1.bf16.msra.mxu0 %v1431
          %1619 = vmatprep.subr.bf16.mxu0 0
          %1620 = vmatpush1.bf16.msra.mxu0 %v1432
          %1621 = vmatprep.subr.bf16.mxu0 0
          %1622 = vmatpush1.bf16.msra.mxu0 %v1446
          %1623 = vmatprep.subr.bf16.mxu0 0
          %1624 = vmatpush1.bf16.msra.mxu0 0
          %1625 = vmatprep.subr.bf16.mxu0 0
          %1626 = vmatpush1.bf16.msra.mxu0 0
          %1627 = vmatprep.subr.bf16.mxu0 0
          %1628 = vmatpush1.bf16.msra.mxu0 0
          %1629 = vmatprep.subr.bf16.mxu0 0
          %1630 = vmatpush1.bf16.msra.mxu0 0
          %1631 = vmatprep.subr.bf16.mxu0 0
          %1632 = vmatpush1.bf16.msra.mxu0 0
          %1633 = vmatprep.subr.bf16.mxu0 0
          %1634 = vmatpush1.bf16.msra.mxu0 0
          %1635 = vmatprep.subr.bf16.mxu0 0
          %1636 = vmatpush1.bf16.msra.mxu0 0
          %1637 = vmatprep.mubr.bf16.mxu0 %v1603
          %1638 = vmatmul.mubr.bf16.gmra.mrb[0].mxu0 %v1597
          %v1639 = vpop.f32.mrb[0].mxu0
          %v1640 = vadd.f32 0.0, %v1639
          %v1641 = vpop.f32.mrb[0].mxu0
          %v1642 = vpop.f32.mrb[0].mxu0
          %v1643 = vadd.f32 0.0, %v1642
          %v1644 = vpop.f32.mrb[0].mxu0
          %1645 = vdwg.mxu0
          %v1646 = vadd.f32 %v1588, %v1640
          %v1647 = vadd.f32 %v1589, %v1643
          %v1648 = vld [vmem:[#allocation2 + $0x10] sm:$0x77]
          %v1649 = vld [vmem:[#allocation3 + $0x10] sm:$0x77]
          %s1650 = scalar_lea.vmem [#allocation5], 288
          %v1651 = vld [vmem:[%s1650] sm:$0xf]
          %v1652 = vld [vmem:[%s1650 + $0x4] sm:$0xf]
          %v1653 = vld [vmem:[%s1650 + $0x8] sm:$0xf]
          %v1654 = vld [vmem:[%s1650 + $0xc] sm:$0xf]
          %v1655 = vld [vmem:[%s1650 + $0x10] sm:$0xf]
          %v1656 = vld [vmem:[%s1650 + $0x14] sm:$0xf]
          %v1657 = vld [vmem:[%s1650 + $0x18] sm:$0xf]
          %v1658 = vld [vmem:[%s1650 + $0x1c] sm:$0xf]
          %v1659 = vld [vmem:[%s1650 + $0x20] sm:$0xf]
          %v1660 = vld [vmem:[%s1650 + $0x24] sm:$0xf]
          %v1661 = vld [vmem:[%s1650 + $0x28] sm:$0xf]
          %v1662 = vld [vmem:[%s1650 + $0x2c] sm:$0xf]
          %v1663 = vld [vmem:[%s1650 + $0x30] sm:$0xf]
          %v1664 = vld [vmem:[%s1650 + $0x34] sm:$0xf]
          %v1665 = vld [vmem:[%s1650 + $0x38] sm:$0xf]
          %v1666 = vld [vmem:[%s1650 + $0x3c] sm:$0xf]
          %v1667 = vld [vmem:[%s1650 + $0x40] sm:$0xf]
          %v1668 = vld [vmem:[%s1650 + $0x44] sm:$0x3]
          %s1669 = scalar_lea.vmem [#allocation5], 1080
          %v1670 = vld [vmem:[%s1669] sm:$0xf]
          %v1671 = vld [vmem:[%s1669 + $0x4] sm:$0xf]
          %v1672 = vld [vmem:[%s1669 + $0x8] sm:$0xf]
          %v1673 = vld [vmem:[%s1669 + $0xc] sm:$0xf]
          %v1674 = vld [vmem:[%s1669 + $0x10] sm:$0xf]
          %v1675 = vld [vmem:[%s1669 + $0x14] sm:$0xf]
          %v1676 = vld [vmem:[%s1669 + $0x18] sm:$0xf]
          %v1677 = vld [vmem:[%s1669 + $0x1c] sm:$0xf]
          %v1678 = vld [vmem:[%s1669 + $0x20] sm:$0xf]
          %v1679 = vld [vmem:[%s1669 + $0x24] sm:$0xf]
          %v1680 = vld [vmem:[%s1669 + $0x28] sm:$0xf]
          %v1681 = vld [vmem:[%s1669 + $0x2c] sm:$0xf]
          %v1682 = vld [vmem:[%s1669 + $0x30] sm:$0xf]
          %v1683 = vld [vmem:[%s1669 + $0x34] sm:$0xf]
          %v1684 = vld [vmem:[%s1669 + $0x38] sm:$0xf]
          %v1685 = vld [vmem:[%s1669 + $0x3c] sm:$0xf]
          %v1686 = vld [vmem:[%s1669 + $0x40] sm:$0xf]
          %v1687 = vld [vmem:[%s1669 + $0x44] sm:$0x3]
          %v1689 = vunpack.c.l.b16 %v1648
          %v1690 = vunpack.c.h.b16 %v1648
          %v1691 = vpack.c.b16 %v1689, %v1689
          %v1692 = vpack.c.b16 %v1690, %v1690
          %vm1693 = vsmask.f32 5376
          %v1695 = vshrl.u32 %v1379, 16
          %v1697 = vrot.slane %v1695, 2
          %v1698 = vshll.u32 %v1379, 16
          %v1700 = vrot.slane %v1698, 3
          %v1701 = vor.u32 %v1697, %v1700
          %v1703 = vshrl.u32 %v1691, 16
          %v1705 = vrot.slane %v1703, 2
          %v1706 = vshll.u32 %v1691, 16
          %v1708 = vrot.slane %v1706, 3
          %v1709 = vor.u32 %v1705, %v1708
          %v1710 = vsel %vm1693, %v1701, %v1709
          %v1712 = vshrl.u32 %v1380, 16
          %v1714 = vrot.slane %v1712, 2
          %v1715 = vshll.u32 %v1380, 16
          %v1717 = vrot.slane %v1715, 3
          %v1718 = vor.u32 %v1714, %v1717
          %v1720 = vshrl.u32 %v1692, 16
          %v1722 = vrot.slane %v1720, 2
          %v1723 = vshll.u32 %v1692, 16
          %v1725 = vrot.slane %v1723, 3
          %v1726 = vor.u32 %v1722, %v1725
          %v1727 = vsel %vm1693, %v1718, %v1726
          %v1747 = vunpack.c.l.b16 %v1651
          %v1748 = vunpack.c.l.b16 %v1652
          %v1749 = vunpack.c.l.b16 %v1653
          %v1750 = vunpack.c.l.b16 %v1654
          %v1751 = vunpack.c.l.b16 %v1655
          %v1752 = vunpack.c.l.b16 %v1656
          %v1753 = vunpack.c.l.b16 %v1657
          %v1754 = vunpack.c.l.b16 %v1658
          %v1755 = vunpack.c.l.b16 %v1659
          %v1756 = vunpack.c.l.b16 %v1660
          %v1757 = vunpack.c.l.b16 %v1661
          %v1758 = vunpack.c.l.b16 %v1662
          %v1759 = vunpack.c.l.b16 %v1663
          %v1760 = vunpack.c.l.b16 %v1664
          %v1761 = vunpack.c.l.b16 %v1665
          %v1762 = vunpack.c.l.b16 %v1666
          %v1763 = vunpack.c.l.b16 %v1667
          %v1764 = vunpack.c.l.b16 %v1668
          %v1765 = vpack.c.b16 %v1748, %v1747
          %v1766 = vpack.c.b16 %v1750, %v1749
          %v1767 = vpack.c.b16 %v1752, %v1751
          %v1768 = vpack.c.b16 %v1754, %v1753
          %v1769 = vpack.c.b16 %v1756, %v1755
          %v1770 = vpack.c.b16 %v1758, %v1757
          %v1771 = vpack.c.b16 %v1760, %v1759
          %v1772 = vpack.c.b16 %v1762, %v1761
          %v1773 = vpack.c.b16 %v1764, %v1763
          %v1783 = vsel %vm426, %v1727, 0
          %v1786 = vsel %vm430, %v1773, 0
          %1788 = vmatprep.subr.bf16.mxu0 0
          %1789 = vmatpush1.bf16.msra.mxu0 %v1765
          %1790 = vmatprep.subr.bf16.mxu0 0
          %1791 = vmatpush1.bf16.msra.mxu0 %v1766
          %1792 = vmatprep.subr.bf16.mxu0 0
          %1793 = vmatpush1.bf16.msra.mxu0 %v1767
          %1794 = vmatprep.subr.bf16.mxu0 0
          %1795 = vmatpush1.bf16.msra.mxu0 %v1768
          %1796 = vmatprep.subr.bf16.mxu0 0
          %1797 = vmatpush1.bf16.msra.mxu0 %v1769
          %1798 = vmatprep.subr.bf16.mxu0 0
          %1799 = vmatpush1.bf16.msra.mxu0 %v1770
          %1800 = vmatprep.subr.bf16.mxu0 0
          %1801 = vmatpush1.bf16.msra.mxu0 %v1771
          %1802 = vmatprep.subr.bf16.mxu0 0
          %1803 = vmatpush1.bf16.msra.mxu0 %v1772
          %1804 = vmatprep.subr.bf16.mxu0 0
          %1805 = vmatpush1.bf16.msra.mxu0 %v1786
          %1806 = vmatprep.subr.bf16.mxu0 0
          %1807 = vmatpush1.bf16.msra.mxu0 0
          %1808 = vmatprep.subr.bf16.mxu0 0
          %1809 = vmatpush1.bf16.msra.mxu0 0
          %1810 = vmatprep.subr.bf16.mxu0 0
          %1811 = vmatpush1.bf16.msra.mxu0 0
          %1812 = vmatprep.subr.bf16.mxu0 0
          %1813 = vmatpush1.bf16.msra.mxu0 0
          %1814 = vmatprep.subr.bf16.mxu0 0
          %1815 = vmatpush1.bf16.msra.mxu0 0
          %1816 = vmatprep.subr.bf16.mxu0 0
          %1817 = vmatpush1.bf16.msra.mxu0 0
          %1818 = vmatprep.subr.bf16.mxu0 0
          %1819 = vmatpush1.bf16.msra.mxu0 0
          %1820 = vmatprep.mubr.bf16.mxu0 %v1783
          %1821 = vmatmul.mubr.bf16.gmra.mrb[0].mxu0 %v1710
          %v1822 = vpop.f32.mrb[0].mxu0
          %v1823 = vadd.f32 0.0, %v1822
          %v1824 = vpop.f32.mrb[0].mxu0
          %v1825 = vpop.f32.mrb[0].mxu0
          %v1826 = vadd.f32 0.0, %v1825
          %v1827 = vpop.f32.mrb[0].mxu0
          %1828 = vdwg.mxu0
          %v1829 = vadd.f32 %v1646, %v1823
          %v1830 = vadd.f32 %v1647, %v1826
          %v1849 = vunpack.c.l.b16 %v1670
          %v1850 = vunpack.c.l.b16 %v1671
          %v1851 = vunpack.c.l.b16 %v1672
          %v1852 = vunpack.c.l.b16 %v1673
          %v1853 = vunpack.c.l.b16 %v1674
          %v1854 = vunpack.c.l.b16 %v1675
          %v1855 = vunpack.c.l.b16 %v1676
          %v1856 = vunpack.c.l.b16 %v1677
          %v1857 = vunpack.c.l.b16 %v1678
          %v1858 = vunpack.c.l.b16 %v1679
          %v1859 = vunpack.c.l.b16 %v1680
          %v1860 = vunpack.c.l.b16 %v1681
          %v1861 = vunpack.c.l.b16 %v1682
          %v1862 = vunpack.c.l.b16 %v1683
          %v1863 = vunpack.c.l.b16 %v1684
          %v1864 = vunpack.c.l.b16 %v1685
          %v1865 = vunpack.c.l.b16 %v1686
          %v1866 = vunpack.c.l.b16 %v1687
          %v1867 = vpack.c.b16 %v1850, %v1849
          %v1868 = vpack.c.b16 %v1852, %v1851
          %v1869 = vpack.c.b16 %v1854, %v1853
          %v1870 = vpack.c.b16 %v1856, %v1855
          %v1871 = vpack.c.b16 %v1858, %v1857
          %v1872 = vpack.c.b16 %v1860, %v1859
          %v1873 = vpack.c.b16 %v1862, %v1861
          %v1874 = vpack.c.b16 %v1864, %v1863
          %v1875 = vpack.c.b16 %v1866, %v1865
          %v1885 = vsel %vm430, %v1875, 0
          %1887 = vmatprep.subr.bf16.mxu0 0
          %1888 = vmatpush1.bf16.msra.mxu0 %v1867
          %1889 = vmatprep.subr.bf16.mxu0 0
          %1890 = vmatpush1.bf16.msra.mxu0 %v1868
          %1891 = vmatprep.subr.bf16.mxu0 0
          %1892 = vmatpush1.bf16.msra.mxu0 %v1869
          %1893 = vmatprep.subr.bf16.mxu0 0
          %1894 = vmatpush1.bf16.msra.mxu0 %v1870
          %1895 = vmatprep.subr.bf16.mxu0 0
          %1896 = vmatpush1.bf16.msra.mxu0 %v1871
          %1897 = vmatprep.subr.bf16.mxu0 0
          %1898 = vmatpush1.bf16.msra.mxu0 %v1872
          %1899 = vmatprep.subr.bf16.mxu0 0
          %1900 = vmatpush1.bf16.msra.mxu0 %v1873
          %1901 = vmatprep.subr.bf16.mxu0 0
          %1902 = vmatpush1.bf16.msra.mxu0 %v1874
          %1903 = vmatprep.subr.bf16.mxu0 0
          %1904 = vmatpush1.bf16.msra.mxu0 %v1885
          %1905 = vmatprep.subr.bf16.mxu0 0
          %1906 = vmatpush1.bf16.msra.mxu0 0
          %1907 = vmatprep.subr.bf16.mxu0 0
          %1908 = vmatpush1.bf16.msra.mxu0 0
          %1909 = vmatprep.subr.bf16.mxu0 0
          %1910 = vmatpush1.bf16.msra.mxu0 0
          %1911 = vmatprep.subr.bf16.mxu0 0
          %1912 = vmatpush1.bf16.msra.mxu0 0
          %1913 = vmatprep.subr.bf16.mxu0 0
          %1914 = vmatpush1.bf16.msra.mxu0 0
          %1915 = vmatprep.subr.bf16.mxu0 0
          %1916 = vmatpush1.bf16.msra.mxu0 0
          %1917 = vmatprep.subr.bf16.mxu0 0
          %1918 = vmatpush1.bf16.msra.mxu0 0
          %1919 = vmatprep.mubr.bf16.mxu0 %v1783
          %1920 = vmatmul.mubr.bf16.gmra.mrb[0].mxu0 %v1710
          %v1921 = vpop.f32.mrb[0].mxu0
          %v1922 = vadd.f32 0.0, %v1921
          %v1923 = vpop.f32.mrb[0].mxu0
          %v1924 = vpop.f32.mrb[0].mxu0
          %v1925 = vadd.f32 0.0, %v1924
          %v1926 = vpop.f32.mrb[0].mxu0
          %1927 = vdwg.mxu0
          %v1928 = vadd.f32 %v1829, %v1922
          %v1929 = vadd.f32 %v1830, %v1925
          %v1931 = vunpack.c.l.b16 %v1649
          %v1932 = vunpack.c.h.b16 %v1649
          %v1933 = vpack.c.b16 %v1931, %v1931
          %v1934 = vpack.c.b16 %v1932, %v1932
          %v1936 = vshrl.u32 %v1593, 16
          %v1938 = vrot.slane %v1936, 2
          %v1939 = vshll.u32 %v1593, 16
          %v1941 = vrot.slane %v1939, 3
          %v1942 = vor.u32 %v1938, %v1941
          %v1944 = vshrl.u32 %v1933, 16
          %v1946 = vrot.slane %v1944, 2
          %v1947 = vshll.u32 %v1933, 16
          %v1949 = vrot.slane %v1947, 3
          %v1950 = vor.u32 %v1946, %v1949
          %v1951 = vsel %vm1693, %v1942, %v1950
          %v1953 = vshrl.u32 %v1594, 16
          %v1955 = vrot.slane %v1953, 2
          %v1956 = vshll.u32 %v1594, 16
          %v1958 = vrot.slane %v1956, 3
          %v1959 = vor.u32 %v1955, %v1958
          %v1961 = vshrl.u32 %v1934, 16
          %v1963 = vrot.slane %v1961, 2
          %v1964 = vshll.u32 %v1934, 16
          %v1966 = vrot.slane %v1964, 3
          %v1967 = vor.u32 %v1963, %v1966
          %v1968 = vsel %vm1693, %v1959, %v1967
          %v1971 = vsel %vm426, %v1968, 0
          %1973 = vmatprep.subr.bf16.mxu0 0
          %1974 = vmatpush1.bf16.msra.mxu0 %v1765
          %1975 = vmatprep.subr.bf16.mxu0 0
          %1976 = vmatpush1.bf16.msra.mxu0 %v1766
          %1977 = vmatprep.subr.bf16.mxu0 0
          %1978 = vmatpush1.bf16.msra.mxu0 %v1767
          %1979 = vmatprep.subr.bf16.mxu0 0
          %1980 = vmatpush1.bf16.msra.mxu0 %v1768
          %1981 = vmatprep.subr.bf16.mxu0 0
          %1982 = vmatpush1.bf16.msra.mxu0 %v1769
          %1983 = vmatprep.subr.bf16.mxu0 0
          %1984 = vmatpush1.bf16.msra.mxu0 %v1770
          %1985 = vmatprep.subr.bf16.mxu0 0
          %1986 = vmatpush1.bf16.msra.mxu0 %v1771
          %1987 = vmatprep.subr.bf16.mxu0 0
          %1988 = vmatpush1.bf16.msra.mxu0 %v1772
          %1989 = vmatprep.subr.bf16.mxu0 0
          %1990 = vmatpush1.bf16.msra.mxu0 %v1786
          %1991 = vmatprep.subr.bf16.mxu0 0
          %1992 = vmatpush1.bf16.msra.mxu0 0
          %1993 = vmatprep.subr.bf16.mxu0 0
          %1994 = vmatpush1.bf16.msra.mxu0 0
          %1995 = vmatprep.subr.bf16.mxu0 0
          %1996 = vmatpush1.bf16.msra.mxu0 0
          %1997 = vmatprep.subr.bf16.mxu0 0
          %1998 = vmatpush1.bf16.msra.mxu0 0
          %1999 = vmatprep.subr.bf16.mxu0 0
          %2000 = vmatpush1.bf16.msra.mxu0 0
          %2001 = vmatprep.subr.bf16.mxu0 0
          %2002 = vmatpush1.bf16.msra.mxu0 0
          %2003 = vmatprep.subr.bf16.mxu0 0
          %2004 = vmatpush1.bf16.msra.mxu0 0
          %2005 = vmatprep.mubr.bf16.mxu0 %v1971
          %2006 = vmatmul.mubr.bf16.gmra.mrb[0].mxu0 %v1951
          %v2007 = vpop.f32.mrb[0].mxu0
          %v2008 = vadd.f32 0.0, %v2007
          %v2009 = vpop.f32.mrb[0].mxu0
          %v2010 = vpop.f32.mrb[0].mxu0
          %v2011 = vadd.f32 0.0, %v2010
          %v2012 = vpop.f32.mrb[0].mxu0
          %2013 = vdwg.mxu0
          %v2014 = vadd.f32 %v1928, %v2008
          %v2015 = vadd.f32 %v1929, %v2011
          %v2016 = vld [vmem:[#allocation2] sm:$0x88]
          %v2017 = vld [vmem:[#allocation3] sm:$0x88]
          %s2018 = scalar_lea.vmem [#allocation5], 360
          %v2019 = vld [vmem:[%s2018] sm:$0xf]
          %v2020 = vld [vmem:[%s2018 + $0x4] sm:$0xf]
          %v2021 = vld [vmem:[%s2018 + $0x8] sm:$0xf]
          %v2022 = vld [vmem:[%s2018 + $0xc] sm:$0xf]
          %v2023 = vld [vmem:[%s2018 + $0x10] sm:$0xf]
          %v2024 = vld [vmem:[%s2018 + $0x14] sm:$0xf]
          %v2025 = vld [vmem:[%s2018 + $0x18] sm:$0xf]
          %v2026 = vld [vmem:[%s2018 + $0x1c] sm:$0xf]
          %v2027 = vld [vmem:[%s2018 + $0x20] sm:$0xf]
          %v2028 = vld [vmem:[%s2018 + $0x24] sm:$0xf]
          %v2029 = vld [vmem:[%s2018 + $0x28] sm:$0xf]
          %v2030 = vld [vmem:[%s2018 + $0x2c] sm:$0xf]
          %v2031 = vld [vmem:[%s2018 + $0x30] sm:$0xf]
          %v2032 = vld [vmem:[%s2018 + $0x34] sm:$0xf]
          %v2033 = vld [vmem:[%s2018 + $0x38] sm:$0xf]
          %v2034 = vld [vmem:[%s2018 + $0x3c] sm:$0xf]
          %v2035 = vld [vmem:[%s2018 + $0x40] sm:$0xf]
          %v2036 = vld [vmem:[%s2018 + $0x44] sm:$0x3]
          %s2037 = scalar_lea.vmem [#allocation5], 1152
          %v2038 = vld [vmem:[%s2037] sm:$0xf]
          %v2039 = vld [vmem:[%s2037 + $0x4] sm:$0xf]
          %v2040 = vld [vmem:[%s2037 + $0x8] sm:$0xf]
          %v2041 = vld [vmem:[%s2037 + $0xc] sm:$0xf]
          %v2042 = vld [vmem:[%s2037 + $0x10] sm:$0xf]
          %v2043 = vld [vmem:[%s2037 + $0x14] sm:$0xf]
          %v2044 = vld [vmem:[%s2037 + $0x18] sm:$0xf]
          %v2045 = vld [vmem:[%s2037 + $0x1c] sm:$0xf]
          %v2046 = vld [vmem:[%s2037 + $0x20] sm:$0xf]
          %v2047 = vld [vmem:[%s2037 + $0x24] sm:$0xf]
          %v2048 = vld [vmem:[%s2037 + $0x28] sm:$0xf]
          %v2049 = vld [vmem:[%s2037 + $0x2c] sm:$0xf]
          %v2050 = vld [vmem:[%s2037 + $0x30] sm:$0xf]
          %v2051 = vld [vmem:[%s2037 + $0x34] sm:$0xf]
          %v2052 = vld [vmem:[%s2037 + $0x38] sm:$0xf]
          %v2053 = vld [vmem:[%s2037 + $0x3c] sm:$0xf]
          %v2054 = vld [vmem:[%s2037 + $0x40] sm:$0xf]
          %v2055 = vld [vmem:[%s2037 + $0x44] sm:$0x3]
          %v2057 = vunpack.c.l.b16 %v2016
          %v2058 = vunpack.c.h.b16 %v2016
          %v2059 = vpack.c.b16 %v339, %v2057
          %v2060 = vpack.c.b16 %v340, %v2058
          %vm2061 = vcmask 1044480
          %v2062 = vrot.slane %v2059, 3
          %v2063 = vrot.slane %v1691, 3
          %v2064 = vsel %vm2061, %v2062, %v2063
          %v2065 = vrot.slane %v2060, 3
          %v2066 = vrot.slane %v1692, 3
          %v2067 = vsel %vm2061, %v2065, %v2066
          %v2087 = vunpack.c.l.b16 %v2019
          %v2088 = vunpack.c.l.b16 %v2020
          %v2089 = vunpack.c.l.b16 %v2021
          %v2090 = vunpack.c.l.b16 %v2022
          %v2091 = vunpack.c.l.b16 %v2023
          %v2092 = vunpack.c.l.b16 %v2024
          %v2093 = vunpack.c.l.b16 %v2025
          %v2094 = vunpack.c.l.b16 %v2026
          %v2095 = vunpack.c.l.b16 %v2027
          %v2096 = vunpack.c.l.b16 %v2028
          %v2097 = vunpack.c.l.b16 %v2029
          %v2098 = vunpack.c.l.b16 %v2030
          %v2099 = vunpack.c.l.b16 %v2031
          %v2100 = vunpack.c.l.b16 %v2032
          %v2101 = vunpack.c.l.b16 %v2033
          %v2102 = vunpack.c.l.b16 %v2034
          %v2103 = vunpack.c.l.b16 %v2035
          %v2104 = vunpack.c.l.b16 %v2036
          %v2105 = vpack.c.b16 %v2088, %v2087
          %v2106 = vpack.c.b16 %v2090, %v2089
          %v2107 = vpack.c.b16 %v2092, %v2091
          %v2108 = vpack.c.b16 %v2094, %v2093
          %v2109 = vpack.c.b16 %v2096, %v2095
          %v2110 = vpack.c.b16 %v2098, %v2097
          %v2111 = vpack.c.b16 %v2100, %v2099
          %v2112 = vpack.c.b16 %v2102, %v2101
          %v2113 = vpack.c.b16 %v2104, %v2103
          %v2123 = vsel %vm426, %v2067, 0
          %v2126 = vsel %vm430, %v2113, 0
          %2128 = vmatprep.subr.bf16.mxu0 0
          %2129 = vmatpush1.bf16.msra.mxu0 %v2105
          %2130 = vmatprep.subr.bf16.mxu0 0
          %2131 = vmatpush1.bf16.msra.mxu0 %v2106
          %2132 = vmatprep.subr.bf16.mxu0 0
          %2133 = vmatpush1.bf16.msra.mxu0 %v2107
          %2134 = vmatprep.subr.bf16.mxu0 0
          %2135 = vmatpush1.bf16.msra.mxu0 %v2108
          %2136 = vmatprep.subr.bf16.mxu0 0
          %2137 = vmatpush1.bf16.msra.mxu0 %v2109
          %2138 = vmatprep.subr.bf16.mxu0 0
          %2139 = vmatpush1.bf16.msra.mxu0 %v2110
          %2140 = vmatprep.subr.bf16.mxu0 0
          %2141 = vmatpush1.bf16.msra.mxu0 %v2111
          %2142 = vmatprep.subr.bf16.mxu0 0
          %2143 = vmatpush1.bf16.msra.mxu0 %v2112
          %2144 = vmatprep.subr.bf16.mxu0 0
          %2145 = vmatpush1.bf16.msra.mxu0 %v2126
          %2146 = vmatprep.subr.bf16.mxu0 0
          %2147 = vmatpush1.bf16.msra.mxu0 0
          %2148 = vmatprep.subr.bf16.mxu0 0
          %2149 = vmatpush1.bf16.msra.mxu0 0
          %2150 = vmatprep.subr.bf16.mxu0 0
          %2151 = vmatpush1.bf16.msra.mxu0 0
          %2152 = vmatprep.subr.bf16.mxu0 0
          %2153 = vmatpush1.bf16.msra.mxu0 0
          %2154 = vmatprep.subr.bf16.mxu0 0
          %2155 = vmatpush1.bf16.msra.mxu0 0
          %2156 = vmatprep.subr.bf16.mxu0 0
          %2157 = vmatpush1.bf16.msra.mxu0 0
          %2158 = vmatprep.subr.bf16.mxu0 0
          %2159 = vmatpush1.bf16.msra.mxu0 0
          %2160 = vmatprep.mubr.bf16.mxu0 %v2123
          %2161 = vmatmul.mubr.bf16.gmra.mrb[0].mxu0 %v2064
          %v2162 = vpop.f32.mrb[0].mxu0
          %v2163 = vadd.f32 0.0, %v2162
          %v2164 = vpop.f32.mrb[0].mxu0
          %v2165 = vpop.f32.mrb[0].mxu0
          %v2166 = vadd.f32 0.0, %v2165
          %v2167 = vpop.f32.mrb[0].mxu0
          %2168 = vdwg.mxu0
          %v2169 = vadd.f32 %v2014, %v2163
          %v2170 = vadd.f32 %v2015, %v2166
          %v2189 = vunpack.c.l.b16 %v2038
          %v2190 = vunpack.c.l.b16 %v2039
          %v2191 = vunpack.c.l.b16 %v2040
          %v2192 = vunpack.c.l.b16 %v2041
          %v2193 = vunpack.c.l.b16 %v2042
          %v2194 = vunpack.c.l.b16 %v2043
          %v2195 = vunpack.c.l.b16 %v2044
          %v2196 = vunpack.c.l.b16 %v2045
          %v2197 = vunpack.c.l.b16 %v2046
          %v2198 = vunpack.c.l.b16 %v2047
          %v2199 = vunpack.c.l.b16 %v2048
          %v2200 = vunpack.c.l.b16 %v2049
          %v2201 = vunpack.c.l.b16 %v2050
          %v2202 = vunpack.c.l.b16 %v2051
          %v2203 = vunpack.c.l.b16 %v2052
          %v2204 = vunpack.c.l.b16 %v2053
          %v2205 = vunpack.c.l.b16 %v2054
          %v2206 = vunpack.c.l.b16 %v2055
          %v2207 = vpack.c.b16 %v2190, %v2189
          %v2208 = vpack.c.b16 %v2192, %v2191
          %v2209 = vpack.c.b16 %v2194, %v2193
          %v2210 = vpack.c.b16 %v2196, %v2195
          %v2211 = vpack.c.b16 %v2198, %v2197
          %v2212 = vpack.c.b16 %v2200, %v2199
          %v2213 = vpack.c.b16 %v2202, %v2201
          %v2214 = vpack.c.b16 %v2204, %v2203
          %v2215 = vpack.c.b16 %v2206, %v2205
          %v2225 = vsel %vm430, %v2215, 0
          %2227 = vmatprep.subr.bf16.mxu0 0
          %2228 = vmatpush1.bf16.msra.mxu0 %v2207
          %2229 = vmatprep.subr.bf16.mxu0 0
          %2230 = vmatpush1.bf16.msra.mxu0 %v2208
          %2231 = vmatprep.subr.bf16.mxu0 0
          %2232 = vmatpush1.bf16.msra.mxu0 %v2209
          %2233 = vmatprep.subr.bf16.mxu0 0
          %2234 = vmatpush1.bf16.msra.mxu0 %v2210
          %2235 = vmatprep.subr.bf16.mxu0 0
          %2236 = vmatpush1.bf16.msra.mxu0 %v2211
          %2237 = vmatprep.subr.bf16.mxu0 0
          %2238 = vmatpush1.bf16.msra.mxu0 %v2212
          %2239 = vmatprep.subr.bf16.mxu0 0
          %2240 = vmatpush1.bf16.msra.mxu0 %v2213
          %2241 = vmatprep.subr.bf16.mxu0 0
          %2242 = vmatpush1.bf16.msra.mxu0 %v2214
          %2243 = vmatprep.subr.bf16.mxu0 0
          %2244 = vmatpush1.bf16.msra.mxu0 %v2225
          %2245 = vmatprep.subr.bf16.mxu0 0
          %2246 = vmatpush1.bf16.msra.mxu0 0
          %2247 = vmatprep.subr.bf16.mxu0 0
          %2248 = vmatpush1.bf16.msra.mxu0 0
          %2249 = vmatprep.subr.bf16.mxu0 0
          %2250 = vmatpush1.bf16.msra.mxu0 0
          %2251 = vmatprep.subr.bf16.mxu0 0
          %2252 = vmatpush1.bf16.msra.mxu0 0
          %2253 = vmatprep.subr.bf16.mxu0 0
          %2254 = vmatpush1.bf16.msra.mxu0 0
          %2255 = vmatprep.subr.bf16.mxu0 0
          %2256 = vmatpush1.bf16.msra.mxu0 0
          %2257 = vmatprep.subr.bf16.mxu0 0
          %2258 = vmatpush1.bf16.msra.mxu0 0
          %2259 = vmatprep.mubr.bf16.mxu0 %v2123
          %2260 = vmatmul.mubr.bf16.gmra.mrb[0].mxu0 %v2064
          %v2261 = vpop.f32.mrb[0].mxu0
          %v2262 = vadd.f32 0.0, %v2261
          %v2263 = vpop.f32.mrb[0].mxu0
          %v2264 = vpop.f32.mrb[0].mxu0
          %v2265 = vadd.f32 0.0, %v2264
          %v2266 = vpop.f32.mrb[0].mxu0
          %2267 = vdwg.mxu0
          %v2268 = vadd.f32 %v2169, %v2262
          %v2269 = vadd.f32 %v2170, %v2265
          %v2271 = vunpack.c.l.b16 %v2017
          %v2272 = vunpack.c.h.b16 %v2017
          %v2273 = vpack.c.b16 %v577, %v2271
          %v2274 = vpack.c.b16 %v578, %v2272
          %v2275 = vrot.slane %v2273, 3
          %v2276 = vrot.slane %v1933, 3
          %v2277 = vsel %vm2061, %v2275, %v2276
          %v2278 = vrot.slane %v2274, 3
          %v2279 = vrot.slane %v1934, 3
          %v2280 = vsel %vm2061, %v2278, %v2279
          %v2283 = vsel %vm426, %v2280, 0
          %2285 = vmatprep.subr.bf16.mxu0 0
          %2286 = vmatpush1.bf16.msra.mxu0 %v2105
          %2287 = vmatprep.subr.bf16.mxu0 0
          %2288 = vmatpush1.bf16.msra.mxu0 %v2106
          %2289 = vmatprep.subr.bf16.mxu0 0
          %2290 = vmatpush1.bf16.msra.mxu0 %v2107
          %2291 = vmatprep.subr.bf16.mxu0 0
          %2292 = vmatpush1.bf16.msra.mxu0 %v2108
          %2293 = vmatprep.subr.bf16.mxu0 0
          %2294 = vmatpush1.bf16.msra.mxu0 %v2109
          %2295 = vmatprep.subr.bf16.mxu0 0
          %2296 = vmatpush1.bf16.msra.mxu0 %v2110
          %2297 = vmatprep.subr.bf16.mxu0 0
          %2298 = vmatpush1.bf16.msra.mxu0 %v2111
          %2299 = vmatprep.subr.bf16.mxu0 0
          %2300 = vmatpush1.bf16.msra.mxu0 %v2112
          %2301 = vmatprep.subr.bf16.mxu0 0
          %2302 = vmatpush1.bf16.msra.mxu0 %v2126
          %2303 = vmatprep.subr.bf16.mxu0 0
          %2304 = vmatpush1.bf16.msra.mxu0 0
          %2305 = vmatprep.subr.bf16.mxu0 0
          %2306 = vmatpush1.bf16.msra.mxu0 0
          %2307 = vmatprep.subr.bf16.mxu0 0
          %2308 = vmatpush1.bf16.msra.mxu0 0
          %2309 = vmatprep.subr.bf16.mxu0 0
          %2310 = vmatpush1.bf16.msra.mxu0 0
          %2311 = vmatprep.subr.bf16.mxu0 0
          %2312 = vmatpush1.bf16.msra.mxu0 0
          %2313 = vmatprep.subr.bf16.mxu0 0
          %2314 = vmatpush1.bf16.msra.mxu0 0
          %2315 = vmatprep.subr.bf16.mxu0 0
          %2316 = vmatpush1.bf16.msra.mxu0 0
          %2317 = vmatprep.mubr.bf16.mxu0 %v2283
          %2318 = vmatmul.mubr.bf16.gmra.mrb[0].mxu0 %v2277
          %v2319 = vpop.f32.mrb[0].mxu0
          %v2320 = vadd.f32 0.0, %v2319
          %v2321 = vpop.f32.mrb[0].mxu0
          %v2322 = vpop.f32.mrb[0].mxu0
          %v2323 = vadd.f32 0.0, %v2322
          %v2324 = vpop.f32.mrb[0].mxu0
          %2325 = vdwg.mxu0
          %v2326 = vadd.f32 %v2268, %v2320
          %v2327 = vadd.f32 %v2269, %v2323
          %v2328 = vld [vmem:[#allocation2 + $0x10] sm:$0xff]
          %v2329 = vld [vmem:[#allocation3 + $0x10] sm:$0xff]
          %s2330 = scalar_lea.vmem [#allocation5], 432
          %v2331 = vld [vmem:[%s2330] sm:$0xf]
          %v2332 = vld [vmem:[%s2330 + $0x4] sm:$0xf]
          %v2333 = vld [vmem:[%s2330 + $0x8] sm:$0xf]
          %v2334 = vld [vmem:[%s2330 + $0xc] sm:$0xf]
          %v2335 = vld [vmem:[%s2330 + $0x10] sm:$0xf]
          %v2336 = vld [vmem:[%s2330 + $0x14] sm:$0xf]
          %v2337 = vld [vmem:[%s2330 + $0x18] sm:$0xf]
          %v2338 = vld [vmem:[%s2330 + $0x1c] sm:$0xf]
          %v2339 = vld [vmem:[%s2330 + $0x20] sm:$0xf]
          %v2340 = vld [vmem:[%s2330 + $0x24] sm:$0xf]
          %v2341 = vld [vmem:[%s2330 + $0x28] sm:$0xf]
          %v2342 = vld [vmem:[%s2330 + $0x2c] sm:$0xf]
          %v2343 = vld [vmem:[%s2330 + $0x30] sm:$0xf]
          %v2344 = vld [vmem:[%s2330 + $0x34] sm:$0xf]
          %v2345 = vld [vmem:[%s2330 + $0x38] sm:$0xf]
          %v2346 = vld [vmem:[%s2330 + $0x3c] sm:$0xf]
          %v2347 = vld [vmem:[%s2330 + $0x40] sm:$0xf]
          %v2348 = vld [vmem:[%s2330 + $0x44] sm:$0x3]
          %s2349 = scalar_lea.vmem [#allocation5], 1224
          %v2350 = vld [vmem:[%s2349] sm:$0xf]
          %v2351 = vld [vmem:[%s2349 + $0x4] sm:$0xf]
          %v2352 = vld [vmem:[%s2349 + $0x8] sm:$0xf]
          %v2353 = vld [vmem:[%s2349 + $0xc] sm:$0xf]
          %v2354 = vld [vmem:[%s2349 + $0x10] sm:$0xf]
          %v2355 = vld [vmem:[%s2349 + $0x14] sm:$0xf]
          %v2356 = vld [vmem:[%s2349 + $0x18] sm:$0xf]
          %v2357 = vld [vmem:[%s2349 + $0x1c] sm:$0xf]
          %v2358 = vld [vmem:[%s2349 + $0x20] sm:$0xf]
          %v2359 = vld [vmem:[%s2349 + $0x24] sm:$0xf]
          %v2360 = vld [vmem:[%s2349 + $0x28] sm:$0xf]
          %v2361 = vld [vmem:[%s2349 + $0x2c] sm:$0xf]
          %v2362 = vld [vmem:[%s2349 + $0x30] sm:$0xf]
          %v2363 = vld [vmem:[%s2349 + $0x34] sm:$0xf]
          %v2364 = vld [vmem:[%s2349 + $0x38] sm:$0xf]
          %v2365 = vld [vmem:[%s2349 + $0x3c] sm:$0xf]
          %v2366 = vld [vmem:[%s2349 + $0x40] sm:$0xf]
          %v2367 = vld [vmem:[%s2349 + $0x44] sm:$0x3]
          %v2369 = vunpack.c.l.b16 %v2328
          %v2370 = vunpack.c.h.b16 %v2328
          %v2371 = vpack.c.b16 %v2369, %v2369
          %v2372 = vpack.c.b16 %v2370, %v2370
          %vm2373 = vsmask.f32 4352
          %v2375 = vshrl.u32 %v2059, 16
          %v2377 = vrot.slane %v2375, 3
          %v2378 = vshll.u32 %v2059, 16
          %v2380 = vrot.slane %v2378, 4
          %v2381 = vor.u32 %v2377, %v2380
          %v2383 = vshrl.u32 %v2371, 16
          %v2385 = vrot.slane %v2383, 3
          %v2386 = vshll.u32 %v2371, 16
          %v2388 = vrot.slane %v2386, 4
          %v2389 = vor.u32 %v2385, %v2388
          %v2390 = vsel %vm2373, %v2381, %v2389
          %v2392 = vshrl.u32 %v2060, 16
          %v2394 = vrot.slane %v2392, 3
          %v2395 = vshll.u32 %v2060, 16
          %v2397 = vrot.slane %v2395, 4
          %v2398 = vor.u32 %v2394, %v2397
          %v2400 = vshrl.u32 %v2372, 16
          %v2402 = vrot.slane %v2400, 3
          %v2403 = vshll.u32 %v2372, 16
          %v2405 = vrot.slane %v2403, 4
          %v2406 = vor.u32 %v2402, %v2405
          %v2407 = vsel %vm2373, %v2398, %v2406
          %v2427 = vunpack.c.l.b16 %v2331
          %v2428 = vunpack.c.l.b16 %v2332
          %v2429 = vunpack.c.l.b16 %v2333
          %v2430 = vunpack.c.l.b16 %v2334
          %v2431 = vunpack.c.l.b16 %v2335
          %v2432 = vunpack.c.l.b16 %v2336
          %v2433 = vunpack.c.l.b16 %v2337
          %v2434 = vunpack.c.l.b16 %v2338
          %v2435 = vunpack.c.l.b16 %v2339
          %v2436 = vunpack.c.l.b16 %v2340
          %v2437 = vunpack.c.l.b16 %v2341
          %v2438 = vunpack.c.l.b16 %v2342
          %v2439 = vunpack.c.l.b16 %v2343
          %v2440 = vunpack.c.l.b16 %v2344
          %v2441 = vunpack.c.l.b16 %v2345
          %v2442 = vunpack.c.l.b16 %v2346
          %v2443 = vunpack.c.l.b16 %v2347
          %v2444 = vunpack.c.l.b16 %v2348
          %v2445 = vpack.c.b16 %v2428, %v2427
          %v2446 = vpack.c.b16 %v2430, %v2429
          %v2447 = vpack.c.b16 %v2432, %v2431
          %v2448 = vpack.c.b16 %v2434, %v2433
          %v2449 = vpack.c.b16 %v2436, %v2435
          %v2450 = vpack.c.b16 %v2438, %v2437
          %v2451 = vpack.c.b16 %v2440, %v2439
          %v2452 = vpack.c.b16 %v2442, %v2441
          %v2453 = vpack.c.b16 %v2444, %v2443
          %v2463 = vsel %vm426, %v2407, 0
          %v2466 = vsel %vm430, %v2453, 0
          %2468 = vmatprep.subr.bf16.mxu0 0
          %2469 = vmatpush1.bf16.msra.mxu0 %v2445
          %2470 = vmatprep.subr.bf16.mxu0 0
          %2471 = vmatpush1.bf16.msra.mxu0 %v2446
          %2472 = vmatprep.subr.bf16.mxu0 0
          %2473 = vmatpush1.bf16.msra.mxu0 %v2447
          %2474 = vmatprep.subr.bf16.mxu0 0
          %2475 = vmatpush1.bf16.msra.mxu0 %v2448
          %2476 = vmatprep.subr.bf16.mxu0 0
          %2477 = vmatpush1.bf16.msra.mxu0 %v2449
          %2478 = vmatprep.subr.bf16.mxu0 0
          %2479 = vmatpush1.bf16.msra.mxu0 %v2450
          %2480 = vmatprep.subr.bf16.mxu0 0
          %2481 = vmatpush1.bf16.msra.mxu0 %v2451
          %2482 = vmatprep.subr.bf16.mxu0 0
          %2483 = vmatpush1.bf16.msra.mxu0 %v2452
          %2484 = vmatprep.subr.bf16.mxu0 0
          %2485 = vmatpush1.bf16.msra.mxu0 %v2466
          %2486 = vmatprep.subr.bf16.mxu0 0
          %2487 = vmatpush1.bf16.msra.mxu0 0
          %2488 = vmatprep.subr.bf16.mxu0 0
          %2489 = vmatpush1.bf16.msra.mxu0 0
          %2490 = vmatprep.subr.bf16.mxu0 0
          %2491 = vmatpush1.bf16.msra.mxu0 0
          %2492 = vmatprep.subr.bf16.mxu0 0
          %2493 = vmatpush1.bf16.msra.mxu0 0
          %2494 = vmatprep.subr.bf16.mxu0 0
          %2495 = vmatpush1.bf16.msra.mxu0 0
          %2496 = vmatprep.subr.bf16.mxu0 0
          %2497 = vmatpush1.bf16.msra.mxu0 0
          %2498 = vmatprep.subr.bf16.mxu0 0
          %2499 = vmatpush1.bf16.msra.mxu0 0
          %2500 = vmatprep.mubr.bf16.mxu0 %v2463
          %2501 = vmatmul.mubr.bf16.gmra.mrb[0].mxu0 %v2390
          %v2502 = vpop.f32.mrb[0].mxu0
          %v2503 = vadd.f32 0.0, %v2502
          %v2504 = vpop.f32.mrb[0].mxu0
          %v2505 = vpop.f32.mrb[0].mxu0
          %v2506 = vadd.f32 0.0, %v2505
          %v2507 = vpop.f32.mrb[0].mxu0
          %2508 = vdwg.mxu0
          %v2509 = vadd.f32 %v2326, %v2503
          %v2510 = vadd.f32 %v2327, %v2506
          %v2529 = vunpack.c.l.b16 %v2350
          %v2530 = vunpack.c.l.b16 %v2351
          %v2531 = vunpack.c.l.b16 %v2352
          %v2532 = vunpack.c.l.b16 %v2353
          %v2533 = vunpack.c.l.b16 %v2354
          %v2534 = vunpack.c.l.b16 %v2355
          %v2535 = vunpack.c.l.b16 %v2356
          %v2536 = vunpack.c.l.b16 %v2357
          %v2537 = vunpack.c.l.b16 %v2358
          %v2538 = vunpack.c.l.b16 %v2359
          %v2539 = vunpack.c.l.b16 %v2360
          %v2540 = vunpack.c.l.b16 %v2361
          %v2541 = vunpack.c.l.b16 %v2362
          %v2542 = vunpack.c.l.b16 %v2363
          %v2543 = vunpack.c.l.b16 %v2364
          %v2544 = vunpack.c.l.b16 %v2365
          %v2545 = vunpack.c.l.b16 %v2366
          %v2546 = vunpack.c.l.b16 %v2367
          %v2547 = vpack.c.b16 %v2530, %v2529
          %v2548 = vpack.c.b16 %v2532, %v2531
          %v2549 = vpack.c.b16 %v2534, %v2533
          %v2550 = vpack.c.b16 %v2536, %v2535
          %v2551 = vpack.c.b16 %v2538, %v2537
          %v2552 = vpack.c.b16 %v2540, %v2539
          %v2553 = vpack.c.b16 %v2542, %v2541
          %v2554 = vpack.c.b16 %v2544, %v2543
          %v2555 = vpack.c.b16 %v2546, %v2545
          %v2565 = vsel %vm430, %v2555, 0
          %2567 = vmatprep.subr.bf16.mxu0 0
          %2568 = vmatpush1.bf16.msra.mxu0 %v2547
          %2569 = vmatprep.subr.bf16.mxu0 0
          %2570 = vmatpush1.bf16.msra.mxu0 %v2548
          %2571 = vmatprep.subr.bf16.mxu0 0
          %2572 = vmatpush1.bf16.msra.mxu0 %v2549
          %2573 = vmatprep.subr.bf16.mxu0 0
          %2574 = vmatpush1.bf16.msra.mxu0 %v2550
          %2575 = vmatprep.subr.bf16.mxu0 0
          %2576 = vmatpush1.bf16.msra.mxu0 %v2551
          %2577 = vmatprep.subr.bf16.mxu0 0
          %2578 = vmatpush1.bf16.msra.mxu0 %v2552
          %2579 = vmatprep.subr.bf16.mxu0 0
          %2580 = vmatpush1.bf16.msra.mxu0 %v2553
          %2581 = vmatprep.subr.bf16.mxu0 0
          %2582 = vmatpush1.bf16.msra.mxu0 %v2554
          %2583 = vmatprep.subr.bf16.mxu0 0
          %2584 = vmatpush1.bf16.msra.mxu0 %v2565
          %2585 = vmatprep.subr.bf16.mxu0 0
          %2586 = vmatpush1.bf16.msra.mxu0 0
          %2587 = vmatprep.subr.bf16.mxu0 0
          %2588 = vmatpush1.bf16.msra.mxu0 0
          %2589 = vmatprep.subr.bf16.mxu0 0
          %2590 = vmatpush1.bf16.msra.mxu0 0
          %2591 = vmatprep.subr.bf16.mxu0 0
          %2592 = vmatpush1.bf16.msra.mxu0 0
          %2593 = vmatprep.subr.bf16.mxu0 0
          %2594 = vmatpush1.bf16.msra.mxu0 0
          %2595 = vmatprep.subr.bf16.mxu0 0
          %2596 = vmatpush1.bf16.msra.mxu0 0
          %2597 = vmatprep.subr.bf16.mxu0 0
          %2598 = vmatpush1.bf16.msra.mxu0 0
          %2599 = vmatprep.mubr.bf16.mxu0 %v2463
          %2600 = vmatmul.mubr.bf16.gmra.mrb[0].mxu0 %v2390
          %v2601 = vpop.f32.mrb[0].mxu0
          %v2602 = vadd.f32 0.0, %v2601
          %v2603 = vpop.f32.mrb[0].mxu0
          %v2604 = vpop.f32.mrb[0].mxu0
          %v2605 = vadd.f32 0.0, %v2604
          %v2606 = vpop.f32.mrb[0].mxu0
          %2607 = vdwg.mxu0
          %v2608 = vadd.f32 %v2509, %v2602
          %v2609 = vadd.f32 %v2510, %v2605
          %v2611 = vunpack.c.l.b16 %v2329
          %v2612 = vunpack.c.h.b16 %v2329
          %v2613 = vpack.c.b16 %v2611, %v2611
          %v2614 = vpack.c.b16 %v2612, %v2612
          %v2616 = vshrl.u32 %v2273, 16
          %v2618 = vrot.slane %v2616, 3
          %v2619 = vshll.u32 %v2273, 16
          %v2621 = vrot.slane %v2619, 4
          %v2622 = vor.u32 %v2618, %v2621
          %v2624 = vshrl.u32 %v2613, 16
          %v2626 = vrot.slane %v2624, 3
          %v2627 = vshll.u32 %v2613, 16
          %v2629 = vrot.slane %v2627, 4
          %v2630 = vor.u32 %v2626, %v2629
          %v2631 = vsel %vm2373, %v2622, %v2630
          %v2633 = vshrl.u32 %v2274, 16
          %v2635 = vrot.slane %v2633, 3
          %v2636 = vshll.u32 %v2274, 16
          %v2638 = vrot.slane %v2636, 4
          %v2639 = vor.u32 %v2635, %v2638
          %v2641 = vshrl.u32 %v2614, 16
          %v2643 = vrot.slane %v2641, 3
          %v2644 = vshll.u32 %v2614, 16
          %v2646 = vrot.slane %v2644, 4
          %v2647 = vor.u32 %v2643, %v2646
          %v2648 = vsel %vm2373, %v2639, %v2647
          %v2651 = vsel %vm426, %v2648, 0
          %2653 = vmatprep.subr.bf16.mxu0 0
          %2654 = vmatpush1.bf16.msra.mxu0 %v2445
          %2655 = vmatprep.subr.bf16.mxu0 0
          %2656 = vmatpush1.bf16.msra.mxu0 %v2446
          %2657 = vmatprep.subr.bf16.mxu0 0
          %2658 = vmatpush1.bf16.msra.mxu0 %v2447
          %2659 = vmatprep.subr.bf16.mxu0 0
          %2660 = vmatpush1.bf16.msra.mxu0 %v2448
          %2661 = vmatprep.subr.bf16.mxu0 0
          %2662 = vmatpush1.bf16.msra.mxu0 %v2449
          %2663 = vmatprep.subr.bf16.mxu0 0
          %2664 = vmatpush1.bf16.msra.mxu0 %v2450
          %2665 = vmatprep.subr.bf16.mxu0 0
          %2666 = vmatpush1.bf16.msra.mxu0 %v2451
          %2667 = vmatprep.subr.bf16.mxu0 0
          %2668 = vmatpush1.bf16.msra.mxu0 %v2452
          %2669 = vmatprep.subr.bf16.mxu0 0
          %2670 = vmatpush1.bf16.msra.mxu0 %v2466
          %2671 = vmatprep.subr.bf16.mxu0 0
          %2672 = vmatpush1.bf16.msra.mxu0 0
          %2673 = vmatprep.subr.bf16.mxu0 0
          %2674 = vmatpush1.bf16.msra.mxu0 0
          %2675 = vmatprep.subr.bf16.mxu0 0
          %2676 = vmatpush1.bf16.msra.mxu0 0
          %2677 = vmatprep.subr.bf16.mxu0 0
          %2678 = vmatpush1.bf16.msra.mxu0 0
          %2679 = vmatprep.subr.bf16.mxu0 0
          %2680 = vmatpush1.bf16.msra.mxu0 0
          %2681 = vmatprep.subr.bf16.mxu0 0
          %2682 = vmatpush1.bf16.msra.mxu0 0
          %2683 = vmatprep.subr.bf16.mxu0 0
          %2684 = vmatpush1.bf16.msra.mxu0 0
          %2685 = vmatprep.mubr.bf16.mxu0 %v2651
          %2686 = vmatmul.mubr.bf16.gmra.mrb[0].mxu0 %v2631
          %v2687 = vpop.f32.mrb[0].mxu0
          %v2688 = vadd.f32 0.0, %v2687
          %v2689 = vpop.f32.mrb[0].mxu0
          %v2690 = vpop.f32.mrb[0].mxu0
          %v2691 = vadd.f32 0.0, %v2690
          %v2692 = vpop.f32.mrb[0].mxu0
          %2693 = vdwg.mxu0
          %v2694 = vadd.f32 %v2608, %v2688
          %v2695 = vadd.f32 %v2609, %v2691
          %s2696 = scalar_lea.vmem [#allocation5], 504
          %v2697 = vld [vmem:[%s2696] sm:$0xf]
          %v2698 = vld [vmem:[%s2696 + $0x4] sm:$0xf]
          %v2699 = vld [vmem:[%s2696 + $0x8] sm:$0xf]
          %v2700 = vld [vmem:[%s2696 + $0xc] sm:$0xf]
          %v2701 = vld [vmem:[%s2696 + $0x10] sm:$0xf]
          %v2702 = vld [vmem:[%s2696 + $0x14] sm:$0xf]
          %v2703 = vld [vmem:[%s2696 + $0x18] sm:$0xf]
          %v2704 = vld [vmem:[%s2696 + $0x1c] sm:$0xf]
          %v2705 = vld [vmem:[%s2696 + $0x20] sm:$0xf]
          %v2706 = vld [vmem:[%s2696 + $0x24] sm:$0xf]
          %v2707 = vld [vmem:[%s2696 + $0x28] sm:$0xf]
          %v2708 = vld [vmem:[%s2696 + $0x2c] sm:$0xf]
          %v2709 = vld [vmem:[%s2696 + $0x30] sm:$0xf]
          %v2710 = vld [vmem:[%s2696 + $0x34] sm:$0xf]
          %v2711 = vld [vmem:[%s2696 + $0x38] sm:$0xf]
          %v2712 = vld [vmem:[%s2696 + $0x3c] sm:$0xf]
          %v2713 = vld [vmem:[%s2696 + $0x40] sm:$0xf]
          %v2714 = vld [vmem:[%s2696 + $0x44] sm:$0x3]
          %s2715 = scalar_lea.vmem [#allocation5], 1296
          %v2716 = vld [vmem:[%s2715] sm:$0xf]
          %v2717 = vld [vmem:[%s2715 + $0x4] sm:$0xf]
          %v2718 = vld [vmem:[%s2715 + $0x8] sm:$0xf]
          %v2719 = vld [vmem:[%s2715 + $0xc] sm:$0xf]
          %v2720 = vld [vmem:[%s2715 + $0x10] sm:$0xf]
          %v2721 = vld [vmem:[%s2715 + $0x14] sm:$0xf]
          %v2722 = vld [vmem:[%s2715 + $0x18] sm:$0xf]
          %v2723 = vld [vmem:[%s2715 + $0x1c] sm:$0xf]
          %v2724 = vld [vmem:[%s2715 + $0x20] sm:$0xf]
          %v2725 = vld [vmem:[%s2715 + $0x24] sm:$0xf]
          %v2726 = vld [vmem:[%s2715 + $0x28] sm:$0xf]
          %v2727 = vld [vmem:[%s2715 + $0x2c] sm:$0xf]
          %v2728 = vld [vmem:[%s2715 + $0x30] sm:$0xf]
          %v2729 = vld [vmem:[%s2715 + $0x34] sm:$0xf]
          %v2730 = vld [vmem:[%s2715 + $0x38] sm:$0xf]
          %v2731 = vld [vmem:[%s2715 + $0x3c] sm:$0xf]
          %v2732 = vld [vmem:[%s2715 + $0x40] sm:$0xf]
          %v2733 = vld [vmem:[%s2715 + $0x44] sm:$0x3]
          %v2734 = vpack.c.b16 %v2369, %v339
          %v2735 = vpack.c.b16 %v2370, %v340
          %v2755 = vunpack.c.l.b16 %v2697
          %v2756 = vunpack.c.l.b16 %v2698
          %v2757 = vunpack.c.l.b16 %v2699
          %v2758 = vunpack.c.l.b16 %v2700
          %v2759 = vunpack.c.l.b16 %v2701
          %v2760 = vunpack.c.l.b16 %v2702
          %v2761 = vunpack.c.l.b16 %v2703
          %v2762 = vunpack.c.l.b16 %v2704
          %v2763 = vunpack.c.l.b16 %v2705
          %v2764 = vunpack.c.l.b16 %v2706
          %v2765 = vunpack.c.l.b16 %v2707
          %v2766 = vunpack.c.l.b16 %v2708
          %v2767 = vunpack.c.l.b16 %v2709
          %v2768 = vunpack.c.l.b16 %v2710
          %v2769 = vunpack.c.l.b16 %v2711
          %v2770 = vunpack.c.l.b16 %v2712
          %v2771 = vunpack.c.l.b16 %v2713
          %v2772 = vunpack.c.l.b16 %v2714
          %v2773 = vpack.c.b16 %v2756, %v2755
          %v2774 = vpack.c.b16 %v2758, %v2757
          %v2775 = vpack.c.b16 %v2760, %v2759
          %v2776 = vpack.c.b16 %v2762, %v2761
          %v2777 = vpack.c.b16 %v2764, %v2763
          %v2778 = vpack.c.b16 %v2766, %v2765
          %v2779 = vpack.c.b16 %v2768, %v2767
          %v2780 = vpack.c.b16 %v2770, %v2769
          %v2781 = vpack.c.b16 %v2772, %v2771
          %v2791 = vsel %vm426, %v2735, 0
          %v2794 = vsel %vm430, %v2781, 0
          %2796 = vmatprep.subr.bf16.mxu0 0
          %2797 = vmatpush1.bf16.msra.mxu0 %v2773
          %2798 = vmatprep.subr.bf16.mxu0 0
          %2799 = vmatpush1.bf16.msra.mxu0 %v2774
          %2800 = vmatprep.subr.bf16.mxu0 0
          %2801 = vmatpush1.bf16.msra.mxu0 %v2775
          %2802 = vmatprep.subr.bf16.mxu0 0
          %2803 = vmatpush1.bf16.msra.mxu0 %v2776
          %2804 = vmatprep.subr.bf16.mxu0 0
          %2805 = vmatpush1.bf16.msra.mxu0 %v2777
          %2806 = vmatprep.subr.bf16.mxu0 0
          %2807 = vmatpush1.bf16.msra.mxu0 %v2778
          %2808 = vmatprep.subr.bf16.mxu0 0
          %2809 = vmatpush1.bf16.msra.mxu0 %v2779
          %2810 = vmatprep.subr.bf16.mxu0 0
          %2811 = vmatpush1.bf16.msra.mxu0 %v2780
          %2812 = vmatprep.subr.bf16.mxu0 0
          %2813 = vmatpush1.bf16.msra.mxu0 %v2794
          %2814 = vmatprep.subr.bf16.mxu0 0
          %2815 = vmatpush1.bf16.msra.mxu0 0
          %2816 = vmatprep.subr.bf16.mxu0 0
          %2817 = vmatpush1.bf16.msra.mxu0 0
          %2818 = vmatprep.subr.bf16.mxu0 0
          %2819 = vmatpush1.bf16.msra.mxu0 0
          %2820 = vmatprep.subr.bf16.mxu0 0
          %2821 = vmatpush1.bf16.msra.mxu0 0
          %2822 = vmatprep.subr.bf16.mxu0 0
          %2823 = vmatpush1.bf16.msra.mxu0 0
          %2824 = vmatprep.subr.bf16.mxu0 0
          %2825 = vmatpush1.bf16.msra.mxu0 0
          %2826 = vmatprep.subr.bf16.mxu0 0
          %2827 = vmatpush1.bf16.msra.mxu0 0
          %2828 = vmatprep.mubr.bf16.mxu0 %v2791
          %2829 = vmatmul.mubr.bf16.gmra.mrb[0].mxu0 %v2734
          %v2830 = vpop.f32.mrb[0].mxu0
          %v2831 = vadd.f32 0.0, %v2830
          %v2832 = vpop.f32.mrb[0].mxu0
          %v2833 = vpop.f32.mrb[0].mxu0
          %v2834 = vadd.f32 0.0, %v2833
          %v2835 = vpop.f32.mrb[0].mxu0
          %2836 = vdwg.mxu0
          %v2837 = vadd.f32 %v2694, %v2831
          %v2838 = vadd.f32 %v2695, %v2834
          %v2857 = vunpack.c.l.b16 %v2716
          %v2858 = vunpack.c.l.b16 %v2717
          %v2859 = vunpack.c.l.b16 %v2718
          %v2860 = vunpack.c.l.b16 %v2719
          %v2861 = vunpack.c.l.b16 %v2720
          %v2862 = vunpack.c.l.b16 %v2721
          %v2863 = vunpack.c.l.b16 %v2722
          %v2864 = vunpack.c.l.b16 %v2723
          %v2865 = vunpack.c.l.b16 %v2724
          %v2866 = vunpack.c.l.b16 %v2725
          %v2867 = vunpack.c.l.b16 %v2726
          %v2868 = vunpack.c.l.b16 %v2727
          %v2869 = vunpack.c.l.b16 %v2728
          %v2870 = vunpack.c.l.b16 %v2729
          %v2871 = vunpack.c.l.b16 %v2730
          %v2872 = vunpack.c.l.b16 %v2731
          %v2873 = vunpack.c.l.b16 %v2732
          %v2874 = vunpack.c.l.b16 %v2733
          %v2875 = vpack.c.b16 %v2858, %v2857
          %v2876 = vpack.c.b16 %v2860, %v2859
          %v2877 = vpack.c.b16 %v2862, %v2861
          %v2878 = vpack.c.b16 %v2864, %v2863
          %v2879 = vpack.c.b16 %v2866, %v2865
          %v2880 = vpack.c.b16 %v2868, %v2867
          %v2881 = vpack.c.b16 %v2870, %v2869
          %v2882 = vpack.c.b16 %v2872, %v2871
          %v2883 = vpack.c.b16 %v2874, %v2873
          %v2893 = vsel %vm430, %v2883, 0
          %2895 = vmatprep.subr.bf16.mxu0 0
          %2896 = vmatpush1.bf16.msra.mxu0 %v2875
          %2897 = vmatprep.subr.bf16.mxu0 0
          %2898 = vmatpush1.bf16.msra.mxu0 %v2876
          %2899 = vmatprep.subr.bf16.mxu0 0
          %2900 = vmatpush1.bf16.msra.mxu0 %v2877
          %2901 = vmatprep.subr.bf16.mxu0 0
          %2902 = vmatpush1.bf16.msra.mxu0 %v2878
          %2903 = vmatprep.subr.bf16.mxu0 0
          %2904 = vmatpush1.bf16.msra.mxu0 %v2879
          %2905 = vmatprep.subr.bf16.mxu0 0
          %2906 = vmatpush1.bf16.msra.mxu0 %v2880
          %2907 = vmatprep.subr.bf16.mxu0 0
          %2908 = vmatpush1.bf16.msra.mxu0 %v2881
          %2909 = vmatprep.subr.bf16.mxu0 0
          %2910 = vmatpush1.bf16.msra.mxu0 %v2882
          %2911 = vmatprep.subr.bf16.mxu0 0
          %2912 = vmatpush1.bf16.msra.mxu0 %v2893
          %2913 = vmatprep.subr.bf16.mxu0 0
          %2914 = vmatpush1.bf16.msra.mxu0 0
          %2915 = vmatprep.subr.bf16.mxu0 0
          %2916 = vmatpush1.bf16.msra.mxu0 0
          %2917 = vmatprep.subr.bf16.mxu0 0
          %2918 = vmatpush1.bf16.msra.mxu0 0
          %2919 = vmatprep.subr.bf16.mxu0 0
          %2920 = vmatpush1.bf16.msra.mxu0 0
          %2921 = vmatprep.subr.bf16.mxu0 0
          %2922 = vmatpush1.bf16.msra.mxu0 0
          %2923 = vmatprep.subr.bf16.mxu0 0
          %2924 = vmatpush1.bf16.msra.mxu0 0
          %2925 = vmatprep.subr.bf16.mxu0 0
          %2926 = vmatpush1.bf16.msra.mxu0 0
          %2927 = vmatprep.mubr.bf16.mxu0 %v2791
          %2928 = vmatmul.mubr.bf16.gmra.mrb[0].mxu0 %v2734
          %v2929 = vpop.f32.mrb[0].mxu0
          %v2930 = vadd.f32 0.0, %v2929
          %v2931 = vpop.f32.mrb[0].mxu0
          %v2932 = vpop.f32.mrb[0].mxu0
          %v2933 = vadd.f32 0.0, %v2932
          %v2934 = vpop.f32.mrb[0].mxu0
          %2935 = vdwg.mxu0
          %v2936 = vadd.f32 %v2837, %v2930
          %v2937 = vadd.f32 %v2838, %v2933
          %v2938 = vpack.c.b16 %v2611, %v577
          %v2939 = vpack.c.b16 %v2612, %v578
          %v2942 = vsel %vm426, %v2939, 0
          %2944 = vmatprep.subr.bf16.mxu0 0
          %2945 = vmatpush1.bf16.msra.mxu0 %v2773
          %2946 = vmatprep.subr.bf16.mxu0 0
          %2947 = vmatpush1.bf16.msra.mxu0 %v2774
          %2948 = vmatprep.subr.bf16.mxu0 0
          %2949 = vmatpush1.bf16.msra.mxu0 %v2775
          %2950 = vmatprep.subr.bf16.mxu0 0
          %2951 = vmatpush1.bf16.msra.mxu0 %v2776
          %2952 = vmatprep.subr.bf16.mxu0 0
          %2953 = vmatpush1.bf16.msra.mxu0 %v2777
          %2954 = vmatprep.subr.bf16.mxu0 0
          %2955 = vmatpush1.bf16.msra.mxu0 %v2778
          %2956 = vmatprep.subr.bf16.mxu0 0
          %2957 = vmatpush1.bf16.msra.mxu0 %v2779
          %2958 = vmatprep.subr.bf16.mxu0 0
          %2959 = vmatpush1.bf16.msra.mxu0 %v2780
          %2960 = vmatprep.subr.bf16.mxu0 0
          %2961 = vmatpush1.bf16.msra.mxu0 %v2794
          %2962 = vmatprep.subr.bf16.mxu0 0
          %2963 = vmatpush1.bf16.msra.mxu0 0
          %2964 = vmatprep.subr.bf16.mxu0 0
          %2965 = vmatpush1.bf16.msra.mxu0 0
          %2966 = vmatprep.subr.bf16.mxu0 0
          %2967 = vmatpush1.bf16.msra.mxu0 0
          %2968 = vmatprep.subr.bf16.mxu0 0
          %2969 = vmatpush1.bf16.msra.mxu0 0
          %2970 = vmatprep.subr.bf16.mxu0 0
          %2971 = vmatpush1.bf16.msra.mxu0 0
          %2972 = vmatprep.subr.bf16.mxu0 0
          %2973 = vmatpush1.bf16.msra.mxu0 0
          %2974 = vmatprep.subr.bf16.mxu0 0
          %2975 = vmatpush1.bf16.msra.mxu0 0
          %2976 = vmatprep.mubr.bf16.mxu0 %v2942
          %2977 = vmatmul.mubr.bf16.gmra.mrb[0].mxu0 %v2938
          %v2978 = vpop.f32.mrb[0].mxu0
          %v2979 = vadd.f32 0.0, %v2978
          %v2980 = vpop.f32.mrb[0].mxu0
          %v2981 = vpop.f32.mrb[0].mxu0
          %v2982 = vadd.f32 0.0, %v2981
          %v2983 = vpop.f32.mrb[0].mxu0
          %2984 = vdwg.mxu0
          %v2985 = vadd.f32 %v2936, %v2979
          %v2986 = vadd.f32 %v2937, %v2982
          %v2987 = vld [vmem:[#allocation2 + $0x8] sm:$0xff]
          %v2988 = vld [vmem:[#allocation2 + $0x10] sm:$0xff]
          %v2989 = vld [vmem:[#allocation2 + $0x18] sm:$0x11]
          %v2990 = vld [vmem:[#allocation3 + $0x8] sm:$0xff]
          %v2991 = vld [vmem:[#allocation3 + $0x10] sm:$0xff]
          %v2992 = vld [vmem:[#allocation3 + $0x18] sm:$0x11]
          %s2993 = scalar_lea.vmem [#allocation5], 576
          %v2994 = vld [vmem:[%s2993] sm:$0xf]
          %v2995 = vld [vmem:[%s2993 + $0x4] sm:$0xf]
          %v2996 = vld [vmem:[%s2993 + $0x8] sm:$0xf]
          %v2997 = vld [vmem:[%s2993 + $0xc] sm:$0xf]
          %v2998 = vld [vmem:[%s2993 + $0x10] sm:$0xf]
          %v2999 = vld [vmem:[%s2993 + $0x14] sm:$0xf]
          %v3000 = vld [vmem:[%s2993 + $0x18] sm:$0xf]
          %v3001 = vld [vmem:[%s2993 + $0x1c] sm:$0xf]
          %v3002 = vld [vmem:[%s2993 + $0x20] sm:$0xf]
          %v3003 = vld [vmem:[%s2993 + $0x24] sm:$0xf]
          %v3004 = vld [vmem:[%s2993 + $0x28] sm:$0xf]
          %v3005 = vld [vmem:[%s2993 + $0x2c] sm:$0xf]
          %v3006 = vld [vmem:[%s2993 + $0x30] sm:$0xf]
          %v3007 = vld [vmem:[%s2993 + $0x34] sm:$0xf]
          %v3008 = vld [vmem:[%s2993 + $0x38] sm:$0xf]
          %v3009 = vld [vmem:[%s2993 + $0x3c] sm:$0xf]
          %v3010 = vld [vmem:[%s2993 + $0x40] sm:$0xf]
          %v3011 = vld [vmem:[%s2993 + $0x44] sm:$0x3]
          %s3012 = scalar_lea.vmem [#allocation5], 1368
          %v3013 = vld [vmem:[%s3012] sm:$0xf]
          %v3014 = vld [vmem:[%s3012 + $0x4] sm:$0xf]
          %v3015 = vld [vmem:[%s3012 + $0x8] sm:$0xf]
          %v3016 = vld [vmem:[%s3012 + $0xc] sm:$0xf]
          %v3017 = vld [vmem:[%s3012 + $0x10] sm:$0xf]
          %v3018 = vld [vmem:[%s3012 + $0x14] sm:$0xf]
          %v3019 = vld [vmem:[%s3012 + $0x18] sm:$0xf]
          %v3020 = vld [vmem:[%s3012 + $0x1c] sm:$0xf]
          %v3021 = vld [vmem:[%s3012 + $0x20] sm:$0xf]
          %v3022 = vld [vmem:[%s3012 + $0x24] sm:$0xf]
          %v3023 = vld [vmem:[%s3012 + $0x28] sm:$0xf]
          %v3024 = vld [vmem:[%s3012 + $0x2c] sm:$0xf]
          %v3025 = vld [vmem:[%s3012 + $0x30] sm:$0xf]
          %v3026 = vld [vmem:[%s3012 + $0x34] sm:$0xf]
          %v3027 = vld [vmem:[%s3012 + $0x38] sm:$0xf]
          %v3028 = vld [vmem:[%s3012 + $0x3c] sm:$0xf]
          %v3029 = vld [vmem:[%s3012 + $0x40] sm:$0xf]
          %v3030 = vld [vmem:[%s3012 + $0x44] sm:$0x3]
          %v3034 = vunpack.c.l.b16 %v2987
          %v3035 = vunpack.c.h.b16 %v2987
          %v3036 = vunpack.c.l.b16 %v2988
          %v3037 = vunpack.c.h.b16 %v2988
          %v3038 = vunpack.c.l.b16 %v2989
          %v3039 = vunpack.c.h.b16 %v2989
          %v3040 = vpack.c.b16 %v3036, %v3034
          %v3041 = vpack.c.b16 %v3037, %v3035
          %v3042 = vpack.c.b16 %v3038, %v3038
          %v3043 = vpack.c.b16 %v3039, %v3039
          %v3045 = vshrl.u32 %v3040, 16
          %v3047 = vshll.u32 %v3040, 16
          %v3049 = vrot.slane %v3047, 1
          %v3050 = vor.u32 %v3045, %v3049
          %v3052 = vshll.u32 %v3042, 16
          %v3054 = vrot.slane %v3052, 1
          %v3055 = vsel %vm347, %v3050, %v3054
          %v3057 = vshrl.u32 %v3041, 16
          %v3059 = vshll.u32 %v3041, 16
          %v3061 = vrot.slane %v3059, 1
          %v3062 = vor.u32 %v3057, %v3061
          %v3064 = vshll.u32 %v3043, 16
          %v3066 = vrot.slane %v3064, 1
          %v3067 = vsel %vm347, %v3062, %v3066
          %v3087 = vunpack.c.l.b16 %v2994
          %v3088 = vunpack.c.l.b16 %v2995
          %v3089 = vunpack.c.l.b16 %v2996
          %v3090 = vunpack.c.l.b16 %v2997
          %v3091 = vunpack.c.l.b16 %v2998
          %v3092 = vunpack.c.l.b16 %v2999
          %v3093 = vunpack.c.l.b16 %v3000
          %v3094 = vunpack.c.l.b16 %v3001
          %v3095 = vunpack.c.l.b16 %v3002
          %v3096 = vunpack.c.l.b16 %v3003
          %v3097 = vunpack.c.l.b16 %v3004
          %v3098 = vunpack.c.l.b16 %v3005
          %v3099 = vunpack.c.l.b16 %v3006
          %v3100 = vunpack.c.l.b16 %v3007
          %v3101 = vunpack.c.l.b16 %v3008
          %v3102 = vunpack.c.l.b16 %v3009
          %v3103 = vunpack.c.l.b16 %v3010
          %v3104 = vunpack.c.l.b16 %v3011
          %v3105 = vpack.c.b16 %v3088, %v3087
          %v3106 = vpack.c.b16 %v3090, %v3089
          %v3107 = vpack.c.b16 %v3092, %v3091
          %v3108 = vpack.c.b16 %v3094, %v3093
          %v3109 = vpack.c.b16 %v3096, %v3095
          %v3110 = vpack.c.b16 %v3098, %v3097
          %v3111 = vpack.c.b16 %v3100, %v3099
          %v3112 = vpack.c.b16 %v3102, %v3101
          %v3113 = vpack.c.b16 %v3104, %v3103
          %v3123 = vsel %vm426, %v3067, 0
          %v3126 = vsel %vm430, %v3113, 0
          %3128 = vmatprep.subr.bf16.mxu0 0
          %3129 = vmatpush1.bf16.msra.mxu0 %v3105
          %3130 = vmatprep.subr.bf16.mxu0 0
          %3131 = vmatpush1.bf16.msra.mxu0 %v3106
          %3132 = vmatprep.subr.bf16.mxu0 0
          %3133 = vmatpush1.bf16.msra.mxu0 %v3107
          %3134 = vmatprep.subr.bf16.mxu0 0
          %3135 = vmatpush1.bf16.msra.mxu0 %v3108
          %3136 = vmatprep.subr.bf16.mxu0 0
          %3137 = vmatpush1.bf16.msra.mxu0 %v3109
          %3138 = vmatprep.subr.bf16.mxu0 0
          %3139 = vmatpush1.bf16.msra.mxu0 %v3110
          %3140 = vmatprep.subr.bf16.mxu0 0
          %3141 = vmatpush1.bf16.msra.mxu0 %v3111
          %3142 = vmatprep.subr.bf16.mxu0 0
          %3143 = vmatpush1.bf16.msra.mxu0 %v3112
          %3144 = vmatprep.subr.bf16.mxu0 0
          %3145 = vmatpush1.bf16.msra.mxu0 %v3126
          %3146 = vmatprep.subr.bf16.mxu0 0
          %3147 = vmatpush1.bf16.msra.mxu0 0
          %3148 = vmatprep.subr.bf16.mxu0 0
          %3149 = vmatpush1.bf16.msra.mxu0 0
          %3150 = vmatprep.subr.bf16.mxu0 0
          %3151 = vmatpush1.bf16.msra.mxu0 0
          %3152 = vmatprep.subr.bf16.mxu0 0
          %3153 = vmatpush1.bf16.msra.mxu0 0
          %3154 = vmatprep.subr.bf16.mxu0 0
          %3155 = vmatpush1.bf16.msra.mxu0 0
          %3156 = vmatprep.subr.bf16.mxu0 0
          %3157 = vmatpush1.bf16.msra.mxu0 0
          %3158 = vmatprep.subr.bf16.mxu0 0
          %3159 = vmatpush1.bf16.msra.mxu0 0
          %3160 = vmatprep.mubr.bf16.mxu0 %v3123
          %3161 = vmatmul.mubr.bf16.gmra.mrb[0].mxu0 %v3055
          %v3162 = vpop.f32.mrb[0].mxu0
          %v3163 = vadd.f32 0.0, %v3162
          %v3164 = vpop.f32.mrb[0].mxu0
          %v3165 = vpop.f32.mrb[0].mxu0
          %v3166 = vadd.f32 0.0, %v3165
          %v3167 = vpop.f32.mrb[0].mxu0
          %3168 = vdwg.mxu0
          %v3169 = vadd.f32 %v2985, %v3163
          %v3170 = vadd.f32 %v2986, %v3166
          %v3189 = vunpack.c.l.b16 %v3013
          %v3190 = vunpack.c.l.b16 %v3014
          %v3191 = vunpack.c.l.b16 %v3015
          %v3192 = vunpack.c.l.b16 %v3016
          %v3193 = vunpack.c.l.b16 %v3017
          %v3194 = vunpack.c.l.b16 %v3018
          %v3195 = vunpack.c.l.b16 %v3019
          %v3196 = vunpack.c.l.b16 %v3020
          %v3197 = vunpack.c.l.b16 %v3021
          %v3198 = vunpack.c.l.b16 %v3022
          %v3199 = vunpack.c.l.b16 %v3023
          %v3200 = vunpack.c.l.b16 %v3024
          %v3201 = vunpack.c.l.b16 %v3025
          %v3202 = vunpack.c.l.b16 %v3026
          %v3203 = vunpack.c.l.b16 %v3027
          %v3204 = vunpack.c.l.b16 %v3028
          %v3205 = vunpack.c.l.b16 %v3029
          %v3206 = vunpack.c.l.b16 %v3030
          %v3207 = vpack.c.b16 %v3190, %v3189
          %v3208 = vpack.c.b16 %v3192, %v3191
          %v3209 = vpack.c.b16 %v3194, %v3193
          %v3210 = vpack.c.b16 %v3196, %v3195
          %v3211 = vpack.c.b16 %v3198, %v3197
          %v3212 = vpack.c.b16 %v3200, %v3199
          %v3213 = vpack.c.b16 %v3202, %v3201
          %v3214 = vpack.c.b16 %v3204, %v3203
          %v3215 = vpack.c.b16 %v3206, %v3205
          %v3225 = vsel %vm430, %v3215, 0
          %3227 = vmatprep.subr.bf16.mxu0 0
          %3228 = vmatpush1.bf16.msra.mxu0 %v3207
          %3229 = vmatprep.subr.bf16.mxu0 0
          %3230 = vmatpush1.bf16.msra.mxu0 %v3208
          %3231 = vmatprep.subr.bf16.mxu0 0
          %3232 = vmatpush1.bf16.msra.mxu0 %v3209
          %3233 = vmatprep.subr.bf16.mxu0 0
          %3234 = vmatpush1.bf16.msra.mxu0 %v3210
          %3235 = vmatprep.subr.bf16.mxu0 0
          %3236 = vmatpush1.bf16.msra.mxu0 %v3211
          %3237 = vmatprep.subr.bf16.mxu0 0
          %3238 = vmatpush1.bf16.msra.mxu0 %v3212
          %3239 = vmatprep.subr.bf16.mxu0 0
          %3240 = vmatpush1.bf16.msra.mxu0 %v3213
          %3241 = vmatprep.subr.bf16.mxu0 0
          %3242 = vmatpush1.bf16.msra.mxu0 %v3214
          %3243 = vmatprep.subr.bf16.mxu0 0
          %3244 = vmatpush1.bf16.msra.mxu0 %v3225
          %3245 = vmatprep.subr.bf16.mxu0 0
          %3246 = vmatpush1.bf16.msra.mxu0 0
          %3247 = vmatprep.subr.bf16.mxu0 0
          %3248 = vmatpush1.bf16.msra.mxu0 0
          %3249 = vmatprep.subr.bf16.mxu0 0
          %3250 = vmatpush1.bf16.msra.mxu0 0
          %3251 = vmatprep.subr.bf16.mxu0 0
          %3252 = vmatpush1.bf16.msra.mxu0 0
          %3253 = vmatprep.subr.bf16.mxu0 0
          %3254 = vmatpush1.bf16.msra.mxu0 0
          %3255 = vmatprep.subr.bf16.mxu0 0
          %3256 = vmatpush1.bf16.msra.mxu0 0
          %3257 = vmatprep.subr.bf16.mxu0 0
          %3258 = vmatpush1.bf16.msra.mxu0 0
          %3259 = vmatprep.mubr.bf16.mxu0 %v3123
          %3260 = vmatmul.mubr.bf16.gmra.mrb[0].mxu0 %v3055
          %v3261 = vpop.f32.mrb[0].mxu0
          %v3262 = vadd.f32 0.0, %v3261
          %v3263 = vpop.f32.mrb[0].mxu0
          %v3264 = vpop.f32.mrb[0].mxu0
          %v3265 = vadd.f32 0.0, %v3264
          %v3266 = vpop.f32.mrb[0].mxu0
          %3267 = vdwg.mxu0
          %v3268 = vadd.f32 %v3169, %v3262
          %v3269 = vadd.f32 %v3170, %v3265
          %v3273 = vunpack.c.l.b16 %v2990
          %v3274 = vunpack.c.h.b16 %v2990
          %v3275 = vunpack.c.l.b16 %v2991
          %v3276 = vunpack.c.h.b16 %v2991
          %v3277 = vunpack.c.l.b16 %v2992
          %v3278 = vunpack.c.h.b16 %v2992
          %v3279 = vpack.c.b16 %v3275, %v3273
          %v3280 = vpack.c.b16 %v3276, %v3274
          %v3281 = vpack.c.b16 %v3277, %v3277
          %v3282 = vpack.c.b16 %v3278, %v3278
          %v3284 = vshrl.u32 %v3279, 16
          %v3286 = vshll.u32 %v3279, 16
          %v3288 = vrot.slane %v3286, 1
          %v3289 = vor.u32 %v3284, %v3288
          %v3291 = vshll.u32 %v3281, 16
          %v3293 = vrot.slane %v3291, 1
          %v3294 = vsel %vm347, %v3289, %v3293
          %v3296 = vshrl.u32 %v3280, 16
          %v3298 = vshll.u32 %v3280, 16
          %v3300 = vrot.slane %v3298, 1
          %v3301 = vor.u32 %v3296, %v3300
          %v3303 = vshll.u32 %v3282, 16
          %v3305 = vrot.slane %v3303, 1
          %v3306 = vsel %vm347, %v3301, %v3305
          %v3309 = vsel %vm426, %v3306, 0
          %3311 = vmatprep.subr.bf16.mxu0 0
          %3312 = vmatpush1.bf16.msra.mxu0 %v3105
          %3313 = vmatprep.subr.bf16.mxu0 0
          %3314 = vmatpush1.bf16.msra.mxu0 %v3106
          %3315 = vmatprep.subr.bf16.mxu0 0
          %3316 = vmatpush1.bf16.msra.mxu0 %v3107
          %3317 = vmatprep.subr.bf16.mxu0 0
          %3318 = vmatpush1.bf16.msra.mxu0 %v3108
          %3319 = vmatprep.subr.bf16.mxu0 0
          %3320 = vmatpush1.bf16.msra.mxu0 %v3109
          %3321 = vmatprep.subr.bf16.mxu0 0
          %3322 = vmatpush1.bf16.msra.mxu0 %v3110
          %3323 = vmatprep.subr.bf16.mxu0 0
          %3324 = vmatpush1.bf16.msra.mxu0 %v3111
          %3325 = vmatprep.subr.bf16.mxu0 0
          %3326 = vmatpush1.bf16.msra.mxu0 %v3112
          %3327 = vmatprep.subr.bf16.mxu0 0
          %3328 = vmatpush1.bf16.msra.mxu0 %v3126
          %3329 = vmatprep.subr.bf16.mxu0 0
          %3330 = vmatpush1.bf16.msra.mxu0 0
          %3331 = vmatprep.subr.bf16.mxu0 0
          %3332 = vmatpush1.bf16.msra.mxu0 0
          %3333 = vmatprep.subr.bf16.mxu0 0
          %3334 = vmatpush1.bf16.msra.mxu0 0
          %3335 = vmatprep.subr.bf16.mxu0 0
          %3336 = vmatpush1.bf16.msra.mxu0 0
          %3337 = vmatprep.subr.bf16.mxu0 0
          %3338 = vmatpush1.bf16.msra.mxu0 0
          %3339 = vmatprep.subr.bf16.mxu0 0
          %3340 = vmatpush1.bf16.msra.mxu0 0
          %3341 = vmatprep.subr.bf16.mxu0 0
          %3342 = vmatpush1.bf16.msra.mxu0 0
          %3343 = vmatprep.mubr.bf16.mxu0 %v3309
          %3344 = vmatmul.mubr.bf16.gmra.mrb[0].mxu0 %v3294
          %v3345 = vpop.f32.mrb[0].mxu0
          %v3346 = vadd.f32 0.0, %v3345
          %v3347 = vpop.f32.mrb[0].mxu0
          %v3348 = vpop.f32.mrb[0].mxu0
          %v3349 = vadd.f32 0.0, %v3348
          %v3350 = vpop.f32.mrb[0].mxu0
          %3351 = vdwg.mxu0
          %v3352 = vadd.f32 %v3268, %v3346
          %v3353 = vadd.f32 %v3269, %v3349
          %v3354 = vld [vmem:[#allocation2 + $0x8] sm:$0xee]
          %v3355 = vld [vmem:[#allocation3 + $0x8] sm:$0xee]
          %s3356 = scalar_lea.vmem [#allocation5], 648
          %v3357 = vld [vmem:[%s3356] sm:$0xf]
          %v3358 = vld [vmem:[%s3356 + $0x4] sm:$0xf]
          %v3359 = vld [vmem:[%s3356 + $0x8] sm:$0xf]
          %v3360 = vld [vmem:[%s3356 + $0xc] sm:$0xf]
          %v3361 = vld [vmem:[%s3356 + $0x10] sm:$0xf]
          %v3362 = vld [vmem:[%s3356 + $0x14] sm:$0xf]
          %v3363 = vld [vmem:[%s3356 + $0x18] sm:$0xf]
          %v3364 = vld [vmem:[%s3356 + $0x1c] sm:$0xf]
          %v3365 = vld [vmem:[%s3356 + $0x20] sm:$0xf]
          %v3366 = vld [vmem:[%s3356 + $0x24] sm:$0xf]
          %v3367 = vld [vmem:[%s3356 + $0x28] sm:$0xf]
          %v3368 = vld [vmem:[%s3356 + $0x2c] sm:$0xf]
          %v3369 = vld [vmem:[%s3356 + $0x30] sm:$0xf]
          %v3370 = vld [vmem:[%s3356 + $0x34] sm:$0xf]
          %v3371 = vld [vmem:[%s3356 + $0x38] sm:$0xf]
          %v3372 = vld [vmem:[%s3356 + $0x3c] sm:$0xf]
          %v3373 = vld [vmem:[%s3356 + $0x40] sm:$0xf]
          %v3374 = vld [vmem:[%s3356 + $0x44] sm:$0x3]
          %s3375 = scalar_lea.vmem [#allocation5], 1440
          %v3376 = vld [vmem:[%s3375] sm:$0xf]
          %v3377 = vld [vmem:[%s3375 + $0x4] sm:$0xf]
          %v3378 = vld [vmem:[%s3375 + $0x8] sm:$0xf]
          %v3379 = vld [vmem:[%s3375 + $0xc] sm:$0xf]
          %v3380 = vld [vmem:[%s3375 + $0x10] sm:$0xf]
          %v3381 = vld [vmem:[%s3375 + $0x14] sm:$0xf]
          %v3382 = vld [vmem:[%s3375 + $0x18] sm:$0xf]
          %v3383 = vld [vmem:[%s3375 + $0x1c] sm:$0xf]
          %v3384 = vld [vmem:[%s3375 + $0x20] sm:$0xf]
          %v3385 = vld [vmem:[%s3375 + $0x24] sm:$0xf]
          %v3386 = vld [vmem:[%s3375 + $0x28] sm:$0xf]
          %v3387 = vld [vmem:[%s3375 + $0x2c] sm:$0xf]
          %v3388 = vld [vmem:[%s3375 + $0x30] sm:$0xf]
          %v3389 = vld [vmem:[%s3375 + $0x34] sm:$0xf]
          %v3390 = vld [vmem:[%s3375 + $0x38] sm:$0xf]
          %v3391 = vld [vmem:[%s3375 + $0x3c] sm:$0xf]
          %v3392 = vld [vmem:[%s3375 + $0x40] sm:$0xf]
          %v3393 = vld [vmem:[%s3375 + $0x44] sm:$0x3]
          %v3395 = vunpack.c.l.b16 %v3354
          %v3396 = vunpack.c.h.b16 %v3354
          %v3397 = vpack.c.b16 %v3036, %v3395
          %v3398 = vpack.c.b16 %v3037, %v3396
          %v3399 = vrot.slane %v3397, 1
          %v3400 = vrot.slane %v3042, 1
          %v3401 = vsel %vm701, %v3399, %v3400
          %v3402 = vrot.slane %v3398, 1
          %v3403 = vrot.slane %v3043, 1
          %v3404 = vsel %vm701, %v3402, %v3403
          %v3424 = vunpack.c.l.b16 %v3357
          %v3425 = vunpack.c.l.b16 %v3358
          %v3426 = vunpack.c.l.b16 %v3359
          %v3427 = vunpack.c.l.b16 %v3360
          %v3428 = vunpack.c.l.b16 %v3361
          %v3429 = vunpack.c.l.b16 %v3362
          %v3430 = vunpack.c.l.b16 %v3363
          %v3431 = vunpack.c.l.b16 %v3364
          %v3432 = vunpack.c.l.b16 %v3365
          %v3433 = vunpack.c.l.b16 %v3366
          %v3434 = vunpack.c.l.b16 %v3367
          %v3435 = vunpack.c.l.b16 %v3368
          %v3436 = vunpack.c.l.b16 %v3369
          %v3437 = vunpack.c.l.b16 %v3370
          %v3438 = vunpack.c.l.b16 %v3371
          %v3439 = vunpack.c.l.b16 %v3372
          %v3440 = vunpack.c.l.b16 %v3373
          %v3441 = vunpack.c.l.b16 %v3374
          %v3442 = vpack.c.b16 %v3425, %v3424
          %v3443 = vpack.c.b16 %v3427, %v3426
          %v3444 = vpack.c.b16 %v3429, %v3428
          %v3445 = vpack.c.b16 %v3431, %v3430
          %v3446 = vpack.c.b16 %v3433, %v3432
          %v3447 = vpack.c.b16 %v3435, %v3434
          %v3448 = vpack.c.b16 %v3437, %v3436
          %v3449 = vpack.c.b16 %v3439, %v3438
          %v3450 = vpack.c.b16 %v3441, %v3440
          %v3460 = vsel %vm426, %v3404, 0
          %v3463 = vsel %vm430, %v3450, 0
          %3465 = vmatprep.subr.bf16.mxu0 0
          %3466 = vmatpush1.bf16.msra.mxu0 %v3442
          %3467 = vmatprep.subr.bf16.mxu0 0
          %3468 = vmatpush1.bf16.msra.mxu0 %v3443
          %3469 = vmatprep.subr.bf16.mxu0 0
          %3470 = vmatpush1.bf16.msra.mxu0 %v3444
          %3471 = vmatprep.subr.bf16.mxu0 0
          %3472 = vmatpush1.bf16.msra.mxu0 %v3445
          %3473 = vmatprep.subr.bf16.mxu0 0
          %3474 = vmatpush1.bf16.msra.mxu0 %v3446
          %3475 = vmatprep.subr.bf16.mxu0 0
          %3476 = vmatpush1.bf16.msra.mxu0 %v3447
          %3477 = vmatprep.subr.bf16.mxu0 0
          %3478 = vmatpush1.bf16.msra.mxu0 %v3448
          %3479 = vmatprep.subr.bf16.mxu0 0
          %3480 = vmatpush1.bf16.msra.mxu0 %v3449
          %3481 = vmatprep.subr.bf16.mxu0 0
          %3482 = vmatpush1.bf16.msra.mxu0 %v3463
          %3483 = vmatprep.subr.bf16.mxu0 0
          %3484 = vmatpush1.bf16.msra.mxu0 0
          %3485 = vmatprep.subr.bf16.mxu0 0
          %3486 = vmatpush1.bf16.msra.mxu0 0
          %3487 = vmatprep.subr.bf16.mxu0 0
          %3488 = vmatpush1.bf16.msra.mxu0 0
          %3489 = vmatprep.subr.bf16.mxu0 0
          %3490 = vmatpush1.bf16.msra.mxu0 0
          %3491 = vmatprep.subr.bf16.mxu0 0
          %3492 = vmatpush1.bf16.msra.mxu0 0
          %3493 = vmatprep.subr.bf16.mxu0 0
          %3494 = vmatpush1.bf16.msra.mxu0 0
          %3495 = vmatprep.subr.bf16.mxu0 0
          %3496 = vmatpush1.bf16.msra.mxu0 0
          %3497 = vmatprep.mubr.bf16.mxu0 %v3460
          %3498 = vmatmul.mubr.bf16.gmra.mrb[0].mxu0 %v3401
          %v3499 = vpop.f32.mrb[0].mxu0
          %v3500 = vadd.f32 0.0, %v3499
          %v3501 = vpop.f32.mrb[0].mxu0
          %v3502 = vpop.f32.mrb[0].mxu0
          %v3503 = vadd.f32 0.0, %v3502
          %v3504 = vpop.f32.mrb[0].mxu0
          %3505 = vdwg.mxu0
          %v3506 = vadd.f32 %v3352, %v3500
          %v3507 = vadd.f32 %v3353, %v3503
          %v3526 = vunpack.c.l.b16 %v3376
          %v3527 = vunpack.c.l.b16 %v3377
          %v3528 = vunpack.c.l.b16 %v3378
          %v3529 = vunpack.c.l.b16 %v3379
          %v3530 = vunpack.c.l.b16 %v3380
          %v3531 = vunpack.c.l.b16 %v3381
          %v3532 = vunpack.c.l.b16 %v3382
          %v3533 = vunpack.c.l.b16 %v3383
          %v3534 = vunpack.c.l.b16 %v3384
          %v3535 = vunpack.c.l.b16 %v3385
          %v3536 = vunpack.c.l.b16 %v3386
          %v3537 = vunpack.c.l.b16 %v3387
          %v3538 = vunpack.c.l.b16 %v3388
          %v3539 = vunpack.c.l.b16 %v3389
          %v3540 = vunpack.c.l.b16 %v3390
          %v3541 = vunpack.c.l.b16 %v3391
          %v3542 = vunpack.c.l.b16 %v3392
          %v3543 = vunpack.c.l.b16 %v3393
          %v3544 = vpack.c.b16 %v3527, %v3526
          %v3545 = vpack.c.b16 %v3529, %v3528
          %v3546 = vpack.c.b16 %v3531, %v3530
          %v3547 = vpack.c.b16 %v3533, %v3532
          %v3548 = vpack.c.b16 %v3535, %v3534
          %v3549 = vpack.c.b16 %v3537, %v3536
          %v3550 = vpack.c.b16 %v3539, %v3538
          %v3551 = vpack.c.b16 %v3541, %v3540
          %v3552 = vpack.c.b16 %v3543, %v3542
          %v3562 = vsel %vm430, %v3552, 0
          %3564 = vmatprep.subr.bf16.mxu0 0
          %3565 = vmatpush1.bf16.msra.mxu0 %v3544
          %3566 = vmatprep.subr.bf16.mxu0 0
          %3567 = vmatpush1.bf16.msra.mxu0 %v3545
          %3568 = vmatprep.subr.bf16.mxu0 0
          %3569 = vmatpush1.bf16.msra.mxu0 %v3546
          %3570 = vmatprep.subr.bf16.mxu0 0
          %3571 = vmatpush1.bf16.msra.mxu0 %v3547
          %3572 = vmatprep.subr.bf16.mxu0 0
          %3573 = vmatpush1.bf16.msra.mxu0 %v3548
          %3574 = vmatprep.subr.bf16.mxu0 0
          %3575 = vmatpush1.bf16.msra.mxu0 %v3549
          %3576 = vmatprep.subr.bf16.mxu0 0
          %3577 = vmatpush1.bf16.msra.mxu0 %v3550
          %3578 = vmatprep.subr.bf16.mxu0 0
          %3579 = vmatpush1.bf16.msra.mxu0 %v3551
          %3580 = vmatprep.subr.bf16.mxu0 0
          %3581 = vmatpush1.bf16.msra.mxu0 %v3562
          %3582 = vmatprep.subr.bf16.mxu0 0
          %3583 = vmatpush1.bf16.msra.mxu0 0
          %3584 = vmatprep.subr.bf16.mxu0 0
          %3585 = vmatpush1.bf16.msra.mxu0 0
          %3586 = vmatprep.subr.bf16.mxu0 0
          %3587 = vmatpush1.bf16.msra.mxu0 0
          %3588 = vmatprep.subr.bf16.mxu0 0
          %3589 = vmatpush1.bf16.msra.mxu0 0
          %3590 = vmatprep.subr.bf16.mxu0 0
          %3591 = vmatpush1.bf16.msra.mxu0 0
          %3592 = vmatprep.subr.bf16.mxu0 0
          %3593 = vmatpush1.bf16.msra.mxu0 0
          %3594 = vmatprep.subr.bf16.mxu0 0
          %3595 = vmatpush1.bf16.msra.mxu0 0
          %3596 = vmatprep.mubr.bf16.mxu0 %v3460
          %3597 = vmatmul.mubr.bf16.gmra.mrb[0].mxu0 %v3401
          %v3598 = vpop.f32.mrb[0].mxu0
          %v3599 = vadd.f32 0.0, %v3598
          %v3600 = vpop.f32.mrb[0].mxu0
          %v3601 = vpop.f32.mrb[0].mxu0
          %v3602 = vadd.f32 0.0, %v3601
          %v3603 = vpop.f32.mrb[0].mxu0
          %3604 = vdwg.mxu0
          %v3605 = vadd.f32 %v3506, %v3599
          %v3606 = vadd.f32 %v3507, %v3602
          %v3608 = vunpack.c.l.b16 %v3355
          %v3609 = vunpack.c.h.b16 %v3355
          %v3610 = vpack.c.b16 %v3275, %v3608
          %v3611 = vpack.c.b16 %v3276, %v3609
          %v3612 = vrot.slane %v3610, 1
          %v3613 = vrot.slane %v3281, 1
          %v3614 = vsel %vm701, %v3612, %v3613
          %v3615 = vrot.slane %v3611, 1
          %v3616 = vrot.slane %v3282, 1
          %v3617 = vsel %vm701, %v3615, %v3616
          %v3620 = vsel %vm426, %v3617, 0
          %3622 = vmatprep.subr.bf16.mxu0 0
          %3623 = vmatpush1.bf16.msra.mxu0 %v3442
          %3624 = vmatprep.subr.bf16.mxu0 0
          %3625 = vmatpush1.bf16.msra.mxu0 %v3443
          %3626 = vmatprep.subr.bf16.mxu0 0
          %3627 = vmatpush1.bf16.msra.mxu0 %v3444
          %3628 = vmatprep.subr.bf16.mxu0 0
          %3629 = vmatpush1.bf16.msra.mxu0 %v3445
          %3630 = vmatprep.subr.bf16.mxu0 0
          %3631 = vmatpush1.bf16.msra.mxu0 %v3446
          %3632 = vmatprep.subr.bf16.mxu0 0
          %3633 = vmatpush1.bf16.msra.mxu0 %v3447
          %3634 = vmatprep.subr.bf16.mxu0 0
          %3635 = vmatpush1.bf16.msra.mxu0 %v3448
          %3636 = vmatprep.subr.bf16.mxu0 0
          %3637 = vmatpush1.bf16.msra.mxu0 %v3449
          %3638 = vmatprep.subr.bf16.mxu0 0
          %3639 = vmatpush1.bf16.msra.mxu0 %v3463
          %3640 = vmatprep.subr.bf16.mxu0 0
          %3641 = vmatpush1.bf16.msra.mxu0 0
          %3642 = vmatprep.subr.bf16.mxu0 0
          %3643 = vmatpush1.bf16.msra.mxu0 0
          %3644 = vmatprep.subr.bf16.mxu0 0
          %3645 = vmatpush1.bf16.msra.mxu0 0
          %3646 = vmatprep.subr.bf16.mxu0 0
          %3647 = vmatpush1.bf16.msra.mxu0 0
          %3648 = vmatprep.subr.bf16.mxu0 0
          %3649 = vmatpush1.bf16.msra.mxu0 0
          %3650 = vmatprep.subr.bf16.mxu0 0
          %3651 = vmatpush1.bf16.msra.mxu0 0
          %3652 = vmatprep.subr.bf16.mxu0 0
          %3653 = vmatpush1.bf16.msra.mxu0 0
          %3654 = vmatprep.mubr.bf16.mxu0 %v3620
          %3655 = vmatmul.mubr.bf16.gmra.mrb[0].mxu0 %v3614
          %v3656 = vpop.f32.mrb[0].mxu0
          %v3657 = vadd.f32 0.0, %v3656
          %v3658 = vpop.f32.mrb[0].mxu0
          %v3659 = vpop.f32.mrb[0].mxu0
          %v3660 = vadd.f32 0.0, %v3659
          %v3661 = vpop.f32.mrb[0].mxu0
          %3662 = vdwg.mxu0
          %v3663 = vadd.f32 %v3605, %v3657
          %v3664 = vadd.f32 %v3606, %v3660
          %v3665 = vld [vmem:[#allocation2 + $0x18] sm:$0x33]
          %v3666 = vld [vmem:[#allocation3 + $0x18] sm:$0x33]
          %s3667 = scalar_lea.vmem [#allocation5], 720
          %v3668 = vld [vmem:[%s3667] sm:$0xf]
          %v3669 = vld [vmem:[%s3667 + $0x4] sm:$0xf]
          %v3670 = vld [vmem:[%s3667 + $0x8] sm:$0xf]
          %v3671 = vld [vmem:[%s3667 + $0xc] sm:$0xf]
          %v3672 = vld [vmem:[%s3667 + $0x10] sm:$0xf]
          %v3673 = vld [vmem:[%s3667 + $0x14] sm:$0xf]
          %v3674 = vld [vmem:[%s3667 + $0x18] sm:$0xf]
          %v3675 = vld [vmem:[%s3667 + $0x1c] sm:$0xf]
          %v3676 = vld [vmem:[%s3667 + $0x20] sm:$0xf]
          %v3677 = vld [vmem:[%s3667 + $0x24] sm:$0xf]
          %v3678 = vld [vmem:[%s3667 + $0x28] sm:$0xf]
          %v3679 = vld [vmem:[%s3667 + $0x2c] sm:$0xf]
          %v3680 = vld [vmem:[%s3667 + $0x30] sm:$0xf]
          %v3681 = vld [vmem:[%s3667 + $0x34] sm:$0xf]
          %v3682 = vld [vmem:[%s3667 + $0x38] sm:$0xf]
          %v3683 = vld [vmem:[%s3667 + $0x3c] sm:$0xf]
          %v3684 = vld [vmem:[%s3667 + $0x40] sm:$0xf]
          %v3685 = vld [vmem:[%s3667 + $0x44] sm:$0x3]
          %s3686 = scalar_lea.vmem [#allocation5], 1512
          %v3687 = vld [vmem:[%s3686] sm:$0xf]
          %v3688 = vld [vmem:[%s3686 + $0x4] sm:$0xf]
          %v3689 = vld [vmem:[%s3686 + $0x8] sm:$0xf]
          %v3690 = vld [vmem:[%s3686 + $0xc] sm:$0xf]
          %v3691 = vld [vmem:[%s3686 + $0x10] sm:$0xf]
          %v3692 = vld [vmem:[%s3686 + $0x14] sm:$0xf]
          %v3693 = vld [vmem:[%s3686 + $0x18] sm:$0xf]
          %v3694 = vld [vmem:[%s3686 + $0x1c] sm:$0xf]
          %v3695 = vld [vmem:[%s3686 + $0x20] sm:$0xf]
          %v3696 = vld [vmem:[%s3686 + $0x24] sm:$0xf]
          %v3697 = vld [vmem:[%s3686 + $0x28] sm:$0xf]
          %v3698 = vld [vmem:[%s3686 + $0x2c] sm:$0xf]
          %v3699 = vld [vmem:[%s3686 + $0x30] sm:$0xf]
          %v3700 = vld [vmem:[%s3686 + $0x34] sm:$0xf]
          %v3701 = vld [vmem:[%s3686 + $0x38] sm:$0xf]
          %v3702 = vld [vmem:[%s3686 + $0x3c] sm:$0xf]
          %v3703 = vld [vmem:[%s3686 + $0x40] sm:$0xf]
          %v3704 = vld [vmem:[%s3686 + $0x44] sm:$0x3]
          %v3706 = vunpack.c.l.b16 %v3665
          %v3707 = vunpack.c.h.b16 %v3665
          %v3708 = vpack.c.b16 %v3706, %v3706
          %v3709 = vpack.c.b16 %v3707, %v3707
          %v3711 = vshrl.u32 %v3397, 16
          %v3713 = vrot.slane %v3711, 1
          %v3714 = vshll.u32 %v3397, 16
          %v3716 = vrot.slane %v3714, 2
          %v3717 = vor.u32 %v3713, %v3716
          %v3719 = vshrl.u32 %v3708, 16
          %v3721 = vrot.slane %v3719, 1
          %v3722 = vshll.u32 %v3708, 16
          %v3724 = vrot.slane %v3722, 2
          %v3725 = vor.u32 %v3721, %v3724
          %v3726 = vsel %vm1013, %v3717, %v3725
          %v3728 = vshrl.u32 %v3398, 16
          %v3730 = vrot.slane %v3728, 1
          %v3731 = vshll.u32 %v3398, 16
          %v3733 = vrot.slane %v3731, 2
          %v3734 = vor.u32 %v3730, %v3733
          %v3736 = vshrl.u32 %v3709, 16
          %v3738 = vrot.slane %v3736, 1
          %v3739 = vshll.u32 %v3709, 16
          %v3741 = vrot.slane %v3739, 2
          %v3742 = vor.u32 %v3738, %v3741
          %v3743 = vsel %vm1013, %v3734, %v3742
          %v3763 = vunpack.c.l.b16 %v3668
          %v3764 = vunpack.c.l.b16 %v3669
          %v3765 = vunpack.c.l.b16 %v3670
          %v3766 = vunpack.c.l.b16 %v3671
          %v3767 = vunpack.c.l.b16 %v3672
          %v3768 = vunpack.c.l.b16 %v3673
          %v3769 = vunpack.c.l.b16 %v3674
          %v3770 = vunpack.c.l.b16 %v3675
          %v3771 = vunpack.c.l.b16 %v3676
          %v3772 = vunpack.c.l.b16 %v3677
          %v3773 = vunpack.c.l.b16 %v3678
          %v3774 = vunpack.c.l.b16 %v3679
          %v3775 = vunpack.c.l.b16 %v3680
          %v3776 = vunpack.c.l.b16 %v3681
          %v3777 = vunpack.c.l.b16 %v3682
          %v3778 = vunpack.c.l.b16 %v3683
          %v3779 = vunpack.c.l.b16 %v3684
          %v3780 = vunpack.c.l.b16 %v3685
          %v3781 = vpack.c.b16 %v3764, %v3763
          %v3782 = vpack.c.b16 %v3766, %v3765
          %v3783 = vpack.c.b16 %v3768, %v3767
          %v3784 = vpack.c.b16 %v3770, %v3769
          %v3785 = vpack.c.b16 %v3772, %v3771
          %v3786 = vpack.c.b16 %v3774, %v3773
          %v3787 = vpack.c.b16 %v3776, %v3775
          %v3788 = vpack.c.b16 %v3778, %v3777
          %v3789 = vpack.c.b16 %v3780, %v3779
          %v3799 = vsel %vm426, %v3743, 0
          %v3802 = vsel %vm430, %v3789, 0
          %3804 = vmatprep.subr.bf16.mxu0 0
          %3805 = vmatpush1.bf16.msra.mxu0 %v3781
          %3806 = vmatprep.subr.bf16.mxu0 0
          %3807 = vmatpush1.bf16.msra.mxu0 %v3782
          %3808 = vmatprep.subr.bf16.mxu0 0
          %3809 = vmatpush1.bf16.msra.mxu0 %v3783
          %3810 = vmatprep.subr.bf16.mxu0 0
          %3811 = vmatpush1.bf16.msra.mxu0 %v3784
          %3812 = vmatprep.subr.bf16.mxu0 0
          %3813 = vmatpush1.bf16.msra.mxu0 %v3785
          %3814 = vmatprep.subr.bf16.mxu0 0
          %3815 = vmatpush1.bf16.msra.mxu0 %v3786
          %3816 = vmatprep.subr.bf16.mxu0 0
          %3817 = vmatpush1.bf16.msra.mxu0 %v3787
          %3818 = vmatprep.subr.bf16.mxu0 0
          %3819 = vmatpush1.bf16.msra.mxu0 %v3788
          %3820 = vmatprep.subr.bf16.mxu0 0
          %3821 = vmatpush1.bf16.msra.mxu0 %v3802
          %3822 = vmatprep.subr.bf16.mxu0 0
          %3823 = vmatpush1.bf16.msra.mxu0 0
          %3824 = vmatprep.subr.bf16.mxu0 0
          %3825 = vmatpush1.bf16.msra.mxu0 0
          %3826 = vmatprep.subr.bf16.mxu0 0
          %3827 = vmatpush1.bf16.msra.mxu0 0
          %3828 = vmatprep.subr.bf16.mxu0 0
          %3829 = vmatpush1.bf16.msra.mxu0 0
          %3830 = vmatprep.subr.bf16.mxu0 0
          %3831 = vmatpush1.bf16.msra.mxu0 0
          %3832 = vmatprep.subr.bf16.mxu0 0
          %3833 = vmatpush1.bf16.msra.mxu0 0
          %3834 = vmatprep.subr.bf16.mxu0 0
          %3835 = vmatpush1.bf16.msra.mxu0 0
          %3836 = vmatprep.mubr.bf16.mxu0 %v3799
          %3837 = vmatmul.mubr.bf16.gmra.mrb[0].mxu0 %v3726
          %v3838 = vpop.f32.mrb[0].mxu0
          %v3839 = vadd.f32 0.0, %v3838
          %v3840 = vpop.f32.mrb[0].mxu0
          %v3841 = vpop.f32.mrb[0].mxu0
          %v3842 = vadd.f32 0.0, %v3841
          %v3843 = vpop.f32.mrb[0].mxu0
          %3844 = vdwg.mxu0
          %v3845 = vadd.f32 %v3663, %v3839
          %v3846 = vadd.f32 %v3664, %v3842
          %v3865 = vunpack.c.l.b16 %v3687
          %v3866 = vunpack.c.l.b16 %v3688
          %v3867 = vunpack.c.l.b16 %v3689
          %v3868 = vunpack.c.l.b16 %v3690
          %v3869 = vunpack.c.l.b16 %v3691
          %v3870 = vunpack.c.l.b16 %v3692
          %v3871 = vunpack.c.l.b16 %v3693
          %v3872 = vunpack.c.l.b16 %v3694
          %v3873 = vunpack.c.l.b16 %v3695
          %v3874 = vunpack.c.l.b16 %v3696
          %v3875 = vunpack.c.l.b16 %v3697
          %v3876 = vunpack.c.l.b16 %v3698
          %v3877 = vunpack.c.l.b16 %v3699
          %v3878 = vunpack.c.l.b16 %v3700
          %v3879 = vunpack.c.l.b16 %v3701
          %v3880 = vunpack.c.l.b16 %v3702
          %v3881 = vunpack.c.l.b16 %v3703
          %v3882 = vunpack.c.l.b16 %v3704
          %v3883 = vpack.c.b16 %v3866, %v3865
          %v3884 = vpack.c.b16 %v3868, %v3867
          %v3885 = vpack.c.b16 %v3870, %v3869
          %v3886 = vpack.c.b16 %v3872, %v3871
          %v3887 = vpack.c.b16 %v3874, %v3873
          %v3888 = vpack.c.b16 %v3876, %v3875
          %v3889 = vpack.c.b16 %v3878, %v3877
          %v3890 = vpack.c.b16 %v3880, %v3879
          %v3891 = vpack.c.b16 %v3882, %v3881
          %v3901 = vsel %vm430, %v3891, 0
          %3903 = vmatprep.subr.bf16.mxu0 0
          %3904 = vmatpush1.bf16.msra.mxu0 %v3883
          %3905 = vmatprep.subr.bf16.mxu0 0
          %3906 = vmatpush1.bf16.msra.mxu0 %v3884
          %3907 = vmatprep.subr.bf16.mxu0 0
          %3908 = vmatpush1.bf16.msra.mxu0 %v3885
          %3909 = vmatprep.subr.bf16.mxu0 0
          %3910 = vmatpush1.bf16.msra.mxu0 %v3886
          %3911 = vmatprep.subr.bf16.mxu0 0
          %3912 = vmatpush1.bf16.msra.mxu0 %v3887
          %3913 = vmatprep.subr.bf16.mxu0 0
          %3914 = vmatpush1.bf16.msra.mxu0 %v3888
          %3915 = vmatprep.subr.bf16.mxu0 0
          %3916 = vmatpush1.bf16.msra.mxu0 %v3889
          %3917 = vmatprep.subr.bf16.mxu0 0
          %3918 = vmatpush1.bf16.msra.mxu0 %v3890
          %3919 = vmatprep.subr.bf16.mxu0 0
          %3920 = vmatpush1.bf16.msra.mxu0 %v3901
          %3921 = vmatprep.subr.bf16.mxu0 0
          %3922 = vmatpush1.bf16.msra.mxu0 0
          %3923 = vmatprep.subr.bf16.mxu0 0
          %3924 = vmatpush1.bf16.msra.mxu0 0
          %3925 = vmatprep.subr.bf16.mxu0 0
          %3926 = vmatpush1.bf16.msra.mxu0 0
          %3927 = vmatprep.subr.bf16.mxu0 0
          %3928 = vmatpush1.bf16.msra.mxu0 0
          %3929 = vmatprep.subr.bf16.mxu0 0
          %3930 = vmatpush1.bf16.msra.mxu0 0
          %3931 = vmatprep.subr.bf16.mxu0 0
          %3932 = vmatpush1.bf16.msra.mxu0 0
          %3933 = vmatprep.subr.bf16.mxu0 0
          %3934 = vmatpush1.bf16.msra.mxu0 0
          %3935 = vmatprep.mubr.bf16.mxu0 %v3799
          %3936 = vmatmul.mubr.bf16.gmra.mrb[0].mxu0 %v3726
          %v3937 = vpop.f32.mrb[0].mxu0
          %v3938 = vadd.f32 0.0, %v3937
          %v3939 = vpop.f32.mrb[0].mxu0
          %v3940 = vpop.f32.mrb[0].mxu0
          %v3941 = vadd.f32 0.0, %v3940
          %v3942 = vpop.f32.mrb[0].mxu0
          %3943 = vdwg.mxu0
          %v3944 = vadd.f32 %v3845, %v3938
          %v3945 = vadd.f32 %v3846, %v3941
          %v3947 = vunpack.c.l.b16 %v3666
          %v3948 = vunpack.c.h.b16 %v3666
          %v3949 = vpack.c.b16 %v3947, %v3947
          %v3950 = vpack.c.b16 %v3948, %v3948
          %v3952 = vshrl.u32 %v3610, 16
          %v3954 = vrot.slane %v3952, 1
          %v3955 = vshll.u32 %v3610, 16
          %v3957 = vrot.slane %v3955, 2
          %v3958 = vor.u32 %v3954, %v3957
          %v3960 = vshrl.u32 %v3949, 16
          %v3962 = vrot.slane %v3960, 1
          %v3963 = vshll.u32 %v3949, 16
          %v3965 = vrot.slane %v3963, 2
          %v3966 = vor.u32 %v3962, %v3965
          %v3967 = vsel %vm1013, %v3958, %v3966
          %v3969 = vshrl.u32 %v3611, 16
          %v3971 = vrot.slane %v3969, 1
          %v3972 = vshll.u32 %v3611, 16
          %v3974 = vrot.slane %v3972, 2
          %v3975 = vor.u32 %v3971, %v3974
          %v3977 = vshrl.u32 %v3950, 16
          %v3979 = vrot.slane %v3977, 1
          %v3980 = vshll.u32 %v3950, 16
          %v3982 = vrot.slane %v3980, 2
          %v3983 = vor.u32 %v3979, %v3982
          %v3984 = vsel %vm1013, %v3975, %v3983
          %v3987 = vsel %vm426, %v3984, 0
          %3989 = vmatprep.subr.bf16.mxu0 0
          %3990 = vmatpush1.bf16.msra.mxu0 %v3781
          %3991 = vmatprep.subr.bf16.mxu0 0
          %3992 = vmatpush1.bf16.msra.mxu0 %v3782
          %3993 = vmatprep.subr.bf16.mxu0 0
          %3994 = vmatpush1.bf16.msra.mxu0 %v3783
          %3995 = vmatprep.subr.bf16.mxu0 0
          %3996 = vmatpush1.bf16.msra.mxu0 %v3784
          %3997 = vmatprep.subr.bf16.mxu0 0
          %3998 = vmatpush1.bf16.msra.mxu0 %v3785
          %3999 = vmatprep.subr.bf16.mxu0 0
          %4000 = vmatpush1.bf16.msra.mxu0 %v3786
          %4001 = vmatprep.subr.bf16.mxu0 0
          %4002 = vmatpush1.bf16.msra.mxu0 %v3787
          %4003 = vmatprep.subr.bf16.mxu0 0
          %4004 = vmatpush1.bf16.msra.mxu0 %v3788
          %4005 = vmatprep.subr.bf16.mxu0 0
          %4006 = vmatpush1.bf16.msra.mxu0 %v3802
          %4007 = vmatprep.subr.bf16.mxu0 0
          %4008 = vmatpush1.bf16.msra.mxu0 0
          %4009 = vmatprep.subr.bf16.mxu0 0
          %4010 = vmatpush1.bf16.msra.mxu0 0
          %4011 = vmatprep.subr.bf16.mxu0 0
          %4012 = vmatpush1.bf16.msra.mxu0 0
          %4013 = vmatprep.subr.bf16.mxu0 0
          %4014 = vmatpush1.bf16.msra.mxu0 0
          %4015 = vmatprep.subr.bf16.mxu0 0
          %4016 = vmatpush1.bf16.msra.mxu0 0
          %4017 = vmatprep.subr.bf16.mxu0 0
          %4018 = vmatpush1.bf16.msra.mxu0 0
          %4019 = vmatprep.subr.bf16.mxu0 0
          %4020 = vmatpush1.bf16.msra.mxu0 0
          %4021 = vmatprep.mubr.bf16.mxu0 %v3987
          %4022 = vmatmul.mubr.bf16.gmra.mrb[0].mxu0 %v3967
          %v4023 = vpop.f32.mrb[0].mxu0
          %v4024 = vadd.f32 0.0, %v4023
          %v4025 = vpop.f32.mrb[0].mxu0
          %v4026 = vpop.f32.mrb[0].mxu0
          %v4027 = vadd.f32 0.0, %v4026
          %v4028 = vpop.f32.mrb[0].mxu0
          %4029 = vdwg.mxu0
          %v4030 = vadd.f32 %v3944, %v4024
          %v4031 = vadd.f32 %v3945, %v4027
          %vm4032 = vcmask 130048
          %4033 = vst.msk [vmem:[%s190] sm:$0xff] %vm4032, %v4030
          %4034 = vst.msk [vmem:[%s190 + $0x8] sm:$0xff] %vm4032, %v4031
          %4035 = vst.msk [vmem:[#allocation4] sm:$0xff] %vm4032, %v4030
          %4036 = vst.msk [vmem:[#allocation4 + $0x8] sm:$0xff] %vm4032, %v4031
        $region40: #{tpu_custom_call.1} parent=27 // pred_fallthru
          _
        %p4037 = scmp.gt.s32.totalorder %s25, 0
        // Predicated region
        $region41: #{tpu_custom_call.1} parent=27 // pred_check
          %p4038 = pneg %p4037
        $region42: #{tpu_custom_call.1} parent=27 // pred_check_branch
          %4040 = sbr.rel (%p4038) target = $region44
        $region43: #{tpu_custom_call.1} parent=27 // pred_region
          %v4041 = vld [vmem:[#allocation4] sm:$0xff]
          %v4042 = vld [vmem:[#allocation4 + $0x8] sm:$0xff]
          %vm4043 = vcmask 130048
          %4044 = vst.msk [vmem:[%s190] sm:$0xff] %vm4043, %v4041
          %4045 = vst.msk [vmem:[%s190 + $0x8] sm:$0xff] %vm4043, %v4042
        $region44: #{tpu_custom_call.1} parent=27 // pred_fallthru
          _
        %s4046 = sand.u32 %s89, 1
        %s4047 = scalar_lea.sflag [#allocation7], %s4046
        %s4048 = sand.u32 %s89, 1
        %s4049 = smul.addr %s4048, 16
        %s4050 = scalar_lea.vmem [#allocation10], %s4049
        // Predicated region
        $region45: #{tpu_custom_call.1} parent=27 // pred_check
          %p4051 = pneg %p99
        $region46: #{tpu_custom_call.1} parent=27 // pred_check_branch
          %4053 = sbr.rel (%p4051) target = $region48
        $region47: #{tpu_custom_call.1} parent=27 // pred_region
          %s4055 = ssub.s32 256, 256
          %4056 = vsyncadd %s4047, %s4055
          %s4057 = smul.addr %s25, 2
          %s4058 = smul.addr %s24, 4
          %s4059 = sadd.s32 %s4057, %s4058
          %s4060 = smul.addr %s4059, 128
          %s4061 = scalar_lea.hbm %s2, %s4060
          %s4062 = sshll.u32 %s4050, 4
          %s4063 = int_to_ptr.vmem [resolvable:$true] %s4062
          %4068 = dma.vmem_to_hbm [thread:$0]  %s4063, 256, %s4061, %s4047, 128, 128, 8
        $region48: #{tpu_custom_call.1} parent=27 // pred_fallthru
          _
      $region28: #{tpu_custom_call.1} parent=5 // pred_fallthru
        _
      %p4069 = scmp.le.s32.totalorder 2, %s15
      // Predicated region
      $region49: #{tpu_custom_call.1} parent=5 // pred_check
        %p4070 = pneg %p4069
      $region50: #{tpu_custom_call.1} parent=5 // pred_check_branch
        %4072 = sbr.rel (%p4070) target = $region52
      $region51: #{tpu_custom_call.1} parent=5 // pred_region
        %s4073 = ssub.s32 %s15, 2
        // Predicated region
        $region53: #{tpu_custom_call.1} parent=51 // pred_check
          %p4074 = pneg %p105
        $region54: #{tpu_custom_call.1} parent=51 // pred_check_branch
          %4076 = sbr.rel (%p4074) target = $region56
        $region55: #{tpu_custom_call.1} parent=51 // pred_region
          %s4077 = sand.u32 %s90, 1
          %s4078 = scalar_lea.sflag [#allocation7], %s4077
          %s4079 = sand.u32 %s90, 1
          %s4080 = smul.addr %s4079, 16
          %s4081 = scalar_lea.vmem [#allocation10], %s4080
          %4082 = dma.done %s4078, 256
        $region56: #{tpu_custom_call.1} parent=51 // pred_fallthru
          _
      $region52: #{tpu_custom_call.1} parent=5 // pred_fallthru
        _
    $region6: #{tpu_custom_call.1} parent=1 // loop_footer
      %s19 = sadd.s32 1, %s15
    $region7: #{tpu_custom_call.1} parent=1 // loop_footer_branch
      %14 = sbr.rel target = $region3
    $region8: #{tpu_custom_call.1} parent=1 // loop_exit
      _
    %4083 = vsyncpa [#allocation6], 1
    %s4084 = scalar_lea.sflag [#allocation6], 1
    %4085 = vsyncpa %s4084, 1
    %4086 = vsyncpa [#allocation9], 1
    %s4087 = scalar_lea.sflag [#allocation9], 1
    %4088 = vsyncpa %s4087, 1
    %4089 = vsyncpa [#allocation7], 1
    %s4090 = scalar_lea.sflag [#allocation7], 1
    %4091 = vsyncpa %s4090, 1

</llo_original>
